<compile_context>
chip_gen: v5e
topology: v5e:2x2
jax: 0.10.0
libtpu: 0.0.40
codegen_flags: <defaults>
</compile_context>

<pallas_src>
import functools

import jax
import jax.numpy as jnp
from jax.experimental import pallas as pl
from jax.experimental.pallas import tpu as pltpu


def _round_up(a, b):
    return (a + b - 1) // b * b


# --------------------------------------------------------------------------
# Fused kernel: phase-packed deconv matmul + BatchNorm(training) + ReLU
# (p == 0 path — every RPN Deconv2D).
# --------------------------------------------------------------------------
def _fused_deconv_bn_relu_kernel(x_ref, w_ref, gamma_ref, beta_ref, o_ref,
                                 conv_sc, *, tm, cc, num_phases, inv_count,
                                 n_pad_rows, eps):
    # x_ref:     (TM, K)      bf16 im2col rows for row tile g
    # w_ref:     (K, Pc)      bf16 phase-packed weights for channel chunk c
    # gamma_ref: (1, Cc) f32  BN weight for this channel chunk
    # beta_ref:  (1, Cc) f32  BN bias for this channel chunk
    # o_ref:     (M_pad, Pc)  output block, VMEM-resident across the row axis
    # conv_sc:   (M_pad, Pc)  f32 conv scratch (resident across the row axis)
    g = pl.program_id(1)
    row0 = pl.multiple_of(g * tm, 8)

    # Transposed conv for this row tile: one MXU matmul, kept in VMEM.
    conv_sc[pl.ds(row0, tm), :] = jnp.dot(
        x_ref[...], w_ref[...], preferred_element_type=jnp.float32)

    # On the last row tile of this chunk: finalize the BN batch statistics
    # over the resident conv scratch and apply BN + ReLU before the single
    # HBM store of o_ref.
    @pl.when(g == pl.num_programs(1) - 1)
    def _finalize():
        # mean: padded rows are exact zeros -> contribute 0 to the sums.
        csum = jnp.zeros((1, cc), jnp.float32)
        for r in range(num_phases):
            csum = csum + jnp.sum(conv_sc[:, r * cc:(r + 1) * cc],
                                  axis=0, keepdims=True)
        mean = csum * inv_count
        # centered (two-pass) variance; exact correction for the all-zero
        # padded rows, which each contribute mean^2 per phase when centered.
        ssq = jnp.zeros((1, cc), jnp.float32)
        for r in range(num_phases):
            d = conv_sc[:, r * cc:(r + 1) * cc] - mean
            ssq = ssq + jnp.sum(d * d, axis=0, keepdims=True)
        ssq = ssq - (n_pad_rows * num_phases) * (mean * mean)
        var = jnp.maximum(ssq * inv_count, 0.0)
        scale = gamma_ref[...] * jax.lax.rsqrt(var + eps)       # (1, Cc)
        shift = beta_ref[...] - mean * scale
        for r in range(num_phases):
            o_ref[:, r * cc:(r + 1) * cc] = jnp.maximum(
                conv_sc[:, r * cc:(r + 1) * cc] * scale + shift,
                0.0).astype(o_ref.dtype)


# --------------------------------------------------------------------------
# Fallback kernel: deconv matmul only (p > 0 path, never hit by RPN).
# --------------------------------------------------------------------------
def _deconv_matmul_kernel(x_ref, w_ref, o_ref):
    o_ref[...] = jnp.dot(x_ref[...], w_ref[...],
                         preferred_element_type=jnp.float32)


# --------------------------------------------------------------------------
# Wrapper: full Deconv2D forward (NCHW in, NCHW out), PyTorch semantics
# --------------------------------------------------------------------------
def deconv2d_bn_relu(x_nchw, w_t, conv_bias, gamma, beta, *, k, s, p,
                     eps=1e-5, compute_dtype=jnp.bfloat16,
                     out_dtype=jnp.float32):
    """ConvTranspose2d(k, s, p, output_padding=0) + BatchNorm2d (training-mode
    batch statistics) + ReLU.

    x_nchw: (N, Cin, H, W);  w_t: (Cin, Cout, k, k) (PyTorch ConvTranspose2d).
    `conv_bias` is accepted for API parity but never applied: a per-channel
    constant feeding training-mode BatchNorm is exactly absorbed by the batch
    mean and cancels in the normalized output.
    """
    del conv_bias                                   # exactly absorbed by BN
    N, Cin, H, W = x_nchw.shape
    Cout = w_t.shape[1]
    Hout = (H - 1) * s - 2 * p + k
    Wout = (W - 1) * s - 2 * p + k
    assert p >= 0 and Hout >= 1 and Wout >= 1
    # TODO(synk): phase decomposition requires k % s == 0 (true for every RPN
    # Deconv2D: (4,4,0), (2,2,0), (1,1,0)); other k/s would need a dilation
    # fallback.
    assert k % s == 0, "phase-decomposed deconv requires k % s == 0"

    T = k // s                                      # taps per phase per axis
    Qh, Qw = H + T - 1, W + T - 1                   # per-phase output grid
    Hfull, Wfull = Qh * s, Qw * s                   # un-cropped output
    K = T * T * Cin                                 # matmul contraction
    num_phases = s * s
    P = num_phases * Cout

    # Output-channel chunking: "parallel" grid axis (feeds both v7x TCs for
    # the Cout = 256 RPN deconvs), smaller per-step weight block & stats vregs.
    Cc = 128 if (Cout % 128 == 0 and Cout > 128) else Cout
    n_chunks = Cout // Cc
    Pc = num_phases * Cc

    # ---- glue: NCHW -> NHWC, (T-1) halo pad, im2col rows --------------------
    x = jnp.transpose(x_nchw, (0, 2, 3, 1))                       # (N,H,W,Cin)
    if T == 1:
        x2d = x.reshape(N * Qh * Qw, K)                           # pure reshape
    else:
        xp = jnp.pad(x, ((0, 0), (T - 1, T - 1), (T - 1, T - 1), (0, 0)))
        taps = [xp[:, th:th + Qh, tw:tw + Qw, :]
                for th in range(T) for tw in range(T)]
        x2d = jnp.stack(taps, axis=3).reshape(N * Qh * Qw, K)     # (.., th,tw,ci)
    x2d = x2d.astype(compute_dtype)

    # ---- glue: phase-packed weights, column order (chunk, rh, rw, cc) -------
    w = jnp.transpose(w_t, (2, 3, 0, 1)).reshape(T, s, T, s, Cin, Cout)
    w = w[::-1, :, ::-1, :, :, :]                      # tap flip: mh/mw -> th/tw
    w = jnp.transpose(w, (0, 2, 4, 1, 3, 5))           # (th, tw, ci, rh, rw, co)
    w = w.reshape(T, T, Cin, s, s, n_chunks, Cc)
    w = jnp.transpose(w, (0, 1, 2, 5, 3, 4, 6))        # (th,tw,ci, chunk, rh,rw, cc)
    w_mat = w.reshape(K, P).astype(compute_dtype)

    gamma2d = gamma.astype(jnp.float32).reshape(1, Cout)
    beta2d = beta.astype(jnp.float32).reshape(1, Cout)

    # ---- row tiling (single step for every RPN config) ----------------------
    M = N * Qh * Qw
    TM = min(_round_up(M, 16), 2048)
    M_pad = _round_up(M, TM)
    n_pad = M_pad - M
    if n_pad:
        x2d = jnp.pad(x2d, ((0, n_pad), (0, 0)))       # exact zero rows
    G = M_pad // TM

    # The fused path keeps the whole per-chunk conv slab resident in VMEM
    # (<= ~1 MiB for every RPN shape; trivially inside v7x's 64 MiB VMEM).
    # TODO(synk): feature maps where this slab does not fit would need a
    # row-tiled two-phase-stats variant (never hit by RPN).
    assert M_pad * Pc * 4 <= 12 * 1024 * 1024, (M_pad, Pc)

    cparams = pltpu.CompilerParams(
        dimension_semantics=("parallel", "arbitrary"),
        vmem_limit_bytes=32 * 1024 * 1024)

    if p == 0:
        # ---- fused Pallas kernel: deconv matmul + BN(training) + ReLU -------
        count = N * Hout * Wout                        # == M * num_phases
        kernel = functools.partial(
            _fused_deconv_bn_relu_kernel,
            tm=TM, cc=Cc, num_phases=num_phases, inv_count=1.0 / count,
            n_pad_rows=n_pad, eps=eps)
        y2d = pl.pallas_call(
            kernel,
            out_shape=jax.ShapeDtypeStruct((M_pad, P), out_dtype),
            grid=(n_chunks, G),
            in_specs=[
                pl.BlockSpec((TM, K), lambda c, g: (g, 0)),
                pl.BlockSpec((K, Pc), lambda c, g: (0, c)),
                pl.BlockSpec((1, Cc), lambda c, g: (0, c)),
                pl.BlockSpec((1, Cc), lambda c, g: (0, c)),
            ],
            out_specs=pl.BlockSpec((M_pad, Pc), lambda c, g: (0, c)),
            scratch_shapes=[pltpu.VMEM((M_pad, Pc), jnp.float32)],
            compiler_params=cparams,
        )(x2d, w_mat, gamma2d, beta2d)

        # ---- single output relayout: (rows | chunk, rh, rw, cc) -> NCHW -----
        y = y2d[:M].reshape(N, Qh, Qw, n_chunks, s, s, Cc)
        y = jnp.transpose(y, (0, 3, 6, 1, 4, 2, 5)).reshape(
            N, Cout, Hfull, Wfull)
        return y[:, :, p:p + Hout, p:p + Wout]         # no-op crop for p == 0

    # ---- p > 0 fallback (never hit by RPN): the cropped border must be
    # excluded from the batch statistics, so run the Pallas matmul only and do
    # crop-aware BN(training) + ReLU in plain JAX.
    # TODO(synk): fuse like the p == 0 path if a p > 0 deconv is ever needed.
    conv2d = pl.pallas_call(
        _deconv_matmul_kernel,
        out_shape=jax.ShapeDtypeStruct((M_pad, P), jnp.float32),
        grid=(n_chunks, G),
        in_specs=[
            pl.BlockSpec((TM, K), lambda c, g: (g, 0)),
            pl.BlockSpec((K, Pc), lambda c, g: (0, c)),
        ],
        out_specs=pl.BlockSpec((TM, Pc), lambda c, g: (g, c)),
        compiler_params=pltpu.CompilerParams(
            dimension_semantics=("parallel", "parallel"),
            vmem_limit_bytes=32 * 1024 * 1024),
    )(x2d, w_mat)
    y = conv2d[:M].reshape(N, Qh, Qw, n_chunks, s, s, Cc)
    y = jnp.transpose(y, (0, 3, 6, 1, 4, 2, 5)).reshape(N, Cout, Hfull, Wfull)
    y = y[:, :, p:p + Hout, p:p + Wout]
    mean = jnp.mean(y, axis=(0, 2, 3), keepdims=True)
    var = jnp.mean(jnp.square(y - mean), axis=(0, 2, 3), keepdims=True)
    scale = gamma.astype(jnp.float32).reshape(1, Cout, 1, 1) * jax.lax.rsqrt(var + eps)
    shift = beta.astype(jnp.float32).reshape(1, Cout, 1, 1) - mean * scale
    return jnp.maximum(y * scale + shift, 0.0).astype(out_dtype)


# --------------------------------------------------------------------------
# Pure-JAX reference (same bf16 rounding of the matmul operands; still adds
# the conv bias, which must cancel exactly through training-mode BN).
# --------------------------------------------------------------------------
def _reference(x_nchw, w_t, conv_bias, gamma, beta, *, k, s, p, eps=1e-5,
               compute_dtype=jnp.bfloat16):
    x = jnp.transpose(x_nchw, (0, 2, 3, 1)).astype(compute_dtype)
    w_conv = jnp.transpose(w_t[:, :, ::-1, ::-1], (2, 3, 0, 1)).astype(compute_dtype)
    dn = jax.lax.conv_dimension_numbers(x.shape, w_conv.shape,
                                        ("NHWC", "HWIO", "NHWC"))
    pad = k - 1 - p
    conv = jax.lax.conv_general_dilated(
        x, w_conv, window_strides=(1, 1), padding=[(pad, pad), (pad, pad)],
        lhs_dilation=(s, s), dimension_numbers=dn,
        preferred_element_type=jnp.float32)
    conv = conv + conv_bias[None, None, None, :].astype(jnp.float32)
    mean = jnp.mean(conv, axis=(0, 1, 2))
    var = jnp.mean(jnp.square(conv - mean), axis=(0, 1, 2))
    y = (conv - mean) * jax.lax.rsqrt(var + eps) * gamma + beta
    y = jnp.maximum(y, 0.0)
    return jnp.transpose(y, (0, 3, 1, 2))


if __name__ == "__main__":
    # The three Deconv2D branches of RPN (k == s, p == 0) at small spatial
    # sizes, one k != s, p == 0 config exercising the T > 1 im2col through the
    # fused kernel, and one p > 0 config exercising the guarded fallback.
    configs = [
        # (name,             N, Cin, Cout, H,  W,  k, s, p)
        ("rpn_deconv_1",     2, 256, 256,  4,  4,  4, 4, 0),
        ("rpn_deconv_2",     2, 128, 256,  8,  8,  2, 2, 0),
        ("rpn_deconv_3",     2, 128, 256, 32, 32,  1, 1, 0),
        ("fused_k4s2p0",     2,   8,  16,  8,  8,  4, 2, 0),
        ("fallback_k4s2p1",  2,   8,  16,  8,  8,  4, 2, 1),
    ]
    key = jax.random.PRNGKey(0)
    for name, N, Cin, Cout, H, W, k, s, p in configs:
        key, kx, kw, kb, kg, kbe = jax.random.split(key, 6)
        x = jax.random.normal(kx, (N, Cin, H, W), jnp.float32)
        # PyTorch ConvTranspose2d weight shape: (in_channels, out_channels, kH, kW)
        w_t = jax.random.normal(kw, (Cin, Cout, k, k), jnp.float32) * 0.05
        conv_bias = jax.random.normal(kb, (Cout,), jnp.float32) * 0.1
        gamma = 1.0 + 0.1 * jax.random.normal(kg, (Cout,), jnp.float32)
        beta = 0.1 * jax.random.normal(kbe, (Cout,), jnp.float32)

        out = deconv2d_bn_relu(x, w_t, conv_bias, gamma, beta, k=k, s=s, p=p)
        out = jax.block_until_ready(out)

        Hout = (H - 1) * s - 2 * p + k
        Wout = (W - 1) * s - 2 * p + k
        assert out.shape == (N, Cout, Hout, Wout), (name, out.shape)

        ref = _reference(x, w_t, conv_bias, gamma, beta, k=k, s=s, p=p)
        max_err = float(jnp.max(jnp.abs(out - ref)))
        assert jnp.allclose(out, ref, atol=2e-2, rtol=2e-2), (name, max_err)

    print("KERNEL_OK")
</pallas_src>

<mosaic_0001>
module attributes {stable_mosaic.version = 11 : i64} {
  func.func @_fused_deconv_bn_relu_kernel(%arg0: i32, %arg1: i32, %arg2: memref<32x256xbf16, #tpu.memory_space<vmem>>, %arg3: memref<256x2048xbf16, #tpu.memory_space<vmem>>, %arg4: memref<1x128xf32, #tpu.memory_space<vmem>>, %arg5: memref<1x128xf32, #tpu.memory_space<vmem>>, %arg6: memref<32x2048xf32, #tpu.memory_space<vmem>>, %arg7: memref<32x2048xf32, #tpu.memory_space<vmem>>) attributes {dimension_semantics = [#tpu.dimension_semantics<parallel>, #tpu.dimension_semantics<arbitrary>], iteration_bounds = array<i64: 2, 1>, scalar_prefetch = 0 : i64, scratch_operands = 1 : i64, tpu.core_type = #tpu.core_type<tc>, window_params = [{transform_indices = @transform_0, window_bounds = array<i64: 32, 256>}, {transform_indices = @transform_1, window_bounds = array<i64: 256, 2048>}, {transform_indices = @transform_2, window_bounds = array<i64: 1, 128>}, {transform_indices = @transform_3, window_bounds = array<i64: 1, 128>}, {transform_indices = @transform_4, window_bounds = array<i64: 32, 2048>}]} {
    %c32_i32 = arith.constant 32 : i32
    %0 = arith.muli %arg1, %c32_i32 : i32
    %1 = tpu.assume_multiple %0, 8 : i32
    %c0 = arith.constant 0 : index
    %c0_0 = arith.constant 0 : index
    %2 = vector.load %arg2[%c0, %c0_0] : memref<32x256xbf16, #tpu.memory_space<vmem>>, vector<32x256xbf16>
    %c0_1 = arith.constant 0 : index
    %c0_2 = arith.constant 0 : index
    %3 = vector.load %arg3[%c0_1, %c0_2] : memref<256x2048xbf16, #tpu.memory_space<vmem>>, vector<256x2048xbf16>
    %cst = arith.constant dense<0.000000e+00> : vector<32x2048xf32>
    %4 = tpu.matmul %2, %3, %cst {dimension_numbers = #tpu.dot_dimension_numbers<[1], [0], [0], [1], [0, 0, 1, 1], [], []>} : vector<32x256xbf16>, vector<256x2048xbf16>, vector<32x2048xf32> -> vector<32x2048xf32>
    %5 = arith.index_cast %1 : i32 to index
    %c0_3 = arith.constant 0 : index
    %6 = vector.load %arg7[%5, %c0_3] : memref<32x2048xf32, #tpu.memory_space<vmem>>, vector<32x2048xf32>
    tpu.vector_store %arg7[%5, %c0_3], %4 {strides = array<i32>} : memref<32x2048xf32, #tpu.memory_space<vmem>>, vector<32x2048xf32>,
    %c0_i32 = arith.constant 0 : i32
    %7 = arith.cmpi eq, %arg1, %c0_i32 : i32
    %8 = arith.extui %7 : i1 to i32
    %c0_i32_4 = arith.constant 0 : i32
    %9 = arith.cmpi ne, %8, %c0_i32_4 : i32
    scf.if %9 {
      %cst_5 = arith.constant 0.000000e+00 : f32
      %10 = vector.broadcast %cst_5 : f32 to vector<1x128xf32>
      %c0_6 = arith.constant 0 : index
      %c0_7 = arith.constant 0 : index
      %11 = vector.load %arg7[%c0_6, %c0_7] : memref<32x2048xf32, #tpu.memory_space<vmem>>, vector<32x128xf32>
      %cst_8 = arith.constant dense<0.000000e+00> : vector<128xf32>
      %12 = vector.multi_reduction <add>, %11, %cst_8 [0] : vector<32x128xf32> to vector<128xf32>
      %13 = vector.shape_cast %12 : vector<128xf32> to vector<1x128xf32>
      %14 = arith.addf %10, %13 : vector<1x128xf32>
      %c0_9 = arith.constant 0 : index
      %c128 = arith.constant 128 : index
      %15 = vector.load %arg7[%c0_9, %c128] : memref<32x2048xf32, #tpu.memory_space<vmem>>, vector<32x128xf32>
      %cst_10 = arith.constant dense<0.000000e+00> : vector<128xf32>
      %16 = vector.multi_reduction <add>, %15, %cst_10 [0] : vector<32x128xf32> to vector<128xf32>
      %17 = vector.shape_cast %16 : vector<128xf32> to vector<1x128xf32>
      %18 = arith.addf %14, %17 : vector<1x128xf32>
      %c0_11 = arith.constant 0 : index
      %c256 = arith.constant 256 : index
      %19 = vector.load %arg7[%c0_11, %c256] : memref<32x2048xf32, #tpu.memory_space<vmem>>, vector<32x128xf32>
      %cst_12 = arith.constant dense<0.000000e+00> : vector<128xf32>
      %20 = vector.multi_reduction <add>, %19, %cst_12 [0] : vector<32x128xf32> to vector<128xf32>
      %21 = vector.shape_cast %20 : vector<128xf32> to vector<1x128xf32>
      %22 = arith.addf %18, %21 : vector<1x128xf32>
      %c0_13 = arith.constant 0 : index
      %c384 = arith.constant 384 : index
      %23 = vector.load %arg7[%c0_13, %c384] : memref<32x2048xf32, #tpu.memory_space<vmem>>, vector<32x128xf32>
      %cst_14 = arith.constant dense<0.000000e+00> : vector<128xf32>
      %24 = vector.multi_reduction <add>, %23, %cst_14 [0] : vector<32x128xf32> to vector<128xf32>
      %25 = vector.shape_cast %24 : vector<128xf32> to vector<1x128xf32>
      %26 = arith.addf %22, %25 : vector<1x128xf32>
      %c0_15 = arith.constant 0 : index
      %c512 = arith.constant 512 : index
      %27 = vector.load %arg7[%c0_15, %c512] : memref<32x2048xf32, #tpu.memory_space<vmem>>, vector<32x128xf32>
      %cst_16 = arith.constant dense<0.000000e+00> : vector<128xf32>
      %28 = vector.multi_reduction <add>, %27, %cst_16 [0] : vector<32x128xf32> to vector<128xf32>
      %29 = vector.shape_cast %28 : vector<128xf32> to vector<1x128xf32>
      %30 = arith.addf %26, %29 : vector<1x128xf32>
      %c0_17 = arith.constant 0 : index
      %c640 = arith.constant 640 : index
      %31 = vector.load %arg7[%c0_17, %c640] : memref<32x2048xf32, #tpu.memory_space<vmem>>, vector<32x128xf32>
      %cst_18 = arith.constant dense<0.000000e+00> : vector<128xf32>
      %32 = vector.multi_reduction <add>, %31, %cst_18 [0] : vector<32x128xf32> to vector<128xf32>
      %33 = vector.shape_cast %32 : vector<128xf32> to vector<1x128xf32>
      %34 = arith.addf %30, %33 : vector<1x128xf32>
      %c0_19 = arith.constant 0 : index
      %c768 = arith.constant 768 : index
      %35 = vector.load %arg7[%c0_19, %c768] : memref<32x2048xf32, #tpu.memory_space<vmem>>, vector<32x128xf32>
      %cst_20 = arith.constant dense<0.000000e+00> : vector<128xf32>
      %36 = vector.multi_reduction <add>, %35, %cst_20 [0] : vector<32x128xf32> to vector<128xf32>
      %37 = vector.shape_cast %36 : vector<128xf32> to vector<1x128xf32>
      %38 = arith.addf %34, %37 : vector<1x128xf32>
      %c0_21 = arith.constant 0 : index
      %c896 = arith.constant 896 : index
      %39 = vector.load %arg7[%c0_21, %c896] : memref<32x2048xf32, #tpu.memory_space<vmem>>, vector<32x128xf32>
      %cst_22 = arith.constant dense<0.000000e+00> : vector<128xf32>
      %40 = vector.multi_reduction <add>, %39, %cst_22 [0] : vector<32x128xf32> to vector<128xf32>
      %41 = vector.shape_cast %40 : vector<128xf32> to vector<1x128xf32>
      %42 = arith.addf %38, %41 : vector<1x128xf32>
      %c0_23 = arith.constant 0 : index
      %c1024 = arith.constant 1024 : index
      %43 = vector.load %arg7[%c0_23, %c1024] : memref<32x2048xf32, #tpu.memory_space<vmem>>, vector<32x128xf32>
      %cst_24 = arith.constant dense<0.000000e+00> : vector<128xf32>
      %44 = vector.multi_reduction <add>, %43, %cst_24 [0] : vector<32x128xf32> to vector<128xf32>
      %45 = vector.shape_cast %44 : vector<128xf32> to vector<1x128xf32>
      %46 = arith.addf %42, %45 : vector<1x128xf32>
      %c0_25 = arith.constant 0 : index
      %c1152 = arith.constant 1152 : index
      %47 = vector.load %arg7[%c0_25, %c1152] : memref<32x2048xf32, #tpu.memory_space<vmem>>, vector<32x128xf32>
      %cst_26 = arith.constant dense<0.000000e+00> : vector<128xf32>
      %48 = vector.multi_reduction <add>, %47, %cst_26 [0] : vector<32x128xf32> to vector<128xf32>
      %49 = vector.shape_cast %48 : vector<128xf32> to vector<1x128xf32>
      %50 = arith.addf %46, %49 : vector<1x128xf32>
      %c0_27 = arith.constant 0 : index
      %c1280 = arith.constant 1280 : index
      %51 = vector.load %arg7[%c0_27, %c1280] : memref<32x2048xf32, #tpu.memory_space<vmem>>, vector<32x128xf32>
      %cst_28 = arith.constant dense<0.000000e+00> : vector<128xf32>
      %52 = vector.multi_reduction <add>, %51, %cst_28 [0] : vector<32x128xf32> to vector<128xf32>
      %53 = vector.shape_cast %52 : vector<128xf32> to vector<1x128xf32>
      %54 = arith.addf %50, %53 : vector<1x128xf32>
      %c0_29 = arith.constant 0 : index
      %c1408 = arith.constant 1408 : index
      %55 = vector.load %arg7[%c0_29, %c1408] : memref<32x2048xf32, #tpu.memory_space<vmem>>, vector<32x128xf32>
      %cst_30 = arith.constant dense<0.000000e+00> : vector<128xf32>
      %56 = vector.multi_reduction <add>, %55, %cst_30 [0] : vector<32x128xf32> to vector<128xf32>
      %57 = vector.shape_cast %56 : vector<128xf32> to vector<1x128xf32>
      %58 = arith.addf %54, %57 : vector<1x128xf32>
      %c0_31 = arith.constant 0 : index
      %c1536 = arith.constant 1536 : index
      %59 = vector.load %arg7[%c0_31, %c1536] : memref<32x2048xf32, #tpu.memory_space<vmem>>, vector<32x128xf32>
      %cst_32 = arith.constant dense<0.000000e+00> : vector<128xf32>
      %60 = vector.multi_reduction <add>, %59, %cst_32 [0] : vector<32x128xf32> to vector<128xf32>
      %61 = vector.shape_cast %60 : vector<128xf32> to vector<1x128xf32>
      %62 = arith.addf %58, %61 : vector<1x128xf32>
      %c0_33 = arith.constant 0 : index
      %c1664 = arith.constant 1664 : index
      %63 = vector.load %arg7[%c0_33, %c1664] : memref<32x2048xf32, #tpu.memory_space<vmem>>, vector<32x128xf32>
      %cst_34 = arith.constant dense<0.000000e+00> : vector<128xf32>
      %64 = vector.multi_reduction <add>, %63, %cst_34 [0] : vector<32x128xf32> to vector<128xf32>
      %65 = vector.shape_cast %64 : vector<128xf32> to vector<1x128xf32>
      %66 = arith.addf %62, %65 : vector<1x128xf32>
      %c0_35 = arith.constant 0 : index
      %c1792 = arith.constant 1792 : index
      %67 = vector.load %arg7[%c0_35, %c1792] : memref<32x2048xf32, #tpu.memory_space<vmem>>, vector<32x128xf32>
      %cst_36 = arith.constant dense<0.000000e+00> : vector<128xf32>
      %68 = vector.multi_reduction <add>, %67, %cst_36 [0] : vector<32x128xf32> to vector<128xf32>
      %69 = vector.shape_cast %68 : vector<128xf32> to vector<1x128xf32>
      %70 = arith.addf %66, %69 : vector<1x128xf32>
      %c0_37 = arith.constant 0 : index
      %c1920 = arith.constant 1920 : index
      %71 = vector.load %arg7[%c0_37, %c1920] : memref<32x2048xf32, #tpu.memory_space<vmem>>, vector<32x128xf32>
      %cst_38 = arith.constant dense<0.000000e+00> : vector<128xf32>
      %72 = vector.multi_reduction <add>, %71, %cst_38 [0] : vector<32x128xf32> to vector<128xf32>
      %73 = vector.shape_cast %72 : vector<128xf32> to vector<1x128xf32>
      %74 = arith.addf %70, %73 : vector<1x128xf32>
      %cst_39 = arith.constant 0.001953125 : f32
      %75 = vector.broadcast %cst_39 : f32 to vector<1x128xf32>
      %76 = arith.mulf %74, %75 : vector<1x128xf32>
      %cst_40 = arith.constant 0.000000e+00 : f32
      %77 = vector.broadcast %cst_40 : f32 to vector<1x128xf32>
      %c0_41 = arith.constant 0 : index
      %c0_42 = arith.constant 0 : index
      %78 = vector.load %arg7[%c0_41, %c0_42] : memref<32x2048xf32, #tpu.memory_space<vmem>>, vector<32x128xf32>
      %79 = vector.broadcast %76 : vector<1x128xf32> to vector<32x128xf32>
      %80 = arith.subf %78, %79 : vector<32x128xf32>
      %81 = arith.mulf %80, %80 : vector<32x128xf32>
      %cst_43 = arith.constant dense<0.000000e+00> : vector<128xf32>
      %82 = vector.multi_reduction <add>, %81, %cst_43 [0] : vector<32x128xf32> to vector<128xf32>
      %83 = vector.shape_cast %82 : vector<128xf32> to vector<1x128xf32>
      %84 = arith.addf %77, %83 : vector<1x128xf32>
      %c0_44 = arith.constant 0 : index
      %c128_45 = arith.constant 128 : index
      %85 = vector.load %arg7[%c0_44, %c128_45] : memref<32x2048xf32, #tpu.memory_space<vmem>>, vector<32x128xf32>
      %86 = vector.broadcast %76 : vector<1x128xf32> to vector<32x128xf32>
      %87 = arith.subf %85, %86 : vector<32x128xf32>
      %88 = arith.mulf %87, %87 : vector<32x128xf32>
      %cst_46 = arith.constant dense<0.000000e+00> : vector<128xf32>
      %89 = vector.multi_reduction <add>, %88, %cst_46 [0] : vector<32x128xf32> to vector<128xf32>
      %90 = vector.shape_cast %89 : vector<128xf32> to vector<1x128xf32>
      %91 = arith.addf %84, %90 : vector<1x128xf32>
      %c0_47 = arith.constant 0 : index
      %c256_48 = arith.constant 256 : index
      %92 = vector.load %arg7[%c0_47, %c256_48] : memref<32x2048xf32, #tpu.memory_space<vmem>>, vector<32x128xf32>
      %93 = vector.broadcast %76 : vector<1x128xf32> to vector<32x128xf32>
      %94 = arith.subf %92, %93 : vector<32x128xf32>
      %95 = arith.mulf %94, %94 : vector<32x128xf32>
      %cst_49 = arith.constant dense<0.000000e+00> : vector<128xf32>
      %96 = vector.multi_reduction <add>, %95, %cst_49 [0] : vector<32x128xf32> to vector<128xf32>
      %97 = vector.shape_cast %96 : vector<128xf32> to vector<1x128xf32>
      %98 = arith.addf %91, %97 : vector<1x128xf32>
      %c0_50 = arith.constant 0 : index
      %c384_51 = arith.constant 384 : index
      %99 = vector.load %arg7[%c0_50, %c384_51] : memref<32x2048xf32, #tpu.memory_space<vmem>>, vector<32x128xf32>
      %100 = vector.broadcast %76 : vector<1x128xf32> to vector<32x128xf32>
      %101 = arith.subf %99, %100 : vector<32x128xf32>
      %102 = arith.mulf %101, %101 : vector<32x128xf32>
      %cst_52 = arith.constant dense<0.000000e+00> : vector<128xf32>
      %103 = vector.multi_reduction <add>, %102, %cst_52 [0] : vector<32x128xf32> to vector<128xf32>
      %104 = vector.shape_cast %103 : vector<128xf32> to vector<1x128xf32>
      %105 = arith.addf %98, %104 : vector<1x128xf32>
      %c0_53 = arith.constant 0 : index
      %c512_54 = arith.constant 512 : index
      %106 = vector.load %arg7[%c0_53, %c512_54] : memref<32x2048xf32, #tpu.memory_space<vmem>>, vector<32x128xf32>
      %107 = vector.broadcast %76 : vector<1x128xf32> to vector<32x128xf32>
      %108 = arith.subf %106, %107 : vector<32x128xf32>
      %109 = arith.mulf %108, %108 : vector<32x128xf32>
      %cst_55 = arith.constant dense<0.000000e+00> : vector<128xf32>
      %110 = vector.multi_reduction <add>, %109, %cst_55 [0] : vector<32x128xf32> to vector<128xf32>
      %111 = vector.shape_cast %110 : vector<128xf32> to vector<1x128xf32>
      %112 = arith.addf %105, %111 : vector<1x128xf32>
      %c0_56 = arith.constant 0 : index
      %c640_57 = arith.constant 640 : index
      %113 = vector.load %arg7[%c0_56, %c640_57] : memref<32x2048xf32, #tpu.memory_space<vmem>>, vector<32x128xf32>
      %114 = vector.broadcast %76 : vector<1x128xf32> to vector<32x128xf32>
      %115 = arith.subf %113, %114 : vector<32x128xf32>
      %116 = arith.mulf %115, %115 : vector<32x128xf32>
      %cst_58 = arith.constant dense<0.000000e+00> : vector<128xf32>
      %117 = vector.multi_reduction <add>, %116, %cst_58 [0] : vector<32x128xf32> to vector<128xf32>
      %118 = vector.shape_cast %117 : vector<128xf32> to vector<1x128xf32>
      %119 = arith.addf %112, %118 : vector<1x128xf32>
      %c0_59 = arith.constant 0 : index
      %c768_60 = arith.constant 768 : index
      %120 = vector.load %arg7[%c0_59, %c768_60] : memref<32x2048xf32, #tpu.memory_space<vmem>>, vector<32x128xf32>
      %121 = vector.broadcast %76 : vector<1x128xf32> to vector<32x128xf32>
      %122 = arith.subf %120, %121 : vector<32x128xf32>
      %123 = arith.mulf %122, %122 : vector<32x128xf32>
      %cst_61 = arith.constant dense<0.000000e+00> : vector<128xf32>
      %124 = vector.multi_reduction <add>, %123, %cst_61 [0] : vector<32x128xf32> to vector<128xf32>
      %125 = vector.shape_cast %124 : vector<128xf32> to vector<1x128xf32>
      %126 = arith.addf %119, %125 : vector<1x128xf32>
      %c0_62 = arith.constant 0 : index
      %c896_63 = arith.constant 896 : index
      %127 = vector.load %arg7[%c0_62, %c896_63] : memref<32x2048xf32, #tpu.memory_space<vmem>>, vector<32x128xf32>
      %128 = vector.broadcast %76 : vector<1x128xf32> to vector<32x128xf32>
      %129 = arith.subf %127, %128 : vector<32x128xf32>
      %130 = arith.mulf %129, %129 : vector<32x128xf32>
      %cst_64 = arith.constant dense<0.000000e+00> : vector<128xf32>
      %131 = vector.multi_reduction <add>, %130, %cst_64 [0] : vector<32x128xf32> to vector<128xf32>
      %132 = vector.shape_cast %131 : vector<128xf32> to vector<1x128xf32>
      %133 = arith.addf %126, %132 : vector<1x128xf32>
      %c0_65 = arith.constant 0 : index
      %c1024_66 = arith.constant 1024 : index
      %134 = vector.load %arg7[%c0_65, %c1024_66] : memref<32x2048xf32, #tpu.memory_space<vmem>>, vector<32x128xf32>
      %135 = vector.broadcast %76 : vector<1x128xf32> to vector<32x128xf32>
      %136 = arith.subf %134, %135 : vector<32x128xf32>
      %137 = arith.mulf %136, %136 : vector<32x128xf32>
      %cst_67 = arith.constant dense<0.000000e+00> : vector<128xf32>
      %138 = vector.multi_reduction <add>, %137, %cst_67 [0] : vector<32x128xf32> to vector<128xf32>
      %139 = vector.shape_cast %138 : vector<128xf32> to vector<1x128xf32>
      %140 = arith.addf %133, %139 : vector<1x128xf32>
      %c0_68 = arith.constant 0 : index
      %c1152_69 = arith.constant 1152 : index
      %141 = vector.load %arg7[%c0_68, %c1152_69] : memref<32x2048xf32, #tpu.memory_space<vmem>>, vector<32x128xf32>
      %142 = vector.broadcast %76 : vector<1x128xf32> to vector<32x128xf32>
      %143 = arith.subf %141, %142 : vector<32x128xf32>
      %144 = arith.mulf %143, %143 : vector<32x128xf32>
      %cst_70 = arith.constant dense<0.000000e+00> : vector<128xf32>
      %145 = vector.multi_reduction <add>, %144, %cst_70 [0] : vector<32x128xf32> to vector<128xf32>
      %146 = vector.shape_cast %145 : vector<128xf32> to vector<1x128xf32>
      %147 = arith.addf %140, %146 : vector<1x128xf32>
      %c0_71 = arith.constant 0 : index
      %c1280_72 = arith.constant 1280 : index
      %148 = vector.load %arg7[%c0_71, %c1280_72] : memref<32x2048xf32, #tpu.memory_space<vmem>>, vector<32x128xf32>
      %149 = vector.broadcast %76 : vector<1x128xf32> to vector<32x128xf32>
      %150 = arith.subf %148, %149 : vector<32x128xf32>
      %151 = arith.mulf %150, %150 : vector<32x128xf32>
      %cst_73 = arith.constant dense<0.000000e+00> : vector<128xf32>
      %152 = vector.multi_reduction <add>, %151, %cst_73 [0] : vector<32x128xf32> to vector<128xf32>
      %153 = vector.shape_cast %152 : vector<128xf32> to vector<1x128xf32>
      %154 = arith.addf %147, %153 : vector<1x128xf32>
      %c0_74 = arith.constant 0 : index
      %c1408_75 = arith.constant 1408 : index
      %155 = vector.load %arg7[%c0_74, %c1408_75] : memref<32x2048xf32, #tpu.memory_space<vmem>>, vector<32x128xf32>
      %156 = vector.broadcast %76 : vector<1x128xf32> to vector<32x128xf32>
      %157 = arith.subf %155, %156 : vector<32x128xf32>
      %158 = arith.mulf %157, %157 : vector<32x128xf32>
      %cst_76 = arith.constant dense<0.000000e+00> : vector<128xf32>
      %159 = vector.multi_reduction <add>, %158, %cst_76 [0] : vector<32x128xf32> to vector<128xf32>
      %160 = vector.shape_cast %159 : vector<128xf32> to vector<1x128xf32>
      %161 = arith.addf %154, %160 : vector<1x128xf32>
      %c0_77 = arith.constant 0 : index
      %c1536_78 = arith.constant 1536 : index
      %162 = vector.load %arg7[%c0_77, %c1536_78] : memref<32x2048xf32, #tpu.memory_space<vmem>>, vector<32x128xf32>
      %163 = vector.broadcast %76 : vector<1x128xf32> to vector<32x128xf32>
      %164 = arith.subf %162, %163 : vector<32x128xf32>
      %165 = arith.mulf %164, %164 : vector<32x128xf32>
      %cst_79 = arith.constant dense<0.000000e+00> : vector<128xf32>
      %166 = vector.multi_reduction <add>, %165, %cst_79 [0] : vector<32x128xf32> to vector<128xf32>
      %167 = vector.shape_cast %166 : vector<128xf32> to vector<1x128xf32>
      %168 = arith.addf %161, %167 : vector<1x128xf32>
      %c0_80 = arith.constant 0 : index
      %c1664_81 = arith.constant 1664 : index
      %169 = vector.load %arg7[%c0_80, %c1664_81] : memref<32x2048xf32, #tpu.memory_space<vmem>>, vector<32x128xf32>
      %170 = vector.broadcast %76 : vector<1x128xf32> to vector<32x128xf32>
      %171 = arith.subf %169, %170 : vector<32x128xf32>
      %172 = arith.mulf %171, %171 : vector<32x128xf32>
      %cst_82 = arith.constant dense<0.000000e+00> : vector<128xf32>
      %173 = vector.multi_reduction <add>, %172, %cst_82 [0] : vector<32x128xf32> to vector<128xf32>
      %174 = vector.shape_cast %173 : vector<128xf32> to vector<1x128xf32>
      %175 = arith.addf %168, %174 : vector<1x128xf32>
      %c0_83 = arith.constant 0 : index
      %c1792_84 = arith.constant 1792 : index
      %176 = vector.load %arg7[%c0_83, %c1792_84] : memref<32x2048xf32, #tpu.memory_space<vmem>>, vector<32x128xf32>
      %177 = vector.broadcast %76 : vector<1x128xf32> to vector<32x128xf32>
      %178 = arith.subf %176, %177 : vector<32x128xf32>
      %179 = arith.mulf %178, %178 : vector<32x128xf32>
      %cst_85 = arith.constant dense<0.000000e+00> : vector<128xf32>
      %180 = vector.multi_reduction <add>, %179, %cst_85 [0] : vector<32x128xf32> to vector<128xf32>
      %181 = vector.shape_cast %180 : vector<128xf32> to vector<1x128xf32>
      %182 = arith.addf %175, %181 : vector<1x128xf32>
      %c0_86 = arith.constant 0 : index
      %c1920_87 = arith.constant 1920 : index
      %183 = vector.load %arg7[%c0_86, %c1920_87] : memref<32x2048xf32, #tpu.memory_space<vmem>>, vector<32x128xf32>
      %184 = vector.broadcast %76 : vector<1x128xf32> to vector<32x128xf32>
      %185 = arith.subf %183, %184 : vector<32x128xf32>
      %186 = arith.mulf %185, %185 : vector<32x128xf32>
      %cst_88 = arith.constant dense<0.000000e+00> : vector<128xf32>
      %187 = vector.multi_reduction <add>, %186, %cst_88 [0] : vector<32x128xf32> to vector<128xf32>
      %188 = vector.shape_cast %187 : vector<128xf32> to vector<1x128xf32>
      %189 = arith.addf %182, %188 : vector<1x128xf32>
      %190 = arith.mulf %76, %76 : vector<1x128xf32>
      %cst_89 = arith.constant 0.000000e+00 : f32
      %191 = vector.broadcast %cst_89 : f32 to vector<1x128xf32>
      %192 = arith.mulf %191, %190 : vector<1x128xf32>
      %193 = arith.subf %189, %192 : vector<1x128xf32>
      %cst_90 = arith.constant 0.001953125 : f32
      %194 = vector.broadcast %cst_90 : f32 to vector<1x128xf32>
      %195 = arith.mulf %193, %194 : vector<1x128xf32>
      %cst_91 = arith.constant 0.000000e+00 : f32
      %196 = vector.broadcast %cst_91 : f32 to vector<1x128xf32>
      %197 = arith.maximumf %195, %196 : vector<1x128xf32>
      %c0_92 = arith.constant 0 : index
      %c0_93 = arith.constant 0 : index
      %198 = vector.load %arg4[%c0_92, %c0_93] : memref<1x128xf32, #tpu.memory_space<vmem>>, vector<1x128xf32>
      %cst_94 = arith.constant 9.99999974E-6 : f32
      %199 = vector.broadcast %cst_94 : f32 to vector<1x128xf32>
      %200 = arith.addf %197, %199 : vector<1x128xf32>
      %201 = math.rsqrt %200 : vector<1x128xf32>
      %202 = arith.mulf %198, %201 : vector<1x128xf32>
      %c0_95 = arith.constant 0 : index
      %c0_96 = arith.constant 0 : index
      %203 = vector.load %arg5[%c0_95, %c0_96] : memref<1x128xf32, #tpu.memory_space<vmem>>, vector<1x128xf32>
      %204 = arith.mulf %76, %202 : vector<1x128xf32>
      %205 = arith.subf %203, %204 : vector<1x128xf32>
      %c0_97 = arith.constant 0 : index
      %c0_98 = arith.constant 0 : index
      %206 = vector.load %arg7[%c0_97, %c0_98] : memref<32x2048xf32, #tpu.memory_space<vmem>>, vector<32x128xf32>
      %207 = vector.broadcast %202 : vector<1x128xf32> to vector<32x128xf32>
      %208 = arith.mulf %206, %207 : vector<32x128xf32>
      %209 = vector.broadcast %205 : vector<1x128xf32> to vector<32x128xf32>
      %210 = arith.addf %208, %209 : vector<32x128xf32>
      %cst_99 = arith.constant 0.000000e+00 : f32
      %211 = vector.broadcast %cst_99 : f32 to vector<32x128xf32>
      %212 = arith.maximumf %210, %211 : vector<32x128xf32>
      %c0_100 = arith.constant 0 : index
      %c0_101 = arith.constant 0 : index
      %213 = vector.load %arg6[%c0_100, %c0_101] : memref<32x2048xf32, #tpu.memory_space<vmem>>, vector<32x128xf32>
      tpu.vector_store %arg6[%c0_100, %c0_101], %212 {strides = array<i32>} : memref<32x2048xf32, #tpu.memory_space<vmem>>, vector<32x128xf32>,
      %c0_102 = arith.constant 0 : index
      %c128_103 = arith.constant 128 : index
      %214 = vector.load %arg7[%c0_102, %c128_103] : memref<32x2048xf32, #tpu.memory_space<vmem>>, vector<32x128xf32>
      %215 = vector.broadcast %202 : vector<1x128xf32> to vector<32x128xf32>
      %216 = arith.mulf %214, %215 : vector<32x128xf32>
      %217 = vector.broadcast %205 : vector<1x128xf32> to vector<32x128xf32>
      %218 = arith.addf %216, %217 : vector<32x128xf32>
      %cst_104 = arith.constant 0.000000e+00 : f32
      %219 = vector.broadcast %cst_104 : f32 to vector<32x128xf32>
      %220 = arith.maximumf %218, %219 : vector<32x128xf32>
      %c0_105 = arith.constant 0 : index
      %c128_106 = arith.constant 128 : index
      %221 = vector.load %arg6[%c0_105, %c128_106] : memref<32x2048xf32, #tpu.memory_space<vmem>>, vector<32x128xf32>
      tpu.vector_store %arg6[%c0_105, %c128_106], %220 {strides = array<i32>} : memref<32x2048xf32, #tpu.memory_space<vmem>>, vector<32x128xf32>,
      %c0_107 = arith.constant 0 : index
      %c256_108 = arith.constant 256 : index
      %222 = vector.load %arg7[%c0_107, %c256_108] : memref<32x2048xf32, #tpu.memory_space<vmem>>, vector<32x128xf32>
      %223 = vector.broadcast %202 : vector<1x128xf32> to vector<32x128xf32>
      %224 = arith.mulf %222, %223 : vector<32x128xf32>
      %225 = vector.broadcast %205 : vector<1x128xf32> to vector<32x128xf32>
      %226 = arith.addf %224, %225 : vector<32x128xf32>
      %cst_109 = arith.constant 0.000000e+00 : f32
      %227 = vector.broadcast %cst_109 : f32 to vector<32x128xf32>
      %228 = arith.maximumf %226, %227 : vector<32x128xf32>
      %c0_110 = arith.constant 0 : index
      %c256_111 = arith.constant 256 : index
      %229 = vector.load %arg6[%c0_110, %c256_111] : memref<32x2048xf32, #tpu.memory_space<vmem>>, vector<32x128xf32>
      tpu.vector_store %arg6[%c0_110, %c256_111], %228 {strides = array<i32>} : memref<32x2048xf32, #tpu.memory_space<vmem>>, vector<32x128xf32>,
      %c0_112 = arith.constant 0 : index
      %c384_113 = arith.constant 384 : index
      %230 = vector.load %arg7[%c0_112, %c384_113] : memref<32x2048xf32, #tpu.memory_space<vmem>>, vector<32x128xf32>
      %231 = vector.broadcast %202 : vector<1x128xf32> to vector<32x128xf32>
      %232 = arith.mulf %230, %231 : vector<32x128xf32>
      %233 = vector.broadcast %205 : vector<1x128xf32> to vector<32x128xf32>
      %234 = arith.addf %232, %233 : vector<32x128xf32>
      %cst_114 = arith.constant 0.000000e+00 : f32
      %235 = vector.broadcast %cst_114 : f32 to vector<32x128xf32>
      %236 = arith.maximumf %234, %235 : vector<32x128xf32>
      %c0_115 = arith.constant 0 : index
      %c384_116 = arith.constant 384 : index
      %237 = vector.load %arg6[%c0_115, %c384_116] : memref<32x2048xf32, #tpu.memory_space<vmem>>, vector<32x128xf32>
      tpu.vector_store %arg6[%c0_115, %c384_116], %236 {strides = array<i32>} : memref<32x2048xf32, #tpu.memory_space<vmem>>, vector<32x128xf32>,
      %c0_117 = arith.constant 0 : index
      %c512_118 = arith.constant 512 : index
      %238 = vector.load %arg7[%c0_117, %c512_118] : memref<32x2048xf32, #tpu.memory_space<vmem>>, vector<32x128xf32>
      %239 = vector.broadcast %202 : vector<1x128xf32> to vector<32x128xf32>
      %240 = arith.mulf %238, %239 : vector<32x128xf32>
      %241 = vector.broadcast %205 : vector<1x128xf32> to vector<32x128xf32>
      %242 = arith.addf %240, %241 : vector<32x128xf32>
      %cst_119 = arith.constant 0.000000e+00 : f32
      %243 = vector.broadcast %cst_119 : f32 to vector<32x128xf32>
      %244 = arith.maximumf %242, %243 : vector<32x128xf32>
      %c0_120 = arith.constant 0 : index
      %c512_121 = arith.constant 512 : index
      %245 = vector.load %arg6[%c0_120, %c512_121] : memref<32x2048xf32, #tpu.memory_space<vmem>>, vector<32x128xf32>
      tpu.vector_store %arg6[%c0_120, %c512_121], %244 {strides = array<i32>} : memref<32x2048xf32, #tpu.memory_space<vmem>>, vector<32x128xf32>,
      %c0_122 = arith.constant 0 : index
      %c640_123 = arith.constant 640 : index
      %246 = vector.load %arg7[%c0_122, %c640_123] : memref<32x2048xf32, #tpu.memory_space<vmem>>, vector<32x128xf32>
      %247 = vector.broadcast %202 : vector<1x128xf32> to vector<32x128xf32>
      %248 = arith.mulf %246, %247 : vector<32x128xf32>
      %249 = vector.broadcast %205 : vector<1x128xf32> to vector<32x128xf32>
      %250 = arith.addf %248, %249 : vector<32x128xf32>
      %cst_124 = arith.constant 0.000000e+00 : f32
      %251 = vector.broadcast %cst_124 : f32 to vector<32x128xf32>
      %252 = arith.maximumf %250, %251 : vector<32x128xf32>
      %c0_125 = arith.constant 0 : index
      %c640_126 = arith.constant 640 : index
      %253 = vector.load %arg6[%c0_125, %c640_126] : memref<32x2048xf32, #tpu.memory_space<vmem>>, vector<32x128xf32>
      tpu.vector_store %arg6[%c0_125, %c640_126], %252 {strides = array<i32>} : memref<32x2048xf32, #tpu.memory_space<vmem>>, vector<32x128xf32>,
      %c0_127 = arith.constant 0 : index
      %c768_128 = arith.constant 768 : index
      %254 = vector.load %arg7[%c0_127, %c768_128] : memref<32x2048xf32, #tpu.memory_space<vmem>>, vector<32x128xf32>
      %255 = vector.broadcast %202 : vector<1x128xf32> to vector<32x128xf32>
      %256 = arith.mulf %254, %255 : vector<32x128xf32>
      %257 = vector.broadcast %205 : vector<1x128xf32> to vector<32x128xf32>
      %258 = arith.addf %256, %257 : vector<32x128xf32>
      %cst_129 = arith.constant 0.000000e+00 : f32
      %259 = vector.broadcast %cst_129 : f32 to vector<32x128xf32>
      %260 = arith.maximumf %258, %259 : vector<32x128xf32>
      %c0_130 = arith.constant 0 : index
      %c768_131 = arith.constant 768 : index
      %261 = vector.load %arg6[%c0_130, %c768_131] : memref<32x2048xf32, #tpu.memory_space<vmem>>, vector<32x128xf32>
      tpu.vector_store %arg6[%c0_130, %c768_131], %260 {strides = array<i32>} : memref<32x2048xf32, #tpu.memory_space<vmem>>, vector<32x128xf32>,
      %c0_132 = arith.constant 0 : index
      %c896_133 = arith.constant 896 : index
      %262 = vector.load %arg7[%c0_132, %c896_133] : memref<32x2048xf32, #tpu.memory_space<vmem>>, vector<32x128xf32>
      %263 = vector.broadcast %202 : vector<1x128xf32> to vector<32x128xf32>
      %264 = arith.mulf %262, %263 : vector<32x128xf32>
      %265 = vector.broadcast %205 : vector<1x128xf32> to vector<32x128xf32>
      %266 = arith.addf %264, %265 : vector<32x128xf32>
      %cst_134 = arith.constant 0.000000e+00 : f32
      %267 = vector.broadcast %cst_134 : f32 to vector<32x128xf32>
      %268 = arith.maximumf %266, %267 : vector<32x128xf32>
      %c0_135 = arith.constant 0 : index
      %c896_136 = arith.constant 896 : index
      %269 = vector.load %arg6[%c0_135, %c896_136] : memref<32x2048xf32, #tpu.memory_space<vmem>>, vector<32x128xf32>
      tpu.vector_store %arg6[%c0_135, %c896_136], %268 {strides = array<i32>} : memref<32x2048xf32, #tpu.memory_space<vmem>>, vector<32x128xf32>,
      %c0_137 = arith.constant 0 : index
      %c1024_138 = arith.constant 1024 : index
      %270 = vector.load %arg7[%c0_137, %c1024_138] : memref<32x2048xf32, #tpu.memory_space<vmem>>, vector<32x128xf32>
      %271 = vector.broadcast %202 : vector<1x128xf32> to vector<32x128xf32>
      %272 = arith.mulf %270, %271 : vector<32x128xf32>
      %273 = vector.broadcast %205 : vector<1x128xf32> to vector<32x128xf32>
      %274 = arith.addf %272, %273 : vector<32x128xf32>
      %cst_139 = arith.constant 0.000000e+00 : f32
      %275 = vector.broadcast %cst_139 : f32 to vector<32x128xf32>
      %276 = arith.maximumf %274, %275 : vector<32x128xf32>
      %c0_140 = arith.constant 0 : index
      %c1024_141 = arith.constant 1024 : index
      %277 = vector.load %arg6[%c0_140, %c1024_141] : memref<32x2048xf32, #tpu.memory_space<vmem>>, vector<32x128xf32>
      tpu.vector_store %arg6[%c0_140, %c1024_141], %276 {strides = array<i32>} : memref<32x2048xf32, #tpu.memory_space<vmem>>, vector<32x128xf32>,
      %c0_142 = arith.constant 0 : index
      %c1152_143 = arith.constant 1152 : index
      %278 = vector.load %arg7[%c0_142, %c1152_143] : memref<32x2048xf32, #tpu.memory_space<vmem>>, vector<32x128xf32>
      %279 = vector.broadcast %202 : vector<1x128xf32> to vector<32x128xf32>
      %280 = arith.mulf %278, %279 : vector<32x128xf32>
      %281 = vector.broadcast %205 : vector<1x128xf32> to vector<32x128xf32>
      %282 = arith.addf %280, %281 : vector<32x128xf32>
      %cst_144 = arith.constant 0.000000e+00 : f32
      %283 = vector.broadcast %cst_144 : f32 to vector<32x128xf32>
      %284 = arith.maximumf %282, %283 : vector<32x128xf32>
      %c0_145 = arith.constant 0 : index
      %c1152_146 = arith.constant 1152 : index
      %285 = vector.load %arg6[%c0_145, %c1152_146] : memref<32x2048xf32, #tpu.memory_space<vmem>>, vector<32x128xf32>
      tpu.vector_store %arg6[%c0_145, %c1152_146], %284 {strides = array<i32>} : memref<32x2048xf32, #tpu.memory_space<vmem>>, vector<32x128xf32>,
      %c0_147 = arith.constant 0 : index
      %c1280_148 = arith.constant 1280 : index
      %286 = vector.load %arg7[%c0_147, %c1280_148] : memref<32x2048xf32, #tpu.memory_space<vmem>>, vector<32x128xf32>
      %287 = vector.broadcast %202 : vector<1x128xf32> to vector<32x128xf32>
      %288 = arith.mulf %286, %287 : vector<32x128xf32>
      %289 = vector.broadcast %205 : vector<1x128xf32> to vector<32x128xf32>
      %290 = arith.addf %288, %289 : vector<32x128xf32>
      %cst_149 = arith.constant 0.000000e+00 : f32
      %291 = vector.broadcast %cst_149 : f32 to vector<32x128xf32>
      %292 = arith.maximumf %290, %291 : vector<32x128xf32>
      %c0_150 = arith.constant 0 : index
      %c1280_151 = arith.constant 1280 : index
      %293 = vector.load %arg6[%c0_150, %c1280_151] : memref<32x2048xf32, #tpu.memory_space<vmem>>, vector<32x128xf32>
      tpu.vector_store %arg6[%c0_150, %c1280_151], %292 {strides = array<i32>} : memref<32x2048xf32, #tpu.memory_space<vmem>>, vector<32x128xf32>,
      %c0_152 = arith.constant 0 : index
      %c1408_153 = arith.constant 1408 : index
      %294 = vector.load %arg7[%c0_152, %c1408_153] : memref<32x2048xf32, #tpu.memory_space<vmem>>, vector<32x128xf32>
      %295 = vector.broadcast %202 : vector<1x128xf32> to vector<32x128xf32>
      %296 = arith.mulf %294, %295 : vector<32x128xf32>
      %297 = vector.broadcast %205 : vector<1x128xf32> to vector<32x128xf32>
      %298 = arith.addf %296, %297 : vector<32x128xf32>
      %cst_154 = arith.constant 0.000000e+00 : f32
      %299 = vector.broadcast %cst_154 : f32 to vector<32x128xf32>
      %300 = arith.maximumf %298, %299 : vector<32x128xf32>
      %c0_155 = arith.constant 0 : index
      %c1408_156 = arith.constant 1408 : index
      %301 = vector.load %arg6[%c0_155, %c1408_156] : memref<32x2048xf32, #tpu.memory_space<vmem>>, vector<32x128xf32>
      tpu.vector_store %arg6[%c0_155, %c1408_156], %300 {strides = array<i32>} : memref<32x2048xf32, #tpu.memory_space<vmem>>, vector<32x128xf32>,
      %c0_157 = arith.constant 0 : index
      %c1536_158 = arith.constant 1536 : index
      %302 = vector.load %arg7[%c0_157, %c1536_158] : memref<32x2048xf32, #tpu.memory_space<vmem>>, vector<32x128xf32>
      %303 = vector.broadcast %202 : vector<1x128xf32> to vector<32x128xf32>
      %304 = arith.mulf %302, %303 : vector<32x128xf32>
      %305 = vector.broadcast %205 : vector<1x128xf32> to vector<32x128xf32>
      %306 = arith.addf %304, %305 : vector<32x128xf32>
      %cst_159 = arith.constant 0.000000e+00 : f32
      %307 = vector.broadcast %cst_159 : f32 to vector<32x128xf32>
      %308 = arith.maximumf %306, %307 : vector<32x128xf32>
      %c0_160 = arith.constant 0 : index
      %c1536_161 = arith.constant 1536 : index
      %309 = vector.load %arg6[%c0_160, %c1536_161] : memref<32x2048xf32, #tpu.memory_space<vmem>>, vector<32x128xf32>
      tpu.vector_store %arg6[%c0_160, %c1536_161], %308 {strides = array<i32>} : memref<32x2048xf32, #tpu.memory_space<vmem>>, vector<32x128xf32>,
      %c0_162 = arith.constant 0 : index
      %c1664_163 = arith.constant 1664 : index
      %310 = vector.load %arg7[%c0_162, %c1664_163] : memref<32x2048xf32, #tpu.memory_space<vmem>>, vector<32x128xf32>
      %311 = vector.broadcast %202 : vector<1x128xf32> to vector<32x128xf32>
      %312 = arith.mulf %310, %311 : vector<32x128xf32>
      %313 = vector.broadcast %205 : vector<1x128xf32> to vector<32x128xf32>
      %314 = arith.addf %312, %313 : vector<32x128xf32>
      %cst_164 = arith.constant 0.000000e+00 : f32
      %315 = vector.broadcast %cst_164 : f32 to vector<32x128xf32>
      %316 = arith.maximumf %314, %315 : vector<32x128xf32>
      %c0_165 = arith.constant 0 : index
      %c1664_166 = arith.constant 1664 : index
      %317 = vector.load %arg6[%c0_165, %c1664_166] : memref<32x2048xf32, #tpu.memory_space<vmem>>, vector<32x128xf32>
      tpu.vector_store %arg6[%c0_165, %c1664_166], %316 {strides = array<i32>} : memref<32x2048xf32, #tpu.memory_space<vmem>>, vector<32x128xf32>,
      %c0_167 = arith.constant 0 : index
      %c1792_168 = arith.constant 1792 : index
      %318 = vector.load %arg7[%c0_167, %c1792_168] : memref<32x2048xf32, #tpu.memory_space<vmem>>, vector<32x128xf32>
      %319 = vector.broadcast %202 : vector<1x128xf32> to vector<32x128xf32>
      %320 = arith.mulf %318, %319 : vector<32x128xf32>
      %321 = vector.broadcast %205 : vector<1x128xf32> to vector<32x128xf32>
      %322 = arith.addf %320, %321 : vector<32x128xf32>
      %cst_169 = arith.constant 0.000000e+00 : f32
      %323 = vector.broadcast %cst_169 : f32 to vector<32x128xf32>
      %324 = arith.maximumf %322, %323 : vector<32x128xf32>
      %c0_170 = arith.constant 0 : index
      %c1792_171 = arith.constant 1792 : index
      %325 = vector.load %arg6[%c0_170, %c1792_171] : memref<32x2048xf32, #tpu.memory_space<vmem>>, vector<32x128xf32>
      tpu.vector_store %arg6[%c0_170, %c1792_171], %324 {strides = array<i32>} : memref<32x2048xf32, #tpu.memory_space<vmem>>, vector<32x128xf32>,
      %c0_172 = arith.constant 0 : index
      %c1920_173 = arith.constant 1920 : index
      %326 = vector.load %arg7[%c0_172, %c1920_173] : memref<32x2048xf32, #tpu.memory_space<vmem>>, vector<32x128xf32>
      %327 = vector.broadcast %202 : vector<1x128xf32> to vector<32x128xf32>
      %328 = arith.mulf %326, %327 : vector<32x128xf32>
      %329 = vector.broadcast %205 : vector<1x128xf32> to vector<32x128xf32>
      %330 = arith.addf %328, %329 : vector<32x128xf32>
      %cst_174 = arith.constant 0.000000e+00 : f32
      %331 = vector.broadcast %cst_174 : f32 to vector<32x128xf32>
      %332 = arith.maximumf %330, %331 : vector<32x128xf32>
      %c0_175 = arith.constant 0 : index
      %c1920_176 = arith.constant 1920 : index
      %333 = vector.load %arg6[%c0_175, %c1920_176] : memref<32x2048xf32, #tpu.memory_space<vmem>>, vector<32x128xf32>
      tpu.vector_store %arg6[%c0_175, %c1920_176], %332 {strides = array<i32>} : memref<32x2048xf32, #tpu.memory_space<vmem>>, vector<32x128xf32>,
    } else {
    }
    return
  }
  func.func @transform_0(%arg0: i32, %arg1: i32) -> (i32, i32) {
    %c0_i32 = arith.constant 0 : i32
    %c0_i32_0 = arith.constant 0 : i32
    return %arg1, %c0_i32 : i32, i32
  }
  func.func @transform_1(%arg0: i32, %arg1: i32) -> (i32, i32) {
    %c0_i32 = arith.constant 0 : i32
    %c0_i32_0 = arith.constant 0 : i32
    return %c0_i32, %arg0 : i32, i32
  }
  func.func @transform_2(%arg0: i32, %arg1: i32) -> (i32, i32) {
    %c0_i32 = arith.constant 0 : i32
    %c0_i32_0 = arith.constant 0 : i32
    return %c0_i32, %arg0 : i32, i32
  }
  func.func @transform_3(%arg0: i32, %arg1: i32) -> (i32, i32) {
    %c0_i32 = arith.constant 0 : i32
    %c0_i32_0 = arith.constant 0 : i32
    return %c0_i32, %arg0 : i32, i32
  }
  func.func @transform_4(%arg0: i32, %arg1: i32) -> (i32, i32) {
    %c0_i32 = arith.constant 0 : i32
    %c0_i32_0 = arith.constant 0 : i32
    return %c0_i32, %arg0 : i32, i32
  }
}

</mosaic_0001>

<llo_original>
// kernel: tpu_custom_call.1
$region0: #{tpu_custom_call.1}
  #allocation0 [shape = 'u32[]', space=smem, size = 0x4, offset = 0x4, fixed_abs, tag = 'smem constant byte address 0x4 - core index']
  #allocation1 [shape = 'u32[72,128]{1,0:T(1,128)}', space=vmem, size = 0x9000, scoped, tag = 'internal scratch']
  #allocation2 [shape = 'f32[32,2048]{1,0:T(8,128)}', space=vmem, size = 0x40000, scoped, tag = 'scratch operand']
  %s0 = inlined_call_operand.hbm [shape: bf16[32,256], index: 0, kind: input, shape index: {}]
  %s1 = inlined_call_operand.hbm [shape: bf16[256,4096], index: 1, kind: input, shape index: {}]
  %s2 = inlined_call_operand.hbm [shape: f32[1,256], index: 2, kind: input, shape index: {}]
  %s3 = inlined_call_operand.hbm [shape: f32[1,256], index: 3, kind: input, shape index: {}]
  %s4 = inlined_call_operand.hbm [shape: f32[32,4096], index: 4, kind: output, shape index: {}]
  %s5 = sld [smem:[#allocation0]]
  $region69: #{tpu_custom_call.1} parent=0
    _
  %s7 = ssub.s32 1, %s5
  %s8 = scalar_select 0, %s7, %s5
  $region1: #{tpu_custom_call.1} parent=0
    #allocation3 [shape = 'u8[16384]{0}', space=vmem, size = 0x4000, scoped, tag = 'input window, operand 0, single buffered']
    #allocation4 [shape = 's32[2]{0}', space=sflag, size = 0x8, scoped, tag = 'scoped memory for tpu_custom_call.1']
    #allocation5 [shape = 's32[2]{0}', space=sflag, size = 0x8, scoped, tag = 'scoped memory for tpu_custom_call.1']
    #allocation6 [shape = 'u8[2097152]{0}', space=vmem, size = 0x200000, scoped, tag = 'input window, operand 1']
    #allocation7 [shape = 's32[2]{0}', space=sflag, size = 0x8, scoped, tag = 'scoped memory for tpu_custom_call.1']
    #allocation8 [shape = 'u8[1024]{0}', space=vmem, size = 0x400, scoped, tag = 'input window, operand 2']
    #allocation9 [shape = 'u8[1024]{0}', space=vmem, size = 0x400, scoped, tag = 'input window, operand 3']
    #allocation10 [shape = 's32[2]{0}', space=sflag, size = 0x8, scoped, tag = 'scoped memory for tpu_custom_call.1']
    #allocation11 [shape = 'u8[524288]{0}', space=vmem, size = 0x80000, scoped, tag = 'output window, operand 0']
    %9 = vsyncpa [#allocation4], 0
    %10 = vsyncpa [#allocation7], 0
    %s11 = scalar_lea.sflag [#allocation7], 1
    %12 = vsyncpa %s11, 0
    %13 = vsyncpa [#allocation10], 0
    %s14 = scalar_lea.sflag [#allocation10], 1
    %15 = vsyncpa %s14, 0
    %16 = vsyncpa [#allocation5], 0
    %s17 = scalar_lea.sflag [#allocation5], 1
    %18 = vsyncpa %s17, 0
    loop: start=0, step=1, limit=4
    $region2: #{tpu_custom_call.1} parent=1 // loop_pre_header
      _
    $region3: #{tpu_custom_call.1} parent=1 // loop_header
      %s20 = sphi 0, %s24
      %p21 = scmp.ge.s32.totalorder %s20, 4
      %s27 = sphi 0, %s39
      %s28 = sphi 0, %s35
      %s29 = sphi 0, %s27
      %s30 = sphi 0, %s28
      %s31 = sphi 0, %s29
      %s32 = sphi 0, %s30
      %s42 = sphi 0, %s44
      %s45 = sphi 0, %s42
      %s46 = sphi 0, %s45
      %s62 = sphi 0, %s46
      %s68 = sphi 0, %s70
      %s71 = sphi 0, %s68
      %s72 = sphi 0, %s71
      %s88 = sphi 0, %s72
      %s94 = sphi 0, %s96
      %s97 = sphi 0, %s94
      %s98 = sphi 0, %s97
      %s114 = sphi 0, %s98
      %s120 = sphi 0, %s122
      %s123 = sphi 0, %s120
      %s124 = sphi 0, %s123
      %s140 = sphi 0, %s124
      %s146 = sphi 0, %s148
      %s149 = sphi 0, %s146
      %s150 = sphi 0, %s149
      %s166 = sphi 0, %s150
    $region4: #{tpu_custom_call.1} parent=1 // loop_header_branch
      %23 = sbr.rel (%p21) target = $region8
    $region5: #{tpu_custom_call.1} parent=1 // loop_body
      %s25 = ssub.s32 %s20, 1
      %s26 = ssub.s32 %s20, 2
      %s33 = sadd.s32 1, %s28
      %p34 = scmp.ge.s32.totalorder %s33, 1
      %s35 = scalar_select %p34, 0, %s33
      %s36 = sadd.s32 1, %s27
      %s37 = scalar_select %p34, %s36, %s27
      %p38 = scmp.ge.s32.totalorder %s37, 2
      %s39 = scalar_select %p38, 0, %s37
      %s40 = ssub.s32 %s28, %s35
      %p41 = scmp.eq.s32.totalorder %s40, 0
      %s43 = sadd.s32 %s42, 1
      %s44 = scalar_select %p41, %s42, %s43
      %p47 = pneg %p41
      %p48 = scmp.eq.s32.totalorder %s20, 1
      %p49 = por %p47, %p48
      %p50 = scmp.ne.s32.totalorder %s42, %s45
      %p51 = scmp.eq.s32.totalorder %s20, 0
      %p52 = por %p50, %p51
      %p53 = scmp.ne.s32.totalorder %s42, %s45
      %p54 = scmp.eq.s32.totalorder %s25, 1
      %p55 = por %p53, %p54
      %p56 = scmp.ne.s32.totalorder %s45, %s46
      %p57 = scmp.eq.s32.totalorder %s25, 0
      %p58 = por %p56, %p57
      %p59 = scmp.ne.s32.totalorder %s45, %s46
      %p60 = scmp.eq.s32.totalorder %s26, 1
      %p61 = por %p59, %p60
      %p63 = scmp.ne.s32.totalorder %s46, %s62
      %p64 = scmp.eq.s32.totalorder %s26, 0
      %p65 = por %p63, %p64
      %s66 = ssub.s32 %s27, %s39
      %p67 = scmp.eq.s32.totalorder %s66, 0
      %s69 = sadd.s32 %s68, 1
      %s70 = scalar_select %p67, %s68, %s69
      %p73 = pneg %p67
      %p74 = scmp.eq.s32.totalorder %s20, 1
      %p75 = por %p73, %p74
      %p76 = scmp.ne.s32.totalorder %s68, %s71
      %p77 = scmp.eq.s32.totalorder %s20, 0
      %p78 = por %p76, %p77
      %p79 = scmp.ne.s32.totalorder %s68, %s71
      %p80 = scmp.eq.s32.totalorder %s25, 1
      %p81 = por %p79, %p80
      %p82 = scmp.ne.s32.totalorder %s71, %s72
      %p83 = scmp.eq.s32.totalorder %s25, 0
      %p84 = por %p82, %p83
      %p85 = scmp.ne.s32.totalorder %s71, %s72
      %p86 = scmp.eq.s32.totalorder %s26, 1
      %p87 = por %p85, %p86
      %p89 = scmp.ne.s32.totalorder %s72, %s88
      %p90 = scmp.eq.s32.totalorder %s26, 0
      %p91 = por %p89, %p90
      %s92 = ssub.s32 %s27, %s39
      %p93 = scmp.eq.s32.totalorder %s92, 0
      %s95 = sadd.s32 %s94, 1
      %s96 = scalar_select %p93, %s94, %s95
      %p99 = pneg %p93
      %p100 = scmp.eq.s32.totalorder %s20, 1
      %p101 = por %p99, %p100
      %p102 = scmp.ne.s32.totalorder %s94, %s97
      %p103 = scmp.eq.s32.totalorder %s20, 0
      %p104 = por %p102, %p103
      %p105 = scmp.ne.s32.totalorder %s94, %s97
      %p106 = scmp.eq.s32.totalorder %s25, 1
      %p107 = por %p105, %p106
      %p108 = scmp.ne.s32.totalorder %s97, %s98
      %p109 = scmp.eq.s32.totalorder %s25, 0
      %p110 = por %p108, %p109
      %p111 = scmp.ne.s32.totalorder %s97, %s98
      %p112 = scmp.eq.s32.totalorder %s26, 1
      %p113 = por %p111, %p112
      %p115 = scmp.ne.s32.totalorder %s98, %s114
      %p116 = scmp.eq.s32.totalorder %s26, 0
      %p117 = por %p115, %p116
      %s118 = ssub.s32 %s27, %s39
      %p119 = scmp.eq.s32.totalorder %s118, 0
      %s121 = sadd.s32 %s120, 1
      %s122 = scalar_select %p119, %s120, %s121
      %p125 = pneg %p119
      %p126 = scmp.eq.s32.totalorder %s20, 1
      %p127 = por %p125, %p126
      %p128 = scmp.ne.s32.totalorder %s120, %s123
      %p129 = scmp.eq.s32.totalorder %s20, 0
      %p130 = por %p128, %p129
      %p131 = scmp.ne.s32.totalorder %s120, %s123
      %p132 = scmp.eq.s32.totalorder %s25, 1
      %p133 = por %p131, %p132
      %p134 = scmp.ne.s32.totalorder %s123, %s124
      %p135 = scmp.eq.s32.totalorder %s25, 0
      %p136 = por %p134, %p135
      %p137 = scmp.ne.s32.totalorder %s123, %s124
      %p138 = scmp.eq.s32.totalorder %s26, 1
      %p139 = por %p137, %p138
      %p141 = scmp.ne.s32.totalorder %s124, %s140
      %p142 = scmp.eq.s32.totalorder %s26, 0
      %p143 = por %p141, %p142
      %s144 = ssub.s32 %s27, %s39
      %p145 = scmp.eq.s32.totalorder %s144, 0
      %s147 = sadd.s32 %s146, 1
      %s148 = scalar_select %p145, %s146, %s147
      %p151 = pneg %p145
      %p152 = scmp.eq.s32.totalorder %s20, 1
      %p153 = por %p151, %p152
      %p154 = scmp.ne.s32.totalorder %s146, %s149
      %p155 = scmp.eq.s32.totalorder %s20, 0
      %p156 = por %p154, %p155
      %p157 = scmp.ne.s32.totalorder %s146, %s149
      %p158 = scmp.eq.s32.totalorder %s25, 1
      %p159 = por %p157, %p158
      %p160 = scmp.ne.s32.totalorder %s149, %s150
      %p161 = scmp.eq.s32.totalorder %s25, 0
      %p162 = por %p160, %p161
      %p163 = scmp.ne.s32.totalorder %s149, %s150
      %p164 = scmp.eq.s32.totalorder %s26, 1
      %p165 = por %p163, %p164
      %p167 = scmp.ne.s32.totalorder %s150, %s166
      %p168 = scmp.eq.s32.totalorder %s26, 0
      %p169 = por %p167, %p168
      %p170 = scmp.le.s32.totalorder 1, %s20
      %p171 = scmp.lt.s32.totalorder %s20, 3
      %p172 = pnand %p170, %p171
      %p173 = pneg %p172
      // Predicated region
      $region9: #{tpu_custom_call.1} parent=5 // pred_check
        _
      $region10: #{tpu_custom_call.1} parent=5 // pred_check_branch
        %175 = sbr.rel (%p172) target = $region12
      $region11: #{tpu_custom_call.1} parent=5 // pred_region
        %s176 = ssub.s32 %s20, 1
        // Predicated region
        $region13: #{tpu_custom_call.1} parent=11 // pred_check
          %p177 = pneg %p58
        $region14: #{tpu_custom_call.1} parent=11 // pred_check_branch
          %179 = sbr.rel (%p177) target = $region16
        $region15: #{tpu_custom_call.1} parent=11 // pred_region
          %s180 = smul.u32 4, %s30
          %182 = vsyncadd [#allocation4], 0
          %s183 = smul.addr %s180, 2
          %s184 = smul.addr %s183, 4
          %s185 = scalar_lea.hbm %s0, %s184
          %s186 = sshll.u32 %s185, 4
          %s187 = int_to_ptr.hbm [resolvable:$true] %s186
          %s188 = sshll.u32 [#allocation3], 4
          %s189 = int_to_ptr.vmem [resolvable:$true] %s188
          %194 = dma.hbm_to_vmem [thread:$0]  %s187, 512, %s189, [#allocation4], 128, 128, 8
        $region16: #{tpu_custom_call.1} parent=11 // pred_fallthru
          _
      $region12: #{tpu_custom_call.1} parent=5 // pred_fallthru
        _
      %p195 = scmp.lt.s32.totalorder %s20, 2
      // Predicated region
      $region17: #{tpu_custom_call.1} parent=5 // pred_check
        %p196 = pneg %p195
      $region18: #{tpu_custom_call.1} parent=5 // pred_check_branch
        %198 = sbr.rel (%p196) target = $region20
      $region19: #{tpu_custom_call.1} parent=5 // pred_region
        // Predicated region
        $region21: #{tpu_custom_call.1} parent=19 // pred_check
          %p199 = pneg %p78
        $region22: #{tpu_custom_call.1} parent=19 // pred_check_branch
          %201 = sbr.rel (%p199) target = $region24
        $region23: #{tpu_custom_call.1} parent=19 // pred_region
          %s202 = sand.u32 %s20, 1
          %s203 = scalar_lea.sflag [#allocation7], %s202
          %s204 = sand.u32 %s68, 1
          %s205 = smul.addr %s204, 2048
          %s206 = scalar_lea.vmem [#allocation6], %s205
          %s207 = smul.u32 16, %s27
          %209 = vsyncadd %s203, 0
          %s210 = smul.addr %s207, 4
          %s211 = scalar_lea.hbm %s1, %s210
          %s212 = sshll.u32 %s211, 4
          %s213 = int_to_ptr.hbm [resolvable:$true] %s212
          %s214 = sshll.u32 %s206, 4
          %s215 = int_to_ptr.vmem [resolvable:$true] %s214
          %220 = dma.hbm_to_vmem [thread:$0]  %s213, 32768, %s215, %s203, 2048, 1024, 64
        $region24: #{tpu_custom_call.1} parent=19 // pred_fallthru
          _
        // Predicated region
        $region25: #{tpu_custom_call.1} parent=19 // pred_check
          %p221 = pneg %p104
        $region26: #{tpu_custom_call.1} parent=19 // pred_check_branch
          %223 = sbr.rel (%p221) target = $region28
        $region27: #{tpu_custom_call.1} parent=19 // pred_region
          %s224 = sand.u32 %s20, 1
          %s225 = scalar_lea.sflag [#allocation7], %s224
          %s226 = sand.u32 %s94, 1
          %s227 = scalar_lea.vmem [#allocation8], %s226
          %229 = vsyncadd %s225, 0
          %s230 = scalar_lea.hbm %s2, %s27
          %s232 = sshll.u32 %s230, 4
          %s233 = int_to_ptr.hbm [resolvable:$true] %s232
          %s234 = sshll.u32 %s227, 4
          %s235 = int_to_ptr.vmem [resolvable:$true] %s234
          %237 = dma.hbm_to_vmem [thread:$0]  %s233, 16, %s235, %s225
        $region28: #{tpu_custom_call.1} parent=19 // pred_fallthru
          _
        // Predicated region
        $region29: #{tpu_custom_call.1} parent=19 // pred_check
          %p238 = pneg %p130
        $region30: #{tpu_custom_call.1} parent=19 // pred_check_branch
          %240 = sbr.rel (%p238) target = $region32
        $region31: #{tpu_custom_call.1} parent=19 // pred_region
          %s241 = sand.u32 %s120, 1
          %s242 = scalar_lea.sflag [#allocation10], %s241
          %s243 = sand.u32 %s120, 1
          %s244 = scalar_lea.vmem [#allocation9], %s243
          %246 = vsyncadd %s242, 0
          %s247 = scalar_lea.hbm %s3, %s27
          %s249 = sshll.u32 %s247, 4
          %s250 = int_to_ptr.hbm [resolvable:$true] %s249
          %s251 = sshll.u32 %s244, 4
          %s252 = int_to_ptr.vmem [resolvable:$true] %s251
          %254 = dma.hbm_to_vmem [thread:$0]  %s250, 16, %s252, %s242
        $region32: #{tpu_custom_call.1} parent=19 // pred_fallthru
          _
      $region20: #{tpu_custom_call.1} parent=5 // pred_fallthru
        _
      %p255 = scmp.le.s32.totalorder 1, %s20
      %p256 = scmp.lt.s32.totalorder %s20, 3
      %p257 = pnand %p255, %p256
      %p258 = pneg %p257
      // Predicated region
      $region33: #{tpu_custom_call.1} parent=5 // pred_check
        _
      $region34: #{tpu_custom_call.1} parent=5 // pred_check_branch
        %260 = sbr.rel (%p257) target = $region36
      $region35: #{tpu_custom_call.1} parent=5 // pred_region
        %s261 = ssub.s32 %s20, 1
        // Predicated region
        $region37: #{tpu_custom_call.1} parent=35 // pred_check
          %p262 = pneg %p58
        $region38: #{tpu_custom_call.1} parent=35 // pred_check_branch
          %264 = sbr.rel (%p262) target = $region40
        $region39: #{tpu_custom_call.1} parent=35 // pred_region
          %266 = dma.done [#allocation4], 512
        $region40: #{tpu_custom_call.1} parent=35 // pred_fallthru
          _
        %s267 = sand.u32 %s25, 1
        %s268 = scalar_lea.sflag [#allocation7], %s267
        %s269 = sand.u32 %s71, 1
        %s270 = smul.addr %s269, 2048
        %s271 = scalar_lea.vmem [#allocation6], %s270
        // Predicated region
        $region41: #{tpu_custom_call.1} parent=35 // pred_check
          %p272 = pneg %p84
        $region42: #{tpu_custom_call.1} parent=35 // pred_check_branch
          %274 = sbr.rel (%p272) target = $region44
        $region43: #{tpu_custom_call.1} parent=35 // pred_region
          %276 = dma.done %s268, 32768
        $region44: #{tpu_custom_call.1} parent=35 // pred_fallthru
          _
        %s277 = sand.u32 %s25, 1
        %s278 = scalar_lea.sflag [#allocation7], %s277
        %s279 = sand.u32 %s97, 1
        %s280 = scalar_lea.vmem [#allocation8], %s279
        // Predicated region
        $region45: #{tpu_custom_call.1} parent=35 // pred_check
          %p281 = pneg %p110
        $region46: #{tpu_custom_call.1} parent=35 // pred_check_branch
          %283 = sbr.rel (%p281) target = $region48
        $region47: #{tpu_custom_call.1} parent=35 // pred_region
          %285 = dma.done %s278, 16
        $region48: #{tpu_custom_call.1} parent=35 // pred_fallthru
          _
        %s286 = sand.u32 %s123, 1
        %s287 = scalar_lea.sflag [#allocation10], %s286
        %s288 = sand.u32 %s123, 1
        %s289 = scalar_lea.vmem [#allocation9], %s288
        // Predicated region
        $region49: #{tpu_custom_call.1} parent=35 // pred_check
          %p290 = pneg %p136
        $region50: #{tpu_custom_call.1} parent=35 // pred_check_branch
          %292 = sbr.rel (%p290) target = $region52
        $region51: #{tpu_custom_call.1} parent=35 // pred_region
          %294 = dma.done %s287, 16
        $region52: #{tpu_custom_call.1} parent=35 // pred_fallthru
          _
        %p295 = pneg %p58
        %p296 = pneg %p55
        %s297 = sand.u32 %s25, 1
        %s298 = scalar_lea.sflag [#allocation7], %s297
        %s299 = sand.u32 %s71, 1
        %s300 = smul.addr %s299, 2048
        %s301 = scalar_lea.vmem [#allocation6], %s300
        %p302 = pneg %p84
        %p303 = pneg %p81
        %s304 = sand.u32 %s25, 1
        %s305 = scalar_lea.sflag [#allocation7], %s304
        %s306 = sand.u32 %s97, 1
        %s307 = scalar_lea.vmem [#allocation8], %s306
        %p308 = pneg %p110
        %p309 = pneg %p107
        %s310 = sand.u32 %s123, 1
        %s311 = scalar_lea.sflag [#allocation10], %s310
        %s312 = sand.u32 %s123, 1
        %s313 = scalar_lea.vmem [#allocation9], %s312
        %p314 = pneg %p136
        %p315 = pneg %p133
        %p316 = pneg %p162
        %p317 = pneg %p159
        %s318 = sand.u32 %s149, 1
        %s319 = scalar_lea.sflag [#allocation5], %s318
        %s320 = sand.u32 %s149, 1
        %s321 = smul.addr %s320, 512
        %s322 = scalar_lea.vmem [#allocation11], %s321
        %s323 = smul.u32 4, %s30
        %s324 = smul.u32 16, %s29
        %s325 = smul.u32 16, %s29
        %s326 = smul.u32 %s30, 32
        %v327 = vld [vmem:[#allocation3] sm:$0xff]
        %v328 = vld [vmem:[#allocation3 + $0x8] sm:$0xff]
        %v329 = vld [vmem:[#allocation3 + $0x10] sm:$0xff]
        %v330 = vld [vmem:[#allocation3 + $0x18] sm:$0xff]
        %v331 = vld [vmem:[%s271] sm:$0xff]
        %v332 = vld [vmem:[%s271 + $0x8] sm:$0xff]
        %v333 = vld [vmem:[%s271 + $0x10] sm:$0xff]
        %v334 = vld [vmem:[%s271 + $0x18] sm:$0xff]
        %v335 = vld [vmem:[%s271 + $0x20] sm:$0xff]
        %v336 = vld [vmem:[%s271 + $0x28] sm:$0xff]
        %v337 = vld [vmem:[%s271 + $0x30] sm:$0xff]
        %v338 = vld [vmem:[%s271 + $0x38] sm:$0xff]
        %v339 = vld [vmem:[%s271 + $0x40] sm:$0xff]
        %v340 = vld [vmem:[%s271 + $0x48] sm:$0xff]
        %v341 = vld [vmem:[%s271 + $0x50] sm:$0xff]
        %v342 = vld [vmem:[%s271 + $0x58] sm:$0xff]
        %v343 = vld [vmem:[%s271 + $0x60] sm:$0xff]
        %v344 = vld [vmem:[%s271 + $0x68] sm:$0xff]
        %v345 = vld [vmem:[%s271 + $0x70] sm:$0xff]
        %v346 = vld [vmem:[%s271 + $0x78] sm:$0xff]
        %v347 = vld [vmem:[%s271 + $0x80] sm:$0xff]
        %v348 = vld [vmem:[%s271 + $0x88] sm:$0xff]
        %v349 = vld [vmem:[%s271 + $0x90] sm:$0xff]
        %v350 = vld [vmem:[%s271 + $0x98] sm:$0xff]
        %v351 = vld [vmem:[%s271 + $0xa0] sm:$0xff]
        %v352 = vld [vmem:[%s271 + $0xa8] sm:$0xff]
        %v353 = vld [vmem:[%s271 + $0xb0] sm:$0xff]
        %v354 = vld [vmem:[%s271 + $0xb8] sm:$0xff]
        %v355 = vld [vmem:[%s271 + $0xc0] sm:$0xff]
        %v356 = vld [vmem:[%s271 + $0xc8] sm:$0xff]
        %v357 = vld [vmem:[%s271 + $0xd0] sm:$0xff]
        %v358 = vld [vmem:[%s271 + $0xd8] sm:$0xff]
        %v359 = vld [vmem:[%s271 + $0xe0] sm:$0xff]
        %v360 = vld [vmem:[%s271 + $0xe8] sm:$0xff]
        %v361 = vld [vmem:[%s271 + $0xf0] sm:$0xff]
        %v362 = vld [vmem:[%s271 + $0xf8] sm:$0xff]
        %v363 = vld [vmem:[%s271 + $0x100] sm:$0xff]
        %v364 = vld [vmem:[%s271 + $0x108] sm:$0xff]
        %v365 = vld [vmem:[%s271 + $0x110] sm:$0xff]
        %v366 = vld [vmem:[%s271 + $0x118] sm:$0xff]
        %v367 = vld [vmem:[%s271 + $0x120] sm:$0xff]
        %v368 = vld [vmem:[%s271 + $0x128] sm:$0xff]
        %v369 = vld [vmem:[%s271 + $0x130] sm:$0xff]
        %v370 = vld [vmem:[%s271 + $0x138] sm:$0xff]
        %v371 = vld [vmem:[%s271 + $0x140] sm:$0xff]
        %v372 = vld [vmem:[%s271 + $0x148] sm:$0xff]
        %v373 = vld [vmem:[%s271 + $0x150] sm:$0xff]
        %v374 = vld [vmem:[%s271 + $0x158] sm:$0xff]
        %v375 = vld [vmem:[%s271 + $0x160] sm:$0xff]
        %v376 = vld [vmem:[%s271 + $0x168] sm:$0xff]
        %v377 = vld [vmem:[%s271 + $0x170] sm:$0xff]
        %v378 = vld [vmem:[%s271 + $0x178] sm:$0xff]
        %v379 = vld [vmem:[%s271 + $0x180] sm:$0xff]
        %v380 = vld [vmem:[%s271 + $0x188] sm:$0xff]
        %v381 = vld [vmem:[%s271 + $0x190] sm:$0xff]
        %v382 = vld [vmem:[%s271 + $0x198] sm:$0xff]
        %v383 = vld [vmem:[%s271 + $0x1a0] sm:$0xff]
        %v384 = vld [vmem:[%s271 + $0x1a8] sm:$0xff]
        %v385 = vld [vmem:[%s271 + $0x1b0] sm:$0xff]
        %v386 = vld [vmem:[%s271 + $0x1b8] sm:$0xff]
        %v387 = vld [vmem:[%s271 + $0x1c0] sm:$0xff]
        %v388 = vld [vmem:[%s271 + $0x1c8] sm:$0xff]
        %v389 = vld [vmem:[%s271 + $0x1d0] sm:$0xff]
        %v390 = vld [vmem:[%s271 + $0x1d8] sm:$0xff]
        %v391 = vld [vmem:[%s271 + $0x1e0] sm:$0xff]
        %v392 = vld [vmem:[%s271 + $0x1e8] sm:$0xff]
        %v393 = vld [vmem:[%s271 + $0x1f0] sm:$0xff]
        %v394 = vld [vmem:[%s271 + $0x1f8] sm:$0xff]
        %v395 = vld [vmem:[%s271 + $0x200] sm:$0xff]
        %v396 = vld [vmem:[%s271 + $0x208] sm:$0xff]
        %v397 = vld [vmem:[%s271 + $0x210] sm:$0xff]
        %v398 = vld [vmem:[%s271 + $0x218] sm:$0xff]
        %v399 = vld [vmem:[%s271 + $0x220] sm:$0xff]
        %v400 = vld [vmem:[%s271 + $0x228] sm:$0xff]
        %v401 = vld [vmem:[%s271 + $0x230] sm:$0xff]
        %v402 = vld [vmem:[%s271 + $0x238] sm:$0xff]
        %v403 = vld [vmem:[%s271 + $0x240] sm:$0xff]
        %v404 = vld [vmem:[%s271 + $0x248] sm:$0xff]
        %v405 = vld [vmem:[%s271 + $0x250] sm:$0xff]
        %v406 = vld [vmem:[%s271 + $0x258] sm:$0xff]
        %v407 = vld [vmem:[%s271 + $0x260] sm:$0xff]
        %v408 = vld [vmem:[%s271 + $0x268] sm:$0xff]
        %v409 = vld [vmem:[%s271 + $0x270] sm:$0xff]
        %v410 = vld [vmem:[%s271 + $0x278] sm:$0xff]
        %v411 = vld [vmem:[%s271 + $0x280] sm:$0xff]
        %v412 = vld [vmem:[%s271 + $0x288] sm:$0xff]
        %v413 = vld [vmem:[%s271 + $0x290] sm:$0xff]
        %v414 = vld [vmem:[%s271 + $0x298] sm:$0xff]
        %v415 = vld [vmem:[%s271 + $0x2a0] sm:$0xff]
        %v416 = vld [vmem:[%s271 + $0x2a8] sm:$0xff]
        %v417 = vld [vmem:[%s271 + $0x2b0] sm:$0xff]
        %v418 = vld [vmem:[%s271 + $0x2b8] sm:$0xff]
        %v419 = vld [vmem:[%s271 + $0x2c0] sm:$0xff]
        %v420 = vld [vmem:[%s271 + $0x2c8] sm:$0xff]
        %v421 = vld [vmem:[%s271 + $0x2d0] sm:$0xff]
        %v422 = vld [vmem:[%s271 + $0x2d8] sm:$0xff]
        %v423 = vld [vmem:[%s271 + $0x2e0] sm:$0xff]
        %v424 = vld [vmem:[%s271 + $0x2e8] sm:$0xff]
        %v425 = vld [vmem:[%s271 + $0x2f0] sm:$0xff]
        %v426 = vld [vmem:[%s271 + $0x2f8] sm:$0xff]
        %v427 = vld [vmem:[%s271 + $0x300] sm:$0xff]
        %v428 = vld [vmem:[%s271 + $0x308] sm:$0xff]
        %v429 = vld [vmem:[%s271 + $0x310] sm:$0xff]
        %v430 = vld [vmem:[%s271 + $0x318] sm:$0xff]
        %v431 = vld [vmem:[%s271 + $0x320] sm:$0xff]
        %v432 = vld [vmem:[%s271 + $0x328] sm:$0xff]
        %v433 = vld [vmem:[%s271 + $0x330] sm:$0xff]
        %v434 = vld [vmem:[%s271 + $0x338] sm:$0xff]
        %v435 = vld [vmem:[%s271 + $0x340] sm:$0xff]
        %v436 = vld [vmem:[%s271 + $0x348] sm:$0xff]
        %v437 = vld [vmem:[%s271 + $0x350] sm:$0xff]
        %v438 = vld [vmem:[%s271 + $0x358] sm:$0xff]
        %v439 = vld [vmem:[%s271 + $0x360] sm:$0xff]
        %v440 = vld [vmem:[%s271 + $0x368] sm:$0xff]
        %v441 = vld [vmem:[%s271 + $0x370] sm:$0xff]
        %v442 = vld [vmem:[%s271 + $0x378] sm:$0xff]
        %v443 = vld [vmem:[%s271 + $0x380] sm:$0xff]
        %v444 = vld [vmem:[%s271 + $0x388] sm:$0xff]
        %v445 = vld [vmem:[%s271 + $0x390] sm:$0xff]
        %v446 = vld [vmem:[%s271 + $0x398] sm:$0xff]
        %v447 = vld [vmem:[%s271 + $0x3a0] sm:$0xff]
        %v448 = vld [vmem:[%s271 + $0x3a8] sm:$0xff]
        %v449 = vld [vmem:[%s271 + $0x3b0] sm:$0xff]
        %v450 = vld [vmem:[%s271 + $0x3b8] sm:$0xff]
        %v451 = vld [vmem:[%s271 + $0x3c0] sm:$0xff]
        %v452 = vld [vmem:[%s271 + $0x3c8] sm:$0xff]
        %v453 = vld [vmem:[%s271 + $0x3d0] sm:$0xff]
        %v454 = vld [vmem:[%s271 + $0x3d8] sm:$0xff]
        %v455 = vld [vmem:[%s271 + $0x3e0] sm:$0xff]
        %v456 = vld [vmem:[%s271 + $0x3e8] sm:$0xff]
        %v457 = vld [vmem:[%s271 + $0x3f0] sm:$0xff]
        %v458 = vld [vmem:[%s271 + $0x3f8] sm:$0xff]
        %v459 = vld [vmem:[%s271 + $0x400] sm:$0xff]
        %v460 = vld [vmem:[%s271 + $0x408] sm:$0xff]
        %v461 = vld [vmem:[%s271 + $0x410] sm:$0xff]
        %v462 = vld [vmem:[%s271 + $0x418] sm:$0xff]
        %v463 = vld [vmem:[%s271 + $0x420] sm:$0xff]
        %v464 = vld [vmem:[%s271 + $0x428] sm:$0xff]
        %v465 = vld [vmem:[%s271 + $0x430] sm:$0xff]
        %v466 = vld [vmem:[%s271 + $0x438] sm:$0xff]
        %v467 = vld [vmem:[%s271 + $0x440] sm:$0xff]
        %v468 = vld [vmem:[%s271 + $0x448] sm:$0xff]
        %v469 = vld [vmem:[%s271 + $0x450] sm:$0xff]
        %v470 = vld [vmem:[%s271 + $0x458] sm:$0xff]
        %v471 = vld [vmem:[%s271 + $0x460] sm:$0xff]
        %v472 = vld [vmem:[%s271 + $0x468] sm:$0xff]
        %v473 = vld [vmem:[%s271 + $0x470] sm:$0xff]
        %v474 = vld [vmem:[%s271 + $0x478] sm:$0xff]
        %v475 = vld [vmem:[%s271 + $0x480] sm:$0xff]
        %v476 = vld [vmem:[%s271 + $0x488] sm:$0xff]
        %v477 = vld [vmem:[%s271 + $0x490] sm:$0xff]
        %v478 = vld [vmem:[%s271 + $0x498] sm:$0xff]
        %v479 = vld [vmem:[%s271 + $0x4a0] sm:$0xff]
        %v480 = vld [vmem:[%s271 + $0x4a8] sm:$0xff]
        %v481 = vld [vmem:[%s271 + $0x4b0] sm:$0xff]
        %v482 = vld [vmem:[%s271 + $0x4b8] sm:$0xff]
        %v483 = vld [vmem:[%s271 + $0x4c0] sm:$0xff]
        %v484 = vld [vmem:[%s271 + $0x4c8] sm:$0xff]
        %v485 = vld [vmem:[%s271 + $0x4d0] sm:$0xff]
        %v486 = vld [vmem:[%s271 + $0x4d8] sm:$0xff]
        %v487 = vld [vmem:[%s271 + $0x4e0] sm:$0xff]
        %v488 = vld [vmem:[%s271 + $0x4e8] sm:$0xff]
        %v489 = vld [vmem:[%s271 + $0x4f0] sm:$0xff]
        %v490 = vld [vmem:[%s271 + $0x4f8] sm:$0xff]
        %v491 = vld [vmem:[%s271 + $0x500] sm:$0xff]
        %v492 = vld [vmem:[%s271 + $0x508] sm:$0xff]
        %v493 = vld [vmem:[%s271 + $0x510] sm:$0xff]
        %v494 = vld [vmem:[%s271 + $0x518] sm:$0xff]
        %v495 = vld [vmem:[%s271 + $0x520] sm:$0xff]
        %v496 = vld [vmem:[%s271 + $0x528] sm:$0xff]
        %v497 = vld [vmem:[%s271 + $0x530] sm:$0xff]
        %v498 = vld [vmem:[%s271 + $0x538] sm:$0xff]
        %v499 = vld [vmem:[%s271 + $0x540] sm:$0xff]
        %v500 = vld [vmem:[%s271 + $0x548] sm:$0xff]
        %v501 = vld [vmem:[%s271 + $0x550] sm:$0xff]
        %v502 = vld [vmem:[%s271 + $0x558] sm:$0xff]
        %v503 = vld [vmem:[%s271 + $0x560] sm:$0xff]
        %v504 = vld [vmem:[%s271 + $0x568] sm:$0xff]
        %v505 = vld [vmem:[%s271 + $0x570] sm:$0xff]
        %v506 = vld [vmem:[%s271 + $0x578] sm:$0xff]
        %v507 = vld [vmem:[%s271 + $0x580] sm:$0xff]
        %v508 = vld [vmem:[%s271 + $0x588] sm:$0xff]
        %v509 = vld [vmem:[%s271 + $0x590] sm:$0xff]
        %v510 = vld [vmem:[%s271 + $0x598] sm:$0xff]
        %v511 = vld [vmem:[%s271 + $0x5a0] sm:$0xff]
        %v512 = vld [vmem:[%s271 + $0x5a8] sm:$0xff]
        %v513 = vld [vmem:[%s271 + $0x5b0] sm:$0xff]
        %v514 = vld [vmem:[%s271 + $0x5b8] sm:$0xff]
        %v515 = vld [vmem:[%s271 + $0x5c0] sm:$0xff]
        %v516 = vld [vmem:[%s271 + $0x5c8] sm:$0xff]
        %v517 = vld [vmem:[%s271 + $0x5d0] sm:$0xff]
        %v518 = vld [vmem:[%s271 + $0x5d8] sm:$0xff]
        %v519 = vld [vmem:[%s271 + $0x5e0] sm:$0xff]
        %v520 = vld [vmem:[%s271 + $0x5e8] sm:$0xff]
        %v521 = vld [vmem:[%s271 + $0x5f0] sm:$0xff]
        %v522 = vld [vmem:[%s271 + $0x5f8] sm:$0xff]
        %v523 = vld [vmem:[%s271 + $0x600] sm:$0xff]
        %v524 = vld [vmem:[%s271 + $0x608] sm:$0xff]
        %v525 = vld [vmem:[%s271 + $0x610] sm:$0xff]
        %v526 = vld [vmem:[%s271 + $0x618] sm:$0xff]
        %v527 = vld [vmem:[%s271 + $0x620] sm:$0xff]
        %v528 = vld [vmem:[%s271 + $0x628] sm:$0xff]
        %v529 = vld [vmem:[%s271 + $0x630] sm:$0xff]
        %v530 = vld [vmem:[%s271 + $0x638] sm:$0xff]
        %v531 = vld [vmem:[%s271 + $0x640] sm:$0xff]
        %v532 = vld [vmem:[%s271 + $0x648] sm:$0xff]
        %v533 = vld [vmem:[%s271 + $0x650] sm:$0xff]
        %v534 = vld [vmem:[%s271 + $0x658] sm:$0xff]
        %v535 = vld [vmem:[%s271 + $0x660] sm:$0xff]
        %v536 = vld [vmem:[%s271 + $0x668] sm:$0xff]
        %v537 = vld [vmem:[%s271 + $0x670] sm:$0xff]
        %v538 = vld [vmem:[%s271 + $0x678] sm:$0xff]
        %v539 = vld [vmem:[%s271 + $0x680] sm:$0xff]
        %v540 = vld [vmem:[%s271 + $0x688] sm:$0xff]
        %v541 = vld [vmem:[%s271 + $0x690] sm:$0xff]
        %v542 = vld [vmem:[%s271 + $0x698] sm:$0xff]
        %v543 = vld [vmem:[%s271 + $0x6a0] sm:$0xff]
        %v544 = vld [vmem:[%s271 + $0x6a8] sm:$0xff]
        %v545 = vld [vmem:[%s271 + $0x6b0] sm:$0xff]
        %v546 = vld [vmem:[%s271 + $0x6b8] sm:$0xff]
        %v547 = vld [vmem:[%s271 + $0x6c0] sm:$0xff]
        %v548 = vld [vmem:[%s271 + $0x6c8] sm:$0xff]
        %v549 = vld [vmem:[%s271 + $0x6d0] sm:$0xff]
        %v550 = vld [vmem:[%s271 + $0x6d8] sm:$0xff]
        %v551 = vld [vmem:[%s271 + $0x6e0] sm:$0xff]
        %v552 = vld [vmem:[%s271 + $0x6e8] sm:$0xff]
        %v553 = vld [vmem:[%s271 + $0x6f0] sm:$0xff]
        %v554 = vld [vmem:[%s271 + $0x6f8] sm:$0xff]
        %v555 = vld [vmem:[%s271 + $0x700] sm:$0xff]
        %v556 = vld [vmem:[%s271 + $0x708] sm:$0xff]
        %v557 = vld [vmem:[%s271 + $0x710] sm:$0xff]
        %v558 = vld [vmem:[%s271 + $0x718] sm:$0xff]
        %v559 = vld [vmem:[%s271 + $0x720] sm:$0xff]
        %v560 = vld [vmem:[%s271 + $0x728] sm:$0xff]
        %v561 = vld [vmem:[%s271 + $0x730] sm:$0xff]
        %v562 = vld [vmem:[%s271 + $0x738] sm:$0xff]
        %v563 = vld [vmem:[%s271 + $0x740] sm:$0xff]
        %v564 = vld [vmem:[%s271 + $0x748] sm:$0xff]
        %v565 = vld [vmem:[%s271 + $0x750] sm:$0xff]
        %v566 = vld [vmem:[%s271 + $0x758] sm:$0xff]
        %v567 = vld [vmem:[%s271 + $0x760] sm:$0xff]
        %v568 = vld [vmem:[%s271 + $0x768] sm:$0xff]
        %v569 = vld [vmem:[%s271 + $0x770] sm:$0xff]
        %v570 = vld [vmem:[%s271 + $0x778] sm:$0xff]
        %v571 = vld [vmem:[%s271 + $0x780] sm:$0xff]
        %v572 = vld [vmem:[%s271 + $0x788] sm:$0xff]
        %v573 = vld [vmem:[%s271 + $0x790] sm:$0xff]
        %v574 = vld [vmem:[%s271 + $0x798] sm:$0xff]
        %v575 = vld [vmem:[%s271 + $0x7a0] sm:$0xff]
        %v576 = vld [vmem:[%s271 + $0x7a8] sm:$0xff]
        %v577 = vld [vmem:[%s271 + $0x7b0] sm:$0xff]
        %v578 = vld [vmem:[%s271 + $0x7b8] sm:$0xff]
        %v579 = vld [vmem:[%s271 + $0x7c0] sm:$0xff]
        %v580 = vld [vmem:[%s271 + $0x7c8] sm:$0xff]
        %v581 = vld [vmem:[%s271 + $0x7d0] sm:$0xff]
        %v582 = vld [vmem:[%s271 + $0x7d8] sm:$0xff]
        %v583 = vld [vmem:[%s271 + $0x7e0] sm:$0xff]
        %v584 = vld [vmem:[%s271 + $0x7e8] sm:$0xff]
        %v585 = vld [vmem:[%s271 + $0x7f0] sm:$0xff]
        %v586 = vld [vmem:[%s271 + $0x7f8] sm:$0xff]
        %v591 = vunpack.c.l.b16 %v327
        %v592 = vunpack.c.h.b16 %v327
        %v593 = vunpack.c.l.b16 %v328
        %v594 = vunpack.c.h.b16 %v328
        %v595 = vunpack.c.l.b16 %v329
        %v596 = vunpack.c.h.b16 %v329
        %v597 = vunpack.c.l.b16 %v330
        %v598 = vunpack.c.h.b16 %v330
        %v599 = vpack.c.b16 %v593, %v591
        %v600 = vpack.c.b16 %v594, %v592
        %v601 = vpack.c.b16 %v597, %v595
        %v602 = vpack.c.b16 %v598, %v596
        %v863 = vunpack.c.l.b16 %v331
        %v864 = vunpack.c.h.b16 %v331
        %v865 = vunpack.c.l.b16 %v332
        %v866 = vunpack.c.h.b16 %v332
        %v867 = vunpack.c.l.b16 %v333
        %v868 = vunpack.c.h.b16 %v333
        %v869 = vunpack.c.l.b16 %v334
        %v870 = vunpack.c.h.b16 %v334
        %v871 = vunpack.c.l.b16 %v335
        %v872 = vunpack.c.h.b16 %v335
        %v873 = vunpack.c.l.b16 %v336
        %v874 = vunpack.c.h.b16 %v336
        %v875 = vunpack.c.l.b16 %v337
        %v876 = vunpack.c.h.b16 %v337
        %v877 = vunpack.c.l.b16 %v338
        %v878 = vunpack.c.h.b16 %v338
        %v879 = vunpack.c.l.b16 %v339
        %v880 = vunpack.c.h.b16 %v339
        %v881 = vunpack.c.l.b16 %v340
        %v882 = vunpack.c.h.b16 %v340
        %v883 = vunpack.c.l.b16 %v341
        %v884 = vunpack.c.h.b16 %v341
        %v885 = vunpack.c.l.b16 %v342
        %v886 = vunpack.c.h.b16 %v342
        %v887 = vunpack.c.l.b16 %v343
        %v888 = vunpack.c.h.b16 %v343
        %v889 = vunpack.c.l.b16 %v344
        %v890 = vunpack.c.h.b16 %v344
        %v891 = vunpack.c.l.b16 %v345
        %v892 = vunpack.c.h.b16 %v345
        %v893 = vunpack.c.l.b16 %v346
        %v894 = vunpack.c.h.b16 %v346
        %v895 = vunpack.c.l.b16 %v347
        %v896 = vunpack.c.h.b16 %v347
        %v897 = vunpack.c.l.b16 %v348
        %v898 = vunpack.c.h.b16 %v348
        %v899 = vunpack.c.l.b16 %v349
        %v900 = vunpack.c.h.b16 %v349
        %v901 = vunpack.c.l.b16 %v350
        %v902 = vunpack.c.h.b16 %v350
        %v903 = vunpack.c.l.b16 %v351
        %v904 = vunpack.c.h.b16 %v351
        %v905 = vunpack.c.l.b16 %v352
        %v906 = vunpack.c.h.b16 %v352
        %v907 = vunpack.c.l.b16 %v353
        %v908 = vunpack.c.h.b16 %v353
        %v909 = vunpack.c.l.b16 %v354
        %v910 = vunpack.c.h.b16 %v354
        %v911 = vunpack.c.l.b16 %v355
        %v912 = vunpack.c.h.b16 %v355
        %v913 = vunpack.c.l.b16 %v356
        %v914 = vunpack.c.h.b16 %v356
        %v915 = vunpack.c.l.b16 %v357
        %v916 = vunpack.c.h.b16 %v357
        %v917 = vunpack.c.l.b16 %v358
        %v918 = vunpack.c.h.b16 %v358
        %v919 = vunpack.c.l.b16 %v359
        %v920 = vunpack.c.h.b16 %v359
        %v921 = vunpack.c.l.b16 %v360
        %v922 = vunpack.c.h.b16 %v360
        %v923 = vunpack.c.l.b16 %v361
        %v924 = vunpack.c.h.b16 %v361
        %v925 = vunpack.c.l.b16 %v362
        %v926 = vunpack.c.h.b16 %v362
        %v927 = vunpack.c.l.b16 %v363
        %v928 = vunpack.c.h.b16 %v363
        %v929 = vunpack.c.l.b16 %v364
        %v930 = vunpack.c.h.b16 %v364
        %v931 = vunpack.c.l.b16 %v365
        %v932 = vunpack.c.h.b16 %v365
        %v933 = vunpack.c.l.b16 %v366
        %v934 = vunpack.c.h.b16 %v366
        %v935 = vunpack.c.l.b16 %v367
        %v936 = vunpack.c.h.b16 %v367
        %v937 = vunpack.c.l.b16 %v368
        %v938 = vunpack.c.h.b16 %v368
        %v939 = vunpack.c.l.b16 %v369
        %v940 = vunpack.c.h.b16 %v369
        %v941 = vunpack.c.l.b16 %v370
        %v942 = vunpack.c.h.b16 %v370
        %v943 = vunpack.c.l.b16 %v371
        %v944 = vunpack.c.h.b16 %v371
        %v945 = vunpack.c.l.b16 %v372
        %v946 = vunpack.c.h.b16 %v372
        %v947 = vunpack.c.l.b16 %v373
        %v948 = vunpack.c.h.b16 %v373
        %v949 = vunpack.c.l.b16 %v374
        %v950 = vunpack.c.h.b16 %v374
        %v951 = vunpack.c.l.b16 %v375
        %v952 = vunpack.c.h.b16 %v375
        %v953 = vunpack.c.l.b16 %v376
        %v954 = vunpack.c.h.b16 %v376
        %v955 = vunpack.c.l.b16 %v377
        %v956 = vunpack.c.h.b16 %v377
        %v957 = vunpack.c.l.b16 %v378
        %v958 = vunpack.c.h.b16 %v378
        %v959 = vunpack.c.l.b16 %v379
        %v960 = vunpack.c.h.b16 %v379
        %v961 = vunpack.c.l.b16 %v380
        %v962 = vunpack.c.h.b16 %v380
        %v963 = vunpack.c.l.b16 %v381
        %v964 = vunpack.c.h.b16 %v381
        %v965 = vunpack.c.l.b16 %v382
        %v966 = vunpack.c.h.b16 %v382
        %v967 = vunpack.c.l.b16 %v383
        %v968 = vunpack.c.h.b16 %v383
        %v969 = vunpack.c.l.b16 %v384
        %v970 = vunpack.c.h.b16 %v384
        %v971 = vunpack.c.l.b16 %v385
        %v972 = vunpack.c.h.b16 %v385
        %v973 = vunpack.c.l.b16 %v386
        %v974 = vunpack.c.h.b16 %v386
        %v975 = vunpack.c.l.b16 %v387
        %v976 = vunpack.c.h.b16 %v387
        %v977 = vunpack.c.l.b16 %v388
        %v978 = vunpack.c.h.b16 %v388
        %v979 = vunpack.c.l.b16 %v389
        %v980 = vunpack.c.h.b16 %v389
        %v981 = vunpack.c.l.b16 %v390
        %v982 = vunpack.c.h.b16 %v390
        %v983 = vunpack.c.l.b16 %v391
        %v984 = vunpack.c.h.b16 %v391
        %v985 = vunpack.c.l.b16 %v392
        %v986 = vunpack.c.h.b16 %v392
        %v987 = vunpack.c.l.b16 %v393
        %v988 = vunpack.c.h.b16 %v393
        %v989 = vunpack.c.l.b16 %v394
        %v990 = vunpack.c.h.b16 %v394
        %v991 = vunpack.c.l.b16 %v395
        %v992 = vunpack.c.h.b16 %v395
        %v993 = vunpack.c.l.b16 %v396
        %v994 = vunpack.c.h.b16 %v396
        %v995 = vunpack.c.l.b16 %v397
        %v996 = vunpack.c.h.b16 %v397
        %v997 = vunpack.c.l.b16 %v398
        %v998 = vunpack.c.h.b16 %v398
        %v999 = vunpack.c.l.b16 %v399
        %v1000 = vunpack.c.h.b16 %v399
        %v1001 = vunpack.c.l.b16 %v400
        %v1002 = vunpack.c.h.b16 %v400
        %v1003 = vunpack.c.l.b16 %v401
        %v1004 = vunpack.c.h.b16 %v401
        %v1005 = vunpack.c.l.b16 %v402
        %v1006 = vunpack.c.h.b16 %v402
        %v1007 = vunpack.c.l.b16 %v403
        %v1008 = vunpack.c.h.b16 %v403
        %v1009 = vunpack.c.l.b16 %v404
        %v1010 = vunpack.c.h.b16 %v404
        %v1011 = vunpack.c.l.b16 %v405
        %v1012 = vunpack.c.h.b16 %v405
        %v1013 = vunpack.c.l.b16 %v406
        %v1014 = vunpack.c.h.b16 %v406
        %v1015 = vunpack.c.l.b16 %v407
        %v1016 = vunpack.c.h.b16 %v407
        %v1017 = vunpack.c.l.b16 %v408
        %v1018 = vunpack.c.h.b16 %v408
        %v1019 = vunpack.c.l.b16 %v409
        %v1020 = vunpack.c.h.b16 %v409
        %v1021 = vunpack.c.l.b16 %v410
        %v1022 = vunpack.c.h.b16 %v410
        %v1023 = vunpack.c.l.b16 %v411
        %v1024 = vunpack.c.h.b16 %v411
        %v1025 = vunpack.c.l.b16 %v412
        %v1026 = vunpack.c.h.b16 %v412
        %v1027 = vunpack.c.l.b16 %v413
        %v1028 = vunpack.c.h.b16 %v413
        %v1029 = vunpack.c.l.b16 %v414
        %v1030 = vunpack.c.h.b16 %v414
        %v1031 = vunpack.c.l.b16 %v415
        %v1032 = vunpack.c.h.b16 %v415
        %v1033 = vunpack.c.l.b16 %v416
        %v1034 = vunpack.c.h.b16 %v416
        %v1035 = vunpack.c.l.b16 %v417
        %v1036 = vunpack.c.h.b16 %v417
        %v1037 = vunpack.c.l.b16 %v418
        %v1038 = vunpack.c.h.b16 %v418
        %v1039 = vunpack.c.l.b16 %v419
        %v1040 = vunpack.c.h.b16 %v419
        %v1041 = vunpack.c.l.b16 %v420
        %v1042 = vunpack.c.h.b16 %v420
        %v1043 = vunpack.c.l.b16 %v421
        %v1044 = vunpack.c.h.b16 %v421
        %v1045 = vunpack.c.l.b16 %v422
        %v1046 = vunpack.c.h.b16 %v422
        %v1047 = vunpack.c.l.b16 %v423
        %v1048 = vunpack.c.h.b16 %v423
        %v1049 = vunpack.c.l.b16 %v424
        %v1050 = vunpack.c.h.b16 %v424
        %v1051 = vunpack.c.l.b16 %v425
        %v1052 = vunpack.c.h.b16 %v425
        %v1053 = vunpack.c.l.b16 %v426
        %v1054 = vunpack.c.h.b16 %v426
        %v1055 = vunpack.c.l.b16 %v427
        %v1056 = vunpack.c.h.b16 %v427
        %v1057 = vunpack.c.l.b16 %v428
        %v1058 = vunpack.c.h.b16 %v428
        %v1059 = vunpack.c.l.b16 %v429
        %v1060 = vunpack.c.h.b16 %v429
        %v1061 = vunpack.c.l.b16 %v430
        %v1062 = vunpack.c.h.b16 %v430
        %v1063 = vunpack.c.l.b16 %v431
        %v1064 = vunpack.c.h.b16 %v431
        %v1065 = vunpack.c.l.b16 %v432
        %v1066 = vunpack.c.h.b16 %v432
        %v1067 = vunpack.c.l.b16 %v433
        %v1068 = vunpack.c.h.b16 %v433
        %v1069 = vunpack.c.l.b16 %v434
        %v1070 = vunpack.c.h.b16 %v434
        %v1071 = vunpack.c.l.b16 %v435
        %v1072 = vunpack.c.h.b16 %v435
        %v1073 = vunpack.c.l.b16 %v436
        %v1074 = vunpack.c.h.b16 %v436
        %v1075 = vunpack.c.l.b16 %v437
        %v1076 = vunpack.c.h.b16 %v437
        %v1077 = vunpack.c.l.b16 %v438
        %v1078 = vunpack.c.h.b16 %v438
        %v1079 = vunpack.c.l.b16 %v439
        %v1080 = vunpack.c.h.b16 %v439
        %v1081 = vunpack.c.l.b16 %v440
        %v1082 = vunpack.c.h.b16 %v440
        %v1083 = vunpack.c.l.b16 %v441
        %v1084 = vunpack.c.h.b16 %v441
        %v1085 = vunpack.c.l.b16 %v442
        %v1086 = vunpack.c.h.b16 %v442
        %v1087 = vunpack.c.l.b16 %v443
        %v1088 = vunpack.c.h.b16 %v443
        %v1089 = vunpack.c.l.b16 %v444
        %v1090 = vunpack.c.h.b16 %v444
        %v1091 = vunpack.c.l.b16 %v445
        %v1092 = vunpack.c.h.b16 %v445
        %v1093 = vunpack.c.l.b16 %v446
        %v1094 = vunpack.c.h.b16 %v446
        %v1095 = vunpack.c.l.b16 %v447
        %v1096 = vunpack.c.h.b16 %v447
        %v1097 = vunpack.c.l.b16 %v448
        %v1098 = vunpack.c.h.b16 %v448
        %v1099 = vunpack.c.l.b16 %v449
        %v1100 = vunpack.c.h.b16 %v449
        %v1101 = vunpack.c.l.b16 %v450
        %v1102 = vunpack.c.h.b16 %v450
        %v1103 = vunpack.c.l.b16 %v451
        %v1104 = vunpack.c.h.b16 %v451
        %v1105 = vunpack.c.l.b16 %v452
        %v1106 = vunpack.c.h.b16 %v452
        %v1107 = vunpack.c.l.b16 %v453
        %v1108 = vunpack.c.h.b16 %v453
        %v1109 = vunpack.c.l.b16 %v454
        %v1110 = vunpack.c.h.b16 %v454
        %v1111 = vunpack.c.l.b16 %v455
        %v1112 = vunpack.c.h.b16 %v455
        %v1113 = vunpack.c.l.b16 %v456
        %v1114 = vunpack.c.h.b16 %v456
        %v1115 = vunpack.c.l.b16 %v457
        %v1116 = vunpack.c.h.b16 %v457
        %v1117 = vunpack.c.l.b16 %v458
        %v1118 = vunpack.c.h.b16 %v458
        %v1119 = vunpack.c.l.b16 %v459
        %v1120 = vunpack.c.h.b16 %v459
        %v1121 = vunpack.c.l.b16 %v460
        %v1122 = vunpack.c.h.b16 %v460
        %v1123 = vunpack.c.l.b16 %v461
        %v1124 = vunpack.c.h.b16 %v461
        %v1125 = vunpack.c.l.b16 %v462
        %v1126 = vunpack.c.h.b16 %v462
        %v1127 = vunpack.c.l.b16 %v463
        %v1128 = vunpack.c.h.b16 %v463
        %v1129 = vunpack.c.l.b16 %v464
        %v1130 = vunpack.c.h.b16 %v464
        %v1131 = vunpack.c.l.b16 %v465
        %v1132 = vunpack.c.h.b16 %v465
        %v1133 = vunpack.c.l.b16 %v466
        %v1134 = vunpack.c.h.b16 %v466
        %v1135 = vunpack.c.l.b16 %v467
        %v1136 = vunpack.c.h.b16 %v467
        %v1137 = vunpack.c.l.b16 %v468
        %v1138 = vunpack.c.h.b16 %v468
        %v1139 = vunpack.c.l.b16 %v469
        %v1140 = vunpack.c.h.b16 %v469
        %v1141 = vunpack.c.l.b16 %v470
        %v1142 = vunpack.c.h.b16 %v470
        %v1143 = vunpack.c.l.b16 %v471
        %v1144 = vunpack.c.h.b16 %v471
        %v1145 = vunpack.c.l.b16 %v472
        %v1146 = vunpack.c.h.b16 %v472
        %v1147 = vunpack.c.l.b16 %v473
        %v1148 = vunpack.c.h.b16 %v473
        %v1149 = vunpack.c.l.b16 %v474
        %v1150 = vunpack.c.h.b16 %v474
        %v1151 = vunpack.c.l.b16 %v475
        %v1152 = vunpack.c.h.b16 %v475
        %v1153 = vunpack.c.l.b16 %v476
        %v1154 = vunpack.c.h.b16 %v476
        %v1155 = vunpack.c.l.b16 %v477
        %v1156 = vunpack.c.h.b16 %v477
        %v1157 = vunpack.c.l.b16 %v478
        %v1158 = vunpack.c.h.b16 %v478
        %v1159 = vunpack.c.l.b16 %v479
        %v1160 = vunpack.c.h.b16 %v479
        %v1161 = vunpack.c.l.b16 %v480
        %v1162 = vunpack.c.h.b16 %v480
        %v1163 = vunpack.c.l.b16 %v481
        %v1164 = vunpack.c.h.b16 %v481
        %v1165 = vunpack.c.l.b16 %v482
        %v1166 = vunpack.c.h.b16 %v482
        %v1167 = vunpack.c.l.b16 %v483
        %v1168 = vunpack.c.h.b16 %v483
        %v1169 = vunpack.c.l.b16 %v484
        %v1170 = vunpack.c.h.b16 %v484
        %v1171 = vunpack.c.l.b16 %v485
        %v1172 = vunpack.c.h.b16 %v485
        %v1173 = vunpack.c.l.b16 %v486
        %v1174 = vunpack.c.h.b16 %v486
        %v1175 = vunpack.c.l.b16 %v487
        %v1176 = vunpack.c.h.b16 %v487
        %v1177 = vunpack.c.l.b16 %v488
        %v1178 = vunpack.c.h.b16 %v488
        %v1179 = vunpack.c.l.b16 %v489
        %v1180 = vunpack.c.h.b16 %v489
        %v1181 = vunpack.c.l.b16 %v490
        %v1182 = vunpack.c.h.b16 %v490
        %v1183 = vunpack.c.l.b16 %v491
        %v1184 = vunpack.c.h.b16 %v491
        %v1185 = vunpack.c.l.b16 %v492
        %v1186 = vunpack.c.h.b16 %v492
        %v1187 = vunpack.c.l.b16 %v493
        %v1188 = vunpack.c.h.b16 %v493
        %v1189 = vunpack.c.l.b16 %v494
        %v1190 = vunpack.c.h.b16 %v494
        %v1191 = vunpack.c.l.b16 %v495
        %v1192 = vunpack.c.h.b16 %v495
        %v1193 = vunpack.c.l.b16 %v496
        %v1194 = vunpack.c.h.b16 %v496
        %v1195 = vunpack.c.l.b16 %v497
        %v1196 = vunpack.c.h.b16 %v497
        %v1197 = vunpack.c.l.b16 %v498
        %v1198 = vunpack.c.h.b16 %v498
        %v1199 = vunpack.c.l.b16 %v499
        %v1200 = vunpack.c.h.b16 %v499
        %v1201 = vunpack.c.l.b16 %v500
        %v1202 = vunpack.c.h.b16 %v500
        %v1203 = vunpack.c.l.b16 %v501
        %v1204 = vunpack.c.h.b16 %v501
        %v1205 = vunpack.c.l.b16 %v502
        %v1206 = vunpack.c.h.b16 %v502
        %v1207 = vunpack.c.l.b16 %v503
        %v1208 = vunpack.c.h.b16 %v503
        %v1209 = vunpack.c.l.b16 %v504
        %v1210 = vunpack.c.h.b16 %v504
        %v1211 = vunpack.c.l.b16 %v505
        %v1212 = vunpack.c.h.b16 %v505
        %v1213 = vunpack.c.l.b16 %v506
        %v1214 = vunpack.c.h.b16 %v506
        %v1215 = vunpack.c.l.b16 %v507
        %v1216 = vunpack.c.h.b16 %v507
        %v1217 = vunpack.c.l.b16 %v508
        %v1218 = vunpack.c.h.b16 %v508
        %v1219 = vunpack.c.l.b16 %v509
        %v1220 = vunpack.c.h.b16 %v509
        %v1221 = vunpack.c.l.b16 %v510
        %v1222 = vunpack.c.h.b16 %v510
        %v1223 = vunpack.c.l.b16 %v511
        %v1224 = vunpack.c.h.b16 %v511
        %v1225 = vunpack.c.l.b16 %v512
        %v1226 = vunpack.c.h.b16 %v512
        %v1227 = vunpack.c.l.b16 %v513
        %v1228 = vunpack.c.h.b16 %v513
        %v1229 = vunpack.c.l.b16 %v514
        %v1230 = vunpack.c.h.b16 %v514
        %v1231 = vunpack.c.l.b16 %v515
        %v1232 = vunpack.c.h.b16 %v515
        %v1233 = vunpack.c.l.b16 %v516
        %v1234 = vunpack.c.h.b16 %v516
        %v1235 = vunpack.c.l.b16 %v517
        %v1236 = vunpack.c.h.b16 %v517
        %v1237 = vunpack.c.l.b16 %v518
        %v1238 = vunpack.c.h.b16 %v518
        %v1239 = vunpack.c.l.b16 %v519
        %v1240 = vunpack.c.h.b16 %v519
        %v1241 = vunpack.c.l.b16 %v520
        %v1242 = vunpack.c.h.b16 %v520
        %v1243 = vunpack.c.l.b16 %v521
        %v1244 = vunpack.c.h.b16 %v521
        %v1245 = vunpack.c.l.b16 %v522
        %v1246 = vunpack.c.h.b16 %v522
        %v1247 = vunpack.c.l.b16 %v523
        %v1248 = vunpack.c.h.b16 %v523
        %v1249 = vunpack.c.l.b16 %v524
        %v1250 = vunpack.c.h.b16 %v524
        %v1251 = vunpack.c.l.b16 %v525
        %v1252 = vunpack.c.h.b16 %v525
        %v1253 = vunpack.c.l.b16 %v526
        %v1254 = vunpack.c.h.b16 %v526
        %v1255 = vunpack.c.l.b16 %v527
        %v1256 = vunpack.c.h.b16 %v527
        %v1257 = vunpack.c.l.b16 %v528
        %v1258 = vunpack.c.h.b16 %v528
        %v1259 = vunpack.c.l.b16 %v529
        %v1260 = vunpack.c.h.b16 %v529
        %v1261 = vunpack.c.l.b16 %v530
        %v1262 = vunpack.c.h.b16 %v530
        %v1263 = vunpack.c.l.b16 %v531
        %v1264 = vunpack.c.h.b16 %v531
        %v1265 = vunpack.c.l.b16 %v532
        %v1266 = vunpack.c.h.b16 %v532
        %v1267 = vunpack.c.l.b16 %v533
        %v1268 = vunpack.c.h.b16 %v533
        %v1269 = vunpack.c.l.b16 %v534
        %v1270 = vunpack.c.h.b16 %v534
        %v1271 = vunpack.c.l.b16 %v535
        %v1272 = vunpack.c.h.b16 %v535
        %v1273 = vunpack.c.l.b16 %v536
        %v1274 = vunpack.c.h.b16 %v536
        %v1275 = vunpack.c.l.b16 %v537
        %v1276 = vunpack.c.h.b16 %v537
        %v1277 = vunpack.c.l.b16 %v538
        %v1278 = vunpack.c.h.b16 %v538
        %v1279 = vunpack.c.l.b16 %v539
        %v1280 = vunpack.c.h.b16 %v539
        %v1281 = vunpack.c.l.b16 %v540
        %v1282 = vunpack.c.h.b16 %v540
        %v1283 = vunpack.c.l.b16 %v541
        %v1284 = vunpack.c.h.b16 %v541
        %v1285 = vunpack.c.l.b16 %v542
        %v1286 = vunpack.c.h.b16 %v542
        %v1287 = vunpack.c.l.b16 %v543
        %v1288 = vunpack.c.h.b16 %v543
        %v1289 = vunpack.c.l.b16 %v544
        %v1290 = vunpack.c.h.b16 %v544
        %v1291 = vunpack.c.l.b16 %v545
        %v1292 = vunpack.c.h.b16 %v545
        %v1293 = vunpack.c.l.b16 %v546
        %v1294 = vunpack.c.h.b16 %v546
        %v1295 = vunpack.c.l.b16 %v547
        %v1296 = vunpack.c.h.b16 %v547
        %v1297 = vunpack.c.l.b16 %v548
        %v1298 = vunpack.c.h.b16 %v548
        %v1299 = vunpack.c.l.b16 %v549
        %v1300 = vunpack.c.h.b16 %v549
        %v1301 = vunpack.c.l.b16 %v550
        %v1302 = vunpack.c.h.b16 %v550
        %v1303 = vunpack.c.l.b16 %v551
        %v1304 = vunpack.c.h.b16 %v551
        %v1305 = vunpack.c.l.b16 %v552
        %v1306 = vunpack.c.h.b16 %v552
        %v1307 = vunpack.c.l.b16 %v553
        %v1308 = vunpack.c.h.b16 %v553
        %v1309 = vunpack.c.l.b16 %v554
        %v1310 = vunpack.c.h.b16 %v554
        %v1311 = vunpack.c.l.b16 %v555
        %v1312 = vunpack.c.h.b16 %v555
        %v1313 = vunpack.c.l.b16 %v556
        %v1314 = vunpack.c.h.b16 %v556
        %v1315 = vunpack.c.l.b16 %v557
        %v1316 = vunpack.c.h.b16 %v557
        %v1317 = vunpack.c.l.b16 %v558
        %v1318 = vunpack.c.h.b16 %v558
        %v1319 = vunpack.c.l.b16 %v559
        %v1320 = vunpack.c.h.b16 %v559
        %v1321 = vunpack.c.l.b16 %v560
        %v1322 = vunpack.c.h.b16 %v560
        %v1323 = vunpack.c.l.b16 %v561
        %v1324 = vunpack.c.h.b16 %v561
        %v1325 = vunpack.c.l.b16 %v562
        %v1326 = vunpack.c.h.b16 %v562
        %v1327 = vunpack.c.l.b16 %v563
        %v1328 = vunpack.c.h.b16 %v563
        %v1329 = vunpack.c.l.b16 %v564
        %v1330 = vunpack.c.h.b16 %v564
        %v1331 = vunpack.c.l.b16 %v565
        %v1332 = vunpack.c.h.b16 %v565
        %v1333 = vunpack.c.l.b16 %v566
        %v1334 = vunpack.c.h.b16 %v566
        %v1335 = vunpack.c.l.b16 %v567
        %v1336 = vunpack.c.h.b16 %v567
        %v1337 = vunpack.c.l.b16 %v568
        %v1338 = vunpack.c.h.b16 %v568
        %v1339 = vunpack.c.l.b16 %v569
        %v1340 = vunpack.c.h.b16 %v569
        %v1341 = vunpack.c.l.b16 %v570
        %v1342 = vunpack.c.h.b16 %v570
        %v1343 = vunpack.c.l.b16 %v571
        %v1344 = vunpack.c.h.b16 %v571
        %v1345 = vunpack.c.l.b16 %v572
        %v1346 = vunpack.c.h.b16 %v572
        %v1347 = vunpack.c.l.b16 %v573
        %v1348 = vunpack.c.h.b16 %v573
        %v1349 = vunpack.c.l.b16 %v574
        %v1350 = vunpack.c.h.b16 %v574
        %v1351 = vunpack.c.l.b16 %v575
        %v1352 = vunpack.c.h.b16 %v575
        %v1353 = vunpack.c.l.b16 %v576
        %v1354 = vunpack.c.h.b16 %v576
        %v1355 = vunpack.c.l.b16 %v577
        %v1356 = vunpack.c.h.b16 %v577
        %v1357 = vunpack.c.l.b16 %v578
        %v1358 = vunpack.c.h.b16 %v578
        %v1359 = vunpack.c.l.b16 %v579
        %v1360 = vunpack.c.h.b16 %v579
        %v1361 = vunpack.c.l.b16 %v580
        %v1362 = vunpack.c.h.b16 %v580
        %v1363 = vunpack.c.l.b16 %v581
        %v1364 = vunpack.c.h.b16 %v581
        %v1365 = vunpack.c.l.b16 %v582
        %v1366 = vunpack.c.h.b16 %v582
        %v1367 = vunpack.c.l.b16 %v583
        %v1368 = vunpack.c.h.b16 %v583
        %v1369 = vunpack.c.l.b16 %v584
        %v1370 = vunpack.c.h.b16 %v584
        %v1371 = vunpack.c.l.b16 %v585
        %v1372 = vunpack.c.h.b16 %v585
        %v1373 = vunpack.c.l.b16 %v586
        %v1374 = vunpack.c.h.b16 %v586
        %v1375 = vpack.c.b16 %v879, %v863
        %v1376 = vpack.c.b16 %v880, %v864
        %v1377 = vpack.c.b16 %v881, %v865
        %v1378 = vpack.c.b16 %v882, %v866
        %v1379 = vpack.c.b16 %v883, %v867
        %v1380 = vpack.c.b16 %v884, %v868
        %v1381 = vpack.c.b16 %v885, %v869
        %v1382 = vpack.c.b16 %v886, %v870
        %v1383 = vpack.c.b16 %v887, %v871
        %v1384 = vpack.c.b16 %v888, %v872
        %v1385 = vpack.c.b16 %v889, %v873
        %v1386 = vpack.c.b16 %v890, %v874
        %v1387 = vpack.c.b16 %v891, %v875
        %v1388 = vpack.c.b16 %v892, %v876
        %v1389 = vpack.c.b16 %v893, %v877
        %v1390 = vpack.c.b16 %v894, %v878
        %v1391 = vpack.c.b16 %v911, %v895
        %v1392 = vpack.c.b16 %v912, %v896
        %v1393 = vpack.c.b16 %v913, %v897
        %v1394 = vpack.c.b16 %v914, %v898
        %v1395 = vpack.c.b16 %v915, %v899
        %v1396 = vpack.c.b16 %v916, %v900
        %v1397 = vpack.c.b16 %v917, %v901
        %v1398 = vpack.c.b16 %v918, %v902
        %v1399 = vpack.c.b16 %v919, %v903
        %v1400 = vpack.c.b16 %v920, %v904
        %v1401 = vpack.c.b16 %v921, %v905
        %v1402 = vpack.c.b16 %v922, %v906
        %v1403 = vpack.c.b16 %v923, %v907
        %v1404 = vpack.c.b16 %v924, %v908
        %v1405 = vpack.c.b16 %v925, %v909
        %v1406 = vpack.c.b16 %v926, %v910
        %v1407 = vpack.c.b16 %v943, %v927
        %v1408 = vpack.c.b16 %v944, %v928
        %v1409 = vpack.c.b16 %v945, %v929
        %v1410 = vpack.c.b16 %v946, %v930
        %v1411 = vpack.c.b16 %v947, %v931
        %v1412 = vpack.c.b16 %v948, %v932
        %v1413 = vpack.c.b16 %v949, %v933
        %v1414 = vpack.c.b16 %v950, %v934
        %v1415 = vpack.c.b16 %v951, %v935
        %v1416 = vpack.c.b16 %v952, %v936
        %v1417 = vpack.c.b16 %v953, %v937
        %v1418 = vpack.c.b16 %v954, %v938
        %v1419 = vpack.c.b16 %v955, %v939
        %v1420 = vpack.c.b16 %v956, %v940
        %v1421 = vpack.c.b16 %v957, %v941
        %v1422 = vpack.c.b16 %v958, %v942
        %v1423 = vpack.c.b16 %v975, %v959
        %v1424 = vpack.c.b16 %v976, %v960
        %v1425 = vpack.c.b16 %v977, %v961
        %v1426 = vpack.c.b16 %v978, %v962
        %v1427 = vpack.c.b16 %v979, %v963
        %v1428 = vpack.c.b16 %v980, %v964
        %v1429 = vpack.c.b16 %v981, %v965
        %v1430 = vpack.c.b16 %v982, %v966
        %v1431 = vpack.c.b16 %v983, %v967
        %v1432 = vpack.c.b16 %v984, %v968
        %v1433 = vpack.c.b16 %v985, %v969
        %v1434 = vpack.c.b16 %v986, %v970
        %v1435 = vpack.c.b16 %v987, %v971
        %v1436 = vpack.c.b16 %v988, %v972
        %v1437 = vpack.c.b16 %v989, %v973
        %v1438 = vpack.c.b16 %v990, %v974
        %v1439 = vpack.c.b16 %v1007, %v991
        %v1440 = vpack.c.b16 %v1008, %v992
        %v1441 = vpack.c.b16 %v1009, %v993
        %v1442 = vpack.c.b16 %v1010, %v994
        %v1443 = vpack.c.b16 %v1011, %v995
        %v1444 = vpack.c.b16 %v1012, %v996
        %v1445 = vpack.c.b16 %v1013, %v997
        %v1446 = vpack.c.b16 %v1014, %v998
        %v1447 = vpack.c.b16 %v1015, %v999
        %v1448 = vpack.c.b16 %v1016, %v1000
        %v1449 = vpack.c.b16 %v1017, %v1001
        %v1450 = vpack.c.b16 %v1018, %v1002
        %v1451 = vpack.c.b16 %v1019, %v1003
        %v1452 = vpack.c.b16 %v1020, %v1004
        %v1453 = vpack.c.b16 %v1021, %v1005
        %v1454 = vpack.c.b16 %v1022, %v1006
        %v1455 = vpack.c.b16 %v1039, %v1023
        %v1456 = vpack.c.b16 %v1040, %v1024
        %v1457 = vpack.c.b16 %v1041, %v1025
        %v1458 = vpack.c.b16 %v1042, %v1026
        %v1459 = vpack.c.b16 %v1043, %v1027
        %v1460 = vpack.c.b16 %v1044, %v1028
        %v1461 = vpack.c.b16 %v1045, %v1029
        %v1462 = vpack.c.b16 %v1046, %v1030
        %v1463 = vpack.c.b16 %v1047, %v1031
        %v1464 = vpack.c.b16 %v1048, %v1032
        %v1465 = vpack.c.b16 %v1049, %v1033
        %v1466 = vpack.c.b16 %v1050, %v1034
        %v1467 = vpack.c.b16 %v1051, %v1035
        %v1468 = vpack.c.b16 %v1052, %v1036
        %v1469 = vpack.c.b16 %v1053, %v1037
        %v1470 = vpack.c.b16 %v1054, %v1038
        %v1471 = vpack.c.b16 %v1071, %v1055
        %v1472 = vpack.c.b16 %v1072, %v1056
        %v1473 = vpack.c.b16 %v1073, %v1057
        %v1474 = vpack.c.b16 %v1074, %v1058
        %v1475 = vpack.c.b16 %v1075, %v1059
        %v1476 = vpack.c.b16 %v1076, %v1060
        %v1477 = vpack.c.b16 %v1077, %v1061
        %v1478 = vpack.c.b16 %v1078, %v1062
        %v1479 = vpack.c.b16 %v1079, %v1063
        %v1480 = vpack.c.b16 %v1080, %v1064
        %v1481 = vpack.c.b16 %v1081, %v1065
        %v1482 = vpack.c.b16 %v1082, %v1066
        %v1483 = vpack.c.b16 %v1083, %v1067
        %v1484 = vpack.c.b16 %v1084, %v1068
        %v1485 = vpack.c.b16 %v1085, %v1069
        %v1486 = vpack.c.b16 %v1086, %v1070
        %v1487 = vpack.c.b16 %v1103, %v1087
        %v1488 = vpack.c.b16 %v1104, %v1088
        %v1489 = vpack.c.b16 %v1105, %v1089
        %v1490 = vpack.c.b16 %v1106, %v1090
        %v1491 = vpack.c.b16 %v1107, %v1091
        %v1492 = vpack.c.b16 %v1108, %v1092
        %v1493 = vpack.c.b16 %v1109, %v1093
        %v1494 = vpack.c.b16 %v1110, %v1094
        %v1495 = vpack.c.b16 %v1111, %v1095
        %v1496 = vpack.c.b16 %v1112, %v1096
        %v1497 = vpack.c.b16 %v1113, %v1097
        %v1498 = vpack.c.b16 %v1114, %v1098
        %v1499 = vpack.c.b16 %v1115, %v1099
        %v1500 = vpack.c.b16 %v1116, %v1100
        %v1501 = vpack.c.b16 %v1117, %v1101
        %v1502 = vpack.c.b16 %v1118, %v1102
        %v1503 = vpack.c.b16 %v1135, %v1119
        %v1504 = vpack.c.b16 %v1136, %v1120
        %v1505 = vpack.c.b16 %v1137, %v1121
        %v1506 = vpack.c.b16 %v1138, %v1122
        %v1507 = vpack.c.b16 %v1139, %v1123
        %v1508 = vpack.c.b16 %v1140, %v1124
        %v1509 = vpack.c.b16 %v1141, %v1125
        %v1510 = vpack.c.b16 %v1142, %v1126
        %v1511 = vpack.c.b16 %v1143, %v1127
        %v1512 = vpack.c.b16 %v1144, %v1128
        %v1513 = vpack.c.b16 %v1145, %v1129
        %v1514 = vpack.c.b16 %v1146, %v1130
        %v1515 = vpack.c.b16 %v1147, %v1131
        %v1516 = vpack.c.b16 %v1148, %v1132
        %v1517 = vpack.c.b16 %v1149, %v1133
        %v1518 = vpack.c.b16 %v1150, %v1134
        %v1519 = vpack.c.b16 %v1167, %v1151
        %v1520 = vpack.c.b16 %v1168, %v1152
        %v1521 = vpack.c.b16 %v1169, %v1153
        %v1522 = vpack.c.b16 %v1170, %v1154
        %v1523 = vpack.c.b16 %v1171, %v1155
        %v1524 = vpack.c.b16 %v1172, %v1156
        %v1525 = vpack.c.b16 %v1173, %v1157
        %v1526 = vpack.c.b16 %v1174, %v1158
        %v1527 = vpack.c.b16 %v1175, %v1159
        %v1528 = vpack.c.b16 %v1176, %v1160
        %v1529 = vpack.c.b16 %v1177, %v1161
        %v1530 = vpack.c.b16 %v1178, %v1162
        %v1531 = vpack.c.b16 %v1179, %v1163
        %v1532 = vpack.c.b16 %v1180, %v1164
        %v1533 = vpack.c.b16 %v1181, %v1165
        %v1534 = vpack.c.b16 %v1182, %v1166
        %v1535 = vpack.c.b16 %v1199, %v1183
        %v1536 = vpack.c.b16 %v1200, %v1184
        %v1537 = vpack.c.b16 %v1201, %v1185
        %v1538 = vpack.c.b16 %v1202, %v1186
        %v1539 = vpack.c.b16 %v1203, %v1187
        %v1540 = vpack.c.b16 %v1204, %v1188
        %v1541 = vpack.c.b16 %v1205, %v1189
        %v1542 = vpack.c.b16 %v1206, %v1190
        %v1543 = vpack.c.b16 %v1207, %v1191
        %v1544 = vpack.c.b16 %v1208, %v1192
        %v1545 = vpack.c.b16 %v1209, %v1193
        %v1546 = vpack.c.b16 %v1210, %v1194
        %v1547 = vpack.c.b16 %v1211, %v1195
        %v1548 = vpack.c.b16 %v1212, %v1196
        %v1549 = vpack.c.b16 %v1213, %v1197
        %v1550 = vpack.c.b16 %v1214, %v1198
        %v1551 = vpack.c.b16 %v1231, %v1215
        %v1552 = vpack.c.b16 %v1232, %v1216
        %v1553 = vpack.c.b16 %v1233, %v1217
        %v1554 = vpack.c.b16 %v1234, %v1218
        %v1555 = vpack.c.b16 %v1235, %v1219
        %v1556 = vpack.c.b16 %v1236, %v1220
        %v1557 = vpack.c.b16 %v1237, %v1221
        %v1558 = vpack.c.b16 %v1238, %v1222
        %v1559 = vpack.c.b16 %v1239, %v1223
        %v1560 = vpack.c.b16 %v1240, %v1224
        %v1561 = vpack.c.b16 %v1241, %v1225
        %v1562 = vpack.c.b16 %v1242, %v1226
        %v1563 = vpack.c.b16 %v1243, %v1227
        %v1564 = vpack.c.b16 %v1244, %v1228
        %v1565 = vpack.c.b16 %v1245, %v1229
        %v1566 = vpack.c.b16 %v1246, %v1230
        %v1567 = vpack.c.b16 %v1263, %v1247
        %v1568 = vpack.c.b16 %v1264, %v1248
        %v1569 = vpack.c.b16 %v1265, %v1249
        %v1570 = vpack.c.b16 %v1266, %v1250
        %v1571 = vpack.c.b16 %v1267, %v1251
        %v1572 = vpack.c.b16 %v1268, %v1252
        %v1573 = vpack.c.b16 %v1269, %v1253
        %v1574 = vpack.c.b16 %v1270, %v1254
        %v1575 = vpack.c.b16 %v1271, %v1255
        %v1576 = vpack.c.b16 %v1272, %v1256
        %v1577 = vpack.c.b16 %v1273, %v1257
        %v1578 = vpack.c.b16 %v1274, %v1258
        %v1579 = vpack.c.b16 %v1275, %v1259
        %v1580 = vpack.c.b16 %v1276, %v1260
        %v1581 = vpack.c.b16 %v1277, %v1261
        %v1582 = vpack.c.b16 %v1278, %v1262
        %v1583 = vpack.c.b16 %v1295, %v1279
        %v1584 = vpack.c.b16 %v1296, %v1280
        %v1585 = vpack.c.b16 %v1297, %v1281
        %v1586 = vpack.c.b16 %v1298, %v1282
        %v1587 = vpack.c.b16 %v1299, %v1283
        %v1588 = vpack.c.b16 %v1300, %v1284
        %v1589 = vpack.c.b16 %v1301, %v1285
        %v1590 = vpack.c.b16 %v1302, %v1286
        %v1591 = vpack.c.b16 %v1303, %v1287
        %v1592 = vpack.c.b16 %v1304, %v1288
        %v1593 = vpack.c.b16 %v1305, %v1289
        %v1594 = vpack.c.b16 %v1306, %v1290
        %v1595 = vpack.c.b16 %v1307, %v1291
        %v1596 = vpack.c.b16 %v1308, %v1292
        %v1597 = vpack.c.b16 %v1309, %v1293
        %v1598 = vpack.c.b16 %v1310, %v1294
        %v1599 = vpack.c.b16 %v1327, %v1311
        %v1600 = vpack.c.b16 %v1328, %v1312
        %v1601 = vpack.c.b16 %v1329, %v1313
        %v1602 = vpack.c.b16 %v1330, %v1314
        %v1603 = vpack.c.b16 %v1331, %v1315
        %v1604 = vpack.c.b16 %v1332, %v1316
        %v1605 = vpack.c.b16 %v1333, %v1317
        %v1606 = vpack.c.b16 %v1334, %v1318
        %v1607 = vpack.c.b16 %v1335, %v1319
        %v1608 = vpack.c.b16 %v1336, %v1320
        %v1609 = vpack.c.b16 %v1337, %v1321
        %v1610 = vpack.c.b16 %v1338, %v1322
        %v1611 = vpack.c.b16 %v1339, %v1323
        %v1612 = vpack.c.b16 %v1340, %v1324
        %v1613 = vpack.c.b16 %v1341, %v1325
        %v1614 = vpack.c.b16 %v1342, %v1326
        %v1615 = vpack.c.b16 %v1359, %v1343
        %v1616 = vpack.c.b16 %v1360, %v1344
        %v1617 = vpack.c.b16 %v1361, %v1345
        %v1618 = vpack.c.b16 %v1362, %v1346
        %v1619 = vpack.c.b16 %v1363, %v1347
        %v1620 = vpack.c.b16 %v1364, %v1348
        %v1621 = vpack.c.b16 %v1365, %v1349
        %v1622 = vpack.c.b16 %v1366, %v1350
        %v1623 = vpack.c.b16 %v1367, %v1351
        %v1624 = vpack.c.b16 %v1368, %v1352
        %v1625 = vpack.c.b16 %v1369, %v1353
        %v1626 = vpack.c.b16 %v1370, %v1354
        %v1627 = vpack.c.b16 %v1371, %v1355
        %v1628 = vpack.c.b16 %v1372, %v1356
        %v1629 = vpack.c.b16 %v1373, %v1357
        %v1630 = vpack.c.b16 %v1374, %v1358
        %1887 = vmatpush.bf16.msra.mxu0 %v1487
        %1888 = vmatpush.bf16.msra.mxu0 %v1471
        %1889 = vmatpush.bf16.msra.mxu0 %v1455
        %1890 = vmatpush.bf16.msra.mxu0 %v1439
        %1891 = vmatpush.bf16.msra.mxu0 %v1423
        %1892 = vmatpush.bf16.msra.mxu0 %v1407
        %1893 = vmatpush.bf16.msra.mxu0 %v1391
        %1894 = vmatpush.bf16.msra.mxu0 %v1375
        %1895 = vmatmul.bf16.gmra.mxu0 %v599
        %v1896 = vpop.f32.mrf.mxu0
        %v1897 = vadd.f32 0.0, %v1896
        %v1898 = vpop.f32.mrf.mxu0
        %v1899 = vadd.f32 0.0, %v1898
        %1900 = vmatmul.bf16.gmra.mxu0 %v601
        %v1901 = vpop.f32.mrf.mxu0
        %v1902 = vadd.f32 0.0, %v1901
        %v1903 = vpop.f32.mrf.mxu0
        %v1904 = vadd.f32 0.0, %v1903
        %1905 = vdwg.mxu0
        %1906 = vmatpush.bf16.msra.mxu0 %v1615
        %1907 = vmatpush.bf16.msra.mxu0 %v1599
        %1908 = vmatpush.bf16.msra.mxu0 %v1583
        %1909 = vmatpush.bf16.msra.mxu0 %v1567
        %1910 = vmatpush.bf16.msra.mxu0 %v1551
        %1911 = vmatpush.bf16.msra.mxu0 %v1535
        %1912 = vmatpush.bf16.msra.mxu0 %v1519
        %1913 = vmatpush.bf16.msra.mxu0 %v1503
        %1914 = vmatmul.bf16.gmra.mxu0 %v600
        %v1915 = vpop.f32.mrf.mxu0
        %v1916 = vadd.f32 %v1897, %v1915
        %v1917 = vpop.f32.mrf.mxu0
        %v1918 = vadd.f32 %v1899, %v1917
        %1919 = vmatmul.bf16.gmra.mxu0 %v602
        %v1920 = vpop.f32.mrf.mxu0
        %v1921 = vadd.f32 %v1902, %v1920
        %v1922 = vpop.f32.mrf.mxu0
        %v1923 = vadd.f32 %v1904, %v1922
        %1924 = vdwg.mxu0
        %1925 = vmatpush.bf16.msra.mxu0 %v1488
        %1926 = vmatpush.bf16.msra.mxu0 %v1472
        %1927 = vmatpush.bf16.msra.mxu0 %v1456
        %1928 = vmatpush.bf16.msra.mxu0 %v1440
        %1929 = vmatpush.bf16.msra.mxu0 %v1424
        %1930 = vmatpush.bf16.msra.mxu0 %v1408
        %1931 = vmatpush.bf16.msra.mxu0 %v1392
        %1932 = vmatpush.bf16.msra.mxu0 %v1376
        %1933 = vmatmul.bf16.gmra.mxu0 %v599
        %v1934 = vpop.f32.mrf.mxu0
        %v1935 = vadd.f32 0.0, %v1934
        %v1936 = vpop.f32.mrf.mxu0
        %v1937 = vadd.f32 0.0, %v1936
        %1938 = vmatmul.bf16.gmra.mxu0 %v601
        %v1939 = vpop.f32.mrf.mxu0
        %v1940 = vadd.f32 0.0, %v1939
        %v1941 = vpop.f32.mrf.mxu0
        %v1942 = vadd.f32 0.0, %v1941
        %1943 = vdwg.mxu0
        %1944 = vmatpush.bf16.msra.mxu0 %v1616
        %1945 = vmatpush.bf16.msra.mxu0 %v1600
        %1946 = vmatpush.bf16.msra.mxu0 %v1584
        %1947 = vmatpush.bf16.msra.mxu0 %v1568
        %1948 = vmatpush.bf16.msra.mxu0 %v1552
        %1949 = vmatpush.bf16.msra.mxu0 %v1536
        %1950 = vmatpush.bf16.msra.mxu0 %v1520
        %1951 = vmatpush.bf16.msra.mxu0 %v1504
        %1952 = vmatmul.bf16.gmra.mxu0 %v600
        %v1953 = vpop.f32.mrf.mxu0
        %v1954 = vadd.f32 %v1935, %v1953
        %v1955 = vpop.f32.mrf.mxu0
        %v1956 = vadd.f32 %v1937, %v1955
        %1957 = vmatmul.bf16.gmra.mxu0 %v602
        %v1958 = vpop.f32.mrf.mxu0
        %v1959 = vadd.f32 %v1940, %v1958
        %v1960 = vpop.f32.mrf.mxu0
        %v1961 = vadd.f32 %v1942, %v1960
        %1962 = vdwg.mxu0
        %1963 = vmatpush.bf16.msra.mxu0 %v1489
        %1964 = vmatpush.bf16.msra.mxu0 %v1473
        %1965 = vmatpush.bf16.msra.mxu0 %v1457
        %1966 = vmatpush.bf16.msra.mxu0 %v1441
        %1967 = vmatpush.bf16.msra.mxu0 %v1425
        %1968 = vmatpush.bf16.msra.mxu0 %v1409
        %1969 = vmatpush.bf16.msra.mxu0 %v1393
        %1970 = vmatpush.bf16.msra.mxu0 %v1377
        %1971 = vmatmul.bf16.gmra.mxu0 %v599
        %v1972 = vpop.f32.mrf.mxu0
        %v1973 = vadd.f32 0.0, %v1972
        %v1974 = vpop.f32.mrf.mxu0
        %v1975 = vadd.f32 0.0, %v1974
        %1976 = vmatmul.bf16.gmra.mxu0 %v601
        %v1977 = vpop.f32.mrf.mxu0
        %v1978 = vadd.f32 0.0, %v1977
        %v1979 = vpop.f32.mrf.mxu0
        %v1980 = vadd.f32 0.0, %v1979
        %1981 = vdwg.mxu0
        %1982 = vmatpush.bf16.msra.mxu0 %v1617
        %1983 = vmatpush.bf16.msra.mxu0 %v1601
        %1984 = vmatpush.bf16.msra.mxu0 %v1585
        %1985 = vmatpush.bf16.msra.mxu0 %v1569
        %1986 = vmatpush.bf16.msra.mxu0 %v1553
        %1987 = vmatpush.bf16.msra.mxu0 %v1537
        %1988 = vmatpush.bf16.msra.mxu0 %v1521
        %1989 = vmatpush.bf16.msra.mxu0 %v1505
        %1990 = vmatmul.bf16.gmra.mxu0 %v600
        %v1991 = vpop.f32.mrf.mxu0
        %v1992 = vadd.f32 %v1973, %v1991
        %v1993 = vpop.f32.mrf.mxu0
        %v1994 = vadd.f32 %v1975, %v1993
        %1995 = vmatmul.bf16.gmra.mxu0 %v602
        %v1996 = vpop.f32.mrf.mxu0
        %v1997 = vadd.f32 %v1978, %v1996
        %v1998 = vpop.f32.mrf.mxu0
        %v1999 = vadd.f32 %v1980, %v1998
        %2000 = vdwg.mxu0
        %2001 = vmatpush.bf16.msra.mxu0 %v1490
        %2002 = vmatpush.bf16.msra.mxu0 %v1474
        %2003 = vmatpush.bf16.msra.mxu0 %v1458
        %2004 = vmatpush.bf16.msra.mxu0 %v1442
        %2005 = vmatpush.bf16.msra.mxu0 %v1426
        %2006 = vmatpush.bf16.msra.mxu0 %v1410
        %2007 = vmatpush.bf16.msra.mxu0 %v1394
        %2008 = vmatpush.bf16.msra.mxu0 %v1378
        %2009 = vmatmul.bf16.gmra.mxu0 %v599
        %v2010 = vpop.f32.mrf.mxu0
        %v2011 = vadd.f32 0.0, %v2010
        %v2012 = vpop.f32.mrf.mxu0
        %v2013 = vadd.f32 0.0, %v2012
        %2014 = vmatmul.bf16.gmra.mxu0 %v601
        %v2015 = vpop.f32.mrf.mxu0
        %v2016 = vadd.f32 0.0, %v2015
        %v2017 = vpop.f32.mrf.mxu0
        %v2018 = vadd.f32 0.0, %v2017
        %2019 = vdwg.mxu0
        %2020 = vmatpush.bf16.msra.mxu0 %v1618
        %2021 = vmatpush.bf16.msra.mxu0 %v1602
        %2022 = vmatpush.bf16.msra.mxu0 %v1586
        %2023 = vmatpush.bf16.msra.mxu0 %v1570
        %2024 = vmatpush.bf16.msra.mxu0 %v1554
        %2025 = vmatpush.bf16.msra.mxu0 %v1538
        %2026 = vmatpush.bf16.msra.mxu0 %v1522
        %2027 = vmatpush.bf16.msra.mxu0 %v1506
        %2028 = vmatmul.bf16.gmra.mxu0 %v600
        %v2029 = vpop.f32.mrf.mxu0
        %v2030 = vadd.f32 %v2011, %v2029
        %v2031 = vpop.f32.mrf.mxu0
        %v2032 = vadd.f32 %v2013, %v2031
        %2033 = vmatmul.bf16.gmra.mxu0 %v602
        %v2034 = vpop.f32.mrf.mxu0
        %v2035 = vadd.f32 %v2016, %v2034
        %v2036 = vpop.f32.mrf.mxu0
        %v2037 = vadd.f32 %v2018, %v2036
        %2038 = vdwg.mxu0
        %2039 = vmatpush.bf16.msra.mxu0 %v1491
        %2040 = vmatpush.bf16.msra.mxu0 %v1475
        %2041 = vmatpush.bf16.msra.mxu0 %v1459
        %2042 = vmatpush.bf16.msra.mxu0 %v1443
        %2043 = vmatpush.bf16.msra.mxu0 %v1427
        %2044 = vmatpush.bf16.msra.mxu0 %v1411
        %2045 = vmatpush.bf16.msra.mxu0 %v1395
        %2046 = vmatpush.bf16.msra.mxu0 %v1379
        %2047 = vmatmul.bf16.gmra.mxu0 %v599
        %v2048 = vpop.f32.mrf.mxu0
        %v2049 = vadd.f32 0.0, %v2048
        %v2050 = vpop.f32.mrf.mxu0
        %v2051 = vadd.f32 0.0, %v2050
        %2052 = vmatmul.bf16.gmra.mxu0 %v601
        %v2053 = vpop.f32.mrf.mxu0
        %v2054 = vadd.f32 0.0, %v2053
        %v2055 = vpop.f32.mrf.mxu0
        %v2056 = vadd.f32 0.0, %v2055
        %2057 = vdwg.mxu0
        %2058 = vmatpush.bf16.msra.mxu0 %v1619
        %2059 = vmatpush.bf16.msra.mxu0 %v1603
        %2060 = vmatpush.bf16.msra.mxu0 %v1587
        %2061 = vmatpush.bf16.msra.mxu0 %v1571
        %2062 = vmatpush.bf16.msra.mxu0 %v1555
        %2063 = vmatpush.bf16.msra.mxu0 %v1539
        %2064 = vmatpush.bf16.msra.mxu0 %v1523
        %2065 = vmatpush.bf16.msra.mxu0 %v1507
        %2066 = vmatmul.bf16.gmra.mxu0 %v600
        %v2067 = vpop.f32.mrf.mxu0
        %v2068 = vadd.f32 %v2049, %v2067
        %v2069 = vpop.f32.mrf.mxu0
        %v2070 = vadd.f32 %v2051, %v2069
        %2071 = vmatmul.bf16.gmra.mxu0 %v602
        %v2072 = vpop.f32.mrf.mxu0
        %v2073 = vadd.f32 %v2054, %v2072
        %v2074 = vpop.f32.mrf.mxu0
        %v2075 = vadd.f32 %v2056, %v2074
        %2076 = vdwg.mxu0
        %2077 = vmatpush.bf16.msra.mxu0 %v1492
        %2078 = vmatpush.bf16.msra.mxu0 %v1476
        %2079 = vmatpush.bf16.msra.mxu0 %v1460
        %2080 = vmatpush.bf16.msra.mxu0 %v1444
        %2081 = vmatpush.bf16.msra.mxu0 %v1428
        %2082 = vmatpush.bf16.msra.mxu0 %v1412
        %2083 = vmatpush.bf16.msra.mxu0 %v1396
        %2084 = vmatpush.bf16.msra.mxu0 %v1380
        %2085 = vmatmul.bf16.gmra.mxu0 %v599
        %v2086 = vpop.f32.mrf.mxu0
        %v2087 = vadd.f32 0.0, %v2086
        %v2088 = vpop.f32.mrf.mxu0
        %v2089 = vadd.f32 0.0, %v2088
        %2090 = vmatmul.bf16.gmra.mxu0 %v601
        %v2091 = vpop.f32.mrf.mxu0
        %v2092 = vadd.f32 0.0, %v2091
        %v2093 = vpop.f32.mrf.mxu0
        %v2094 = vadd.f32 0.0, %v2093
        %2095 = vdwg.mxu0
        %2096 = vmatpush.bf16.msra.mxu0 %v1620
        %2097 = vmatpush.bf16.msra.mxu0 %v1604
        %2098 = vmatpush.bf16.msra.mxu0 %v1588
        %2099 = vmatpush.bf16.msra.mxu0 %v1572
        %2100 = vmatpush.bf16.msra.mxu0 %v1556
        %2101 = vmatpush.bf16.msra.mxu0 %v1540
        %2102 = vmatpush.bf16.msra.mxu0 %v1524
        %2103 = vmatpush.bf16.msra.mxu0 %v1508
        %2104 = vmatmul.bf16.gmra.mxu0 %v600
        %v2105 = vpop.f32.mrf.mxu0
        %v2106 = vadd.f32 %v2087, %v2105
        %v2107 = vpop.f32.mrf.mxu0
        %v2108 = vadd.f32 %v2089, %v2107
        %2109 = vmatmul.bf16.gmra.mxu0 %v602
        %v2110 = vpop.f32.mrf.mxu0
        %v2111 = vadd.f32 %v2092, %v2110
        %v2112 = vpop.f32.mrf.mxu0
        %v2113 = vadd.f32 %v2094, %v2112
        %2114 = vdwg.mxu0
        %2115 = vmatpush.bf16.msra.mxu0 %v1493
        %2116 = vmatpush.bf16.msra.mxu0 %v1477
        %2117 = vmatpush.bf16.msra.mxu0 %v1461
        %2118 = vmatpush.bf16.msra.mxu0 %v1445
        %2119 = vmatpush.bf16.msra.mxu0 %v1429
        %2120 = vmatpush.bf16.msra.mxu0 %v1413
        %2121 = vmatpush.bf16.msra.mxu0 %v1397
        %2122 = vmatpush.bf16.msra.mxu0 %v1381
        %2123 = vmatmul.bf16.gmra.mxu0 %v599
        %v2124 = vpop.f32.mrf.mxu0
        %v2125 = vadd.f32 0.0, %v2124
        %v2126 = vpop.f32.mrf.mxu0
        %v2127 = vadd.f32 0.0, %v2126
        %2128 = vmatmul.bf16.gmra.mxu0 %v601
        %v2129 = vpop.f32.mrf.mxu0
        %v2130 = vadd.f32 0.0, %v2129
        %v2131 = vpop.f32.mrf.mxu0
        %v2132 = vadd.f32 0.0, %v2131
        %2133 = vdwg.mxu0
        %2134 = vmatpush.bf16.msra.mxu0 %v1621
        %2135 = vmatpush.bf16.msra.mxu0 %v1605
        %2136 = vmatpush.bf16.msra.mxu0 %v1589
        %2137 = vmatpush.bf16.msra.mxu0 %v1573
        %2138 = vmatpush.bf16.msra.mxu0 %v1557
        %2139 = vmatpush.bf16.msra.mxu0 %v1541
        %2140 = vmatpush.bf16.msra.mxu0 %v1525
        %2141 = vmatpush.bf16.msra.mxu0 %v1509
        %2142 = vmatmul.bf16.gmra.mxu0 %v600
        %v2143 = vpop.f32.mrf.mxu0
        %v2144 = vadd.f32 %v2125, %v2143
        %v2145 = vpop.f32.mrf.mxu0
        %v2146 = vadd.f32 %v2127, %v2145
        %2147 = vmatmul.bf16.gmra.mxu0 %v602
        %v2148 = vpop.f32.mrf.mxu0
        %v2149 = vadd.f32 %v2130, %v2148
        %v2150 = vpop.f32.mrf.mxu0
        %v2151 = vadd.f32 %v2132, %v2150
        %2152 = vdwg.mxu0
        %2153 = vmatpush.bf16.msra.mxu0 %v1494
        %2154 = vmatpush.bf16.msra.mxu0 %v1478
        %2155 = vmatpush.bf16.msra.mxu0 %v1462
        %2156 = vmatpush.bf16.msra.mxu0 %v1446
        %2157 = vmatpush.bf16.msra.mxu0 %v1430
        %2158 = vmatpush.bf16.msra.mxu0 %v1414
        %2159 = vmatpush.bf16.msra.mxu0 %v1398
        %2160 = vmatpush.bf16.msra.mxu0 %v1382
        %2161 = vmatmul.bf16.gmra.mxu0 %v599
        %v2162 = vpop.f32.mrf.mxu0
        %v2163 = vadd.f32 0.0, %v2162
        %v2164 = vpop.f32.mrf.mxu0
        %v2165 = vadd.f32 0.0, %v2164
        %2166 = vmatmul.bf16.gmra.mxu0 %v601
        %v2167 = vpop.f32.mrf.mxu0
        %v2168 = vadd.f32 0.0, %v2167
        %v2169 = vpop.f32.mrf.mxu0
        %v2170 = vadd.f32 0.0, %v2169
        %2171 = vdwg.mxu0
        %2172 = vmatpush.bf16.msra.mxu0 %v1622
        %2173 = vmatpush.bf16.msra.mxu0 %v1606
        %2174 = vmatpush.bf16.msra.mxu0 %v1590
        %2175 = vmatpush.bf16.msra.mxu0 %v1574
        %2176 = vmatpush.bf16.msra.mxu0 %v1558
        %2177 = vmatpush.bf16.msra.mxu0 %v1542
        %2178 = vmatpush.bf16.msra.mxu0 %v1526
        %2179 = vmatpush.bf16.msra.mxu0 %v1510
        %2180 = vmatmul.bf16.gmra.mxu0 %v600
        %v2181 = vpop.f32.mrf.mxu0
        %v2182 = vadd.f32 %v2163, %v2181
        %v2183 = vpop.f32.mrf.mxu0
        %v2184 = vadd.f32 %v2165, %v2183
        %2185 = vmatmul.bf16.gmra.mxu0 %v602
        %v2186 = vpop.f32.mrf.mxu0
        %v2187 = vadd.f32 %v2168, %v2186
        %v2188 = vpop.f32.mrf.mxu0
        %v2189 = vadd.f32 %v2170, %v2188
        %2190 = vdwg.mxu0
        %2191 = vmatpush.bf16.msra.mxu0 %v1495
        %2192 = vmatpush.bf16.msra.mxu0 %v1479
        %2193 = vmatpush.bf16.msra.mxu0 %v1463
        %2194 = vmatpush.bf16.msra.mxu0 %v1447
        %2195 = vmatpush.bf16.msra.mxu0 %v1431
        %2196 = vmatpush.bf16.msra.mxu0 %v1415
        %2197 = vmatpush.bf16.msra.mxu0 %v1399
        %2198 = vmatpush.bf16.msra.mxu0 %v1383
        %2199 = vmatmul.bf16.gmra.mxu0 %v599
        %v2200 = vpop.f32.mrf.mxu0
        %v2201 = vadd.f32 0.0, %v2200
        %v2202 = vpop.f32.mrf.mxu0
        %v2203 = vadd.f32 0.0, %v2202
        %2204 = vmatmul.bf16.gmra.mxu0 %v601
        %v2205 = vpop.f32.mrf.mxu0
        %v2206 = vadd.f32 0.0, %v2205
        %v2207 = vpop.f32.mrf.mxu0
        %v2208 = vadd.f32 0.0, %v2207
        %2209 = vdwg.mxu0
        %2210 = vmatpush.bf16.msra.mxu0 %v1623
        %2211 = vmatpush.bf16.msra.mxu0 %v1607
        %2212 = vmatpush.bf16.msra.mxu0 %v1591
        %2213 = vmatpush.bf16.msra.mxu0 %v1575
        %2214 = vmatpush.bf16.msra.mxu0 %v1559
        %2215 = vmatpush.bf16.msra.mxu0 %v1543
        %2216 = vmatpush.bf16.msra.mxu0 %v1527
        %2217 = vmatpush.bf16.msra.mxu0 %v1511
        %2218 = vmatmul.bf16.gmra.mxu0 %v600
        %v2219 = vpop.f32.mrf.mxu0
        %v2220 = vadd.f32 %v2201, %v2219
        %v2221 = vpop.f32.mrf.mxu0
        %v2222 = vadd.f32 %v2203, %v2221
        %2223 = vmatmul.bf16.gmra.mxu0 %v602
        %v2224 = vpop.f32.mrf.mxu0
        %v2225 = vadd.f32 %v2206, %v2224
        %v2226 = vpop.f32.mrf.mxu0
        %v2227 = vadd.f32 %v2208, %v2226
        %2228 = vdwg.mxu0
        %2229 = vmatpush.bf16.msra.mxu0 %v1496
        %2230 = vmatpush.bf16.msra.mxu0 %v1480
        %2231 = vmatpush.bf16.msra.mxu0 %v1464
        %2232 = vmatpush.bf16.msra.mxu0 %v1448
        %2233 = vmatpush.bf16.msra.mxu0 %v1432
        %2234 = vmatpush.bf16.msra.mxu0 %v1416
        %2235 = vmatpush.bf16.msra.mxu0 %v1400
        %2236 = vmatpush.bf16.msra.mxu0 %v1384
        %2237 = vmatmul.bf16.gmra.mxu0 %v599
        %v2238 = vpop.f32.mrf.mxu0
        %v2239 = vadd.f32 0.0, %v2238
        %v2240 = vpop.f32.mrf.mxu0
        %v2241 = vadd.f32 0.0, %v2240
        %2242 = vmatmul.bf16.gmra.mxu0 %v601
        %v2243 = vpop.f32.mrf.mxu0
        %v2244 = vadd.f32 0.0, %v2243
        %v2245 = vpop.f32.mrf.mxu0
        %v2246 = vadd.f32 0.0, %v2245
        %2247 = vdwg.mxu0
        %2248 = vmatpush.bf16.msra.mxu0 %v1624
        %2249 = vmatpush.bf16.msra.mxu0 %v1608
        %2250 = vmatpush.bf16.msra.mxu0 %v1592
        %2251 = vmatpush.bf16.msra.mxu0 %v1576
        %2252 = vmatpush.bf16.msra.mxu0 %v1560
        %2253 = vmatpush.bf16.msra.mxu0 %v1544
        %2254 = vmatpush.bf16.msra.mxu0 %v1528
        %2255 = vmatpush.bf16.msra.mxu0 %v1512
        %2256 = vmatmul.bf16.gmra.mxu0 %v600
        %v2257 = vpop.f32.mrf.mxu0
        %v2258 = vadd.f32 %v2239, %v2257
        %v2259 = vpop.f32.mrf.mxu0
        %v2260 = vadd.f32 %v2241, %v2259
        %2261 = vmatmul.bf16.gmra.mxu0 %v602
        %v2262 = vpop.f32.mrf.mxu0
        %v2263 = vadd.f32 %v2244, %v2262
        %v2264 = vpop.f32.mrf.mxu0
        %v2265 = vadd.f32 %v2246, %v2264
        %2266 = vdwg.mxu0
        %2267 = vmatpush.bf16.msra.mxu0 %v1497
        %2268 = vmatpush.bf16.msra.mxu0 %v1481
        %2269 = vmatpush.bf16.msra.mxu0 %v1465
        %2270 = vmatpush.bf16.msra.mxu0 %v1449
        %2271 = vmatpush.bf16.msra.mxu0 %v1433
        %2272 = vmatpush.bf16.msra.mxu0 %v1417
        %2273 = vmatpush.bf16.msra.mxu0 %v1401
        %2274 = vmatpush.bf16.msra.mxu0 %v1385
        %2275 = vmatmul.bf16.gmra.mxu0 %v599
        %v2276 = vpop.f32.mrf.mxu0
        %v2277 = vadd.f32 0.0, %v2276
        %v2278 = vpop.f32.mrf.mxu0
        %v2279 = vadd.f32 0.0, %v2278
        %2280 = vmatmul.bf16.gmra.mxu0 %v601
        %v2281 = vpop.f32.mrf.mxu0
        %v2282 = vadd.f32 0.0, %v2281
        %v2283 = vpop.f32.mrf.mxu0
        %v2284 = vadd.f32 0.0, %v2283
        %2285 = vdwg.mxu0
        %2286 = vmatpush.bf16.msra.mxu0 %v1625
        %2287 = vmatpush.bf16.msra.mxu0 %v1609
        %2288 = vmatpush.bf16.msra.mxu0 %v1593
        %2289 = vmatpush.bf16.msra.mxu0 %v1577
        %2290 = vmatpush.bf16.msra.mxu0 %v1561
        %2291 = vmatpush.bf16.msra.mxu0 %v1545
        %2292 = vmatpush.bf16.msra.mxu0 %v1529
        %2293 = vmatpush.bf16.msra.mxu0 %v1513
        %2294 = vmatmul.bf16.gmra.mxu0 %v600
        %v2295 = vpop.f32.mrf.mxu0
        %v2296 = vadd.f32 %v2277, %v2295
        %v2297 = vpop.f32.mrf.mxu0
        %v2298 = vadd.f32 %v2279, %v2297
        %2299 = vmatmul.bf16.gmra.mxu0 %v602
        %v2300 = vpop.f32.mrf.mxu0
        %v2301 = vadd.f32 %v2282, %v2300
        %v2302 = vpop.f32.mrf.mxu0
        %v2303 = vadd.f32 %v2284, %v2302
        %2304 = vdwg.mxu0
        %2305 = vmatpush.bf16.msra.mxu0 %v1498
        %2306 = vmatpush.bf16.msra.mxu0 %v1482
        %2307 = vmatpush.bf16.msra.mxu0 %v1466
        %2308 = vmatpush.bf16.msra.mxu0 %v1450
        %2309 = vmatpush.bf16.msra.mxu0 %v1434
        %2310 = vmatpush.bf16.msra.mxu0 %v1418
        %2311 = vmatpush.bf16.msra.mxu0 %v1402
        %2312 = vmatpush.bf16.msra.mxu0 %v1386
        %2313 = vmatmul.bf16.gmra.mxu0 %v599
        %v2314 = vpop.f32.mrf.mxu0
        %v2315 = vadd.f32 0.0, %v2314
        %v2316 = vpop.f32.mrf.mxu0
        %v2317 = vadd.f32 0.0, %v2316
        %2318 = vmatmul.bf16.gmra.mxu0 %v601
        %v2319 = vpop.f32.mrf.mxu0
        %v2320 = vadd.f32 0.0, %v2319
        %v2321 = vpop.f32.mrf.mxu0
        %v2322 = vadd.f32 0.0, %v2321
        %2323 = vdwg.mxu0
        %2324 = vmatpush.bf16.msra.mxu0 %v1626
        %2325 = vmatpush.bf16.msra.mxu0 %v1610
        %2326 = vmatpush.bf16.msra.mxu0 %v1594
        %2327 = vmatpush.bf16.msra.mxu0 %v1578
        %2328 = vmatpush.bf16.msra.mxu0 %v1562
        %2329 = vmatpush.bf16.msra.mxu0 %v1546
        %2330 = vmatpush.bf16.msra.mxu0 %v1530
        %2331 = vmatpush.bf16.msra.mxu0 %v1514
        %2332 = vmatmul.bf16.gmra.mxu0 %v600
        %v2333 = vpop.f32.mrf.mxu0
        %v2334 = vadd.f32 %v2315, %v2333
        %v2335 = vpop.f32.mrf.mxu0
        %v2336 = vadd.f32 %v2317, %v2335
        %2337 = vmatmul.bf16.gmra.mxu0 %v602
        %v2338 = vpop.f32.mrf.mxu0
        %v2339 = vadd.f32 %v2320, %v2338
        %v2340 = vpop.f32.mrf.mxu0
        %v2341 = vadd.f32 %v2322, %v2340
        %2342 = vdwg.mxu0
        %2343 = vmatpush.bf16.msra.mxu0 %v1499
        %2344 = vmatpush.bf16.msra.mxu0 %v1483
        %2345 = vmatpush.bf16.msra.mxu0 %v1467
        %2346 = vmatpush.bf16.msra.mxu0 %v1451
        %2347 = vmatpush.bf16.msra.mxu0 %v1435
        %2348 = vmatpush.bf16.msra.mxu0 %v1419
        %2349 = vmatpush.bf16.msra.mxu0 %v1403
        %2350 = vmatpush.bf16.msra.mxu0 %v1387
        %2351 = vmatmul.bf16.gmra.mxu0 %v599
        %v2352 = vpop.f32.mrf.mxu0
        %v2353 = vadd.f32 0.0, %v2352
        %v2354 = vpop.f32.mrf.mxu0
        %v2355 = vadd.f32 0.0, %v2354
        %2356 = vmatmul.bf16.gmra.mxu0 %v601
        %v2357 = vpop.f32.mrf.mxu0
        %v2358 = vadd.f32 0.0, %v2357
        %v2359 = vpop.f32.mrf.mxu0
        %v2360 = vadd.f32 0.0, %v2359
        %2361 = vdwg.mxu0
        %2362 = vmatpush.bf16.msra.mxu0 %v1627
        %2363 = vmatpush.bf16.msra.mxu0 %v1611
        %2364 = vmatpush.bf16.msra.mxu0 %v1595
        %2365 = vmatpush.bf16.msra.mxu0 %v1579
        %2366 = vmatpush.bf16.msra.mxu0 %v1563
        %2367 = vmatpush.bf16.msra.mxu0 %v1547
        %2368 = vmatpush.bf16.msra.mxu0 %v1531
        %2369 = vmatpush.bf16.msra.mxu0 %v1515
        %2370 = vmatmul.bf16.gmra.mxu0 %v600
        %v2371 = vpop.f32.mrf.mxu0
        %v2372 = vadd.f32 %v2353, %v2371
        %v2373 = vpop.f32.mrf.mxu0
        %v2374 = vadd.f32 %v2355, %v2373
        %2375 = vmatmul.bf16.gmra.mxu0 %v602
        %v2376 = vpop.f32.mrf.mxu0
        %v2377 = vadd.f32 %v2358, %v2376
        %v2378 = vpop.f32.mrf.mxu0
        %v2379 = vadd.f32 %v2360, %v2378
        %2380 = vdwg.mxu0
        %2381 = vmatpush.bf16.msra.mxu0 %v1500
        %2382 = vmatpush.bf16.msra.mxu0 %v1484
        %2383 = vmatpush.bf16.msra.mxu0 %v1468
        %2384 = vmatpush.bf16.msra.mxu0 %v1452
        %2385 = vmatpush.bf16.msra.mxu0 %v1436
        %2386 = vmatpush.bf16.msra.mxu0 %v1420
        %2387 = vmatpush.bf16.msra.mxu0 %v1404
        %2388 = vmatpush.bf16.msra.mxu0 %v1388
        %2389 = vmatmul.bf16.gmra.mxu0 %v599
        %v2390 = vpop.f32.mrf.mxu0
        %v2391 = vadd.f32 0.0, %v2390
        %v2392 = vpop.f32.mrf.mxu0
        %v2393 = vadd.f32 0.0, %v2392
        %2394 = vmatmul.bf16.gmra.mxu0 %v601
        %v2395 = vpop.f32.mrf.mxu0
        %v2396 = vadd.f32 0.0, %v2395
        %v2397 = vpop.f32.mrf.mxu0
        %v2398 = vadd.f32 0.0, %v2397
        %2399 = vdwg.mxu0
        %2400 = vmatpush.bf16.msra.mxu0 %v1628
        %2401 = vmatpush.bf16.msra.mxu0 %v1612
        %2402 = vmatpush.bf16.msra.mxu0 %v1596
        %2403 = vmatpush.bf16.msra.mxu0 %v1580
        %2404 = vmatpush.bf16.msra.mxu0 %v1564
        %2405 = vmatpush.bf16.msra.mxu0 %v1548
        %2406 = vmatpush.bf16.msra.mxu0 %v1532
        %2407 = vmatpush.bf16.msra.mxu0 %v1516
        %2408 = vmatmul.bf16.gmra.mxu0 %v600
        %v2409 = vpop.f32.mrf.mxu0
        %v2410 = vadd.f32 %v2391, %v2409
        %v2411 = vpop.f32.mrf.mxu0
        %v2412 = vadd.f32 %v2393, %v2411
        %2413 = vmatmul.bf16.gmra.mxu0 %v602
        %v2414 = vpop.f32.mrf.mxu0
        %v2415 = vadd.f32 %v2396, %v2414
        %v2416 = vpop.f32.mrf.mxu0
        %v2417 = vadd.f32 %v2398, %v2416
        %2418 = vdwg.mxu0
        %2419 = vmatpush.bf16.msra.mxu0 %v1501
        %2420 = vmatpush.bf16.msra.mxu0 %v1485
        %2421 = vmatpush.bf16.msra.mxu0 %v1469
        %2422 = vmatpush.bf16.msra.mxu0 %v1453
        %2423 = vmatpush.bf16.msra.mxu0 %v1437
        %2424 = vmatpush.bf16.msra.mxu0 %v1421
        %2425 = vmatpush.bf16.msra.mxu0 %v1405
        %2426 = vmatpush.bf16.msra.mxu0 %v1389
        %2427 = vmatmul.bf16.gmra.mxu0 %v599
        %v2428 = vpop.f32.mrf.mxu0
        %v2429 = vadd.f32 0.0, %v2428
        %v2430 = vpop.f32.mrf.mxu0
        %v2431 = vadd.f32 0.0, %v2430
        %2432 = vmatmul.bf16.gmra.mxu0 %v601
        %v2433 = vpop.f32.mrf.mxu0
        %v2434 = vadd.f32 0.0, %v2433
        %v2435 = vpop.f32.mrf.mxu0
        %v2436 = vadd.f32 0.0, %v2435
        %2437 = vdwg.mxu0
        %2438 = vmatpush.bf16.msra.mxu0 %v1629
        %2439 = vmatpush.bf16.msra.mxu0 %v1613
        %2440 = vmatpush.bf16.msra.mxu0 %v1597
        %2441 = vmatpush.bf16.msra.mxu0 %v1581
        %2442 = vmatpush.bf16.msra.mxu0 %v1565
        %2443 = vmatpush.bf16.msra.mxu0 %v1549
        %2444 = vmatpush.bf16.msra.mxu0 %v1533
        %2445 = vmatpush.bf16.msra.mxu0 %v1517
        %2446 = vmatmul.bf16.gmra.mxu0 %v600
        %v2447 = vpop.f32.mrf.mxu0
        %v2448 = vadd.f32 %v2429, %v2447
        %v2449 = vpop.f32.mrf.mxu0
        %v2450 = vadd.f32 %v2431, %v2449
        %2451 = vmatmul.bf16.gmra.mxu0 %v602
        %v2452 = vpop.f32.mrf.mxu0
        %v2453 = vadd.f32 %v2434, %v2452
        %v2454 = vpop.f32.mrf.mxu0
        %v2455 = vadd.f32 %v2436, %v2454
        %2456 = vdwg.mxu0
        %2457 = vmatpush.bf16.msra.mxu0 %v1502
        %2458 = vmatpush.bf16.msra.mxu0 %v1486
        %2459 = vmatpush.bf16.msra.mxu0 %v1470
        %2460 = vmatpush.bf16.msra.mxu0 %v1454
        %2461 = vmatpush.bf16.msra.mxu0 %v1438
        %2462 = vmatpush.bf16.msra.mxu0 %v1422
        %2463 = vmatpush.bf16.msra.mxu0 %v1406
        %2464 = vmatpush.bf16.msra.mxu0 %v1390
        %2465 = vmatmul.bf16.gmra.mxu0 %v599
        %v2466 = vpop.f32.mrf.mxu0
        %v2467 = vadd.f32 0.0, %v2466
        %v2468 = vpop.f32.mrf.mxu0
        %v2469 = vadd.f32 0.0, %v2468
        %2470 = vmatmul.bf16.gmra.mxu0 %v601
        %v2471 = vpop.f32.mrf.mxu0
        %v2472 = vadd.f32 0.0, %v2471
        %v2473 = vpop.f32.mrf.mxu0
        %v2474 = vadd.f32 0.0, %v2473
        %2475 = vdwg.mxu0
        %2476 = vmatpush.bf16.msra.mxu0 %v1630
        %2477 = vmatpush.bf16.msra.mxu0 %v1614
        %2478 = vmatpush.bf16.msra.mxu0 %v1598
        %2479 = vmatpush.bf16.msra.mxu0 %v1582
        %2480 = vmatpush.bf16.msra.mxu0 %v1566
        %2481 = vmatpush.bf16.msra.mxu0 %v1550
        %2482 = vmatpush.bf16.msra.mxu0 %v1534
        %2483 = vmatpush.bf16.msra.mxu0 %v1518
        %2484 = vmatmul.bf16.gmra.mxu0 %v600
        %v2485 = vpop.f32.mrf.mxu0
        %v2486 = vadd.f32 %v2467, %v2485
        %v2487 = vpop.f32.mrf.mxu0
        %v2488 = vadd.f32 %v2469, %v2487
        %2489 = vmatmul.bf16.gmra.mxu0 %v602
        %v2490 = vpop.f32.mrf.mxu0
        %v2491 = vadd.f32 %v2472, %v2490
        %v2492 = vpop.f32.mrf.mxu0
        %v2493 = vadd.f32 %v2474, %v2492
        %2494 = vdwg.mxu0
        %s2495 = sshra.s32 %s326, 3
        %s2496 = sand.u32 %s326, 7
        %s2497 = smul.u32 %s2495, 16
        %s2498 = smul.addr %s2497, 8
        %s2499 = scalar_lea.vmem [#allocation2], %s2498
        %2500 = vst [vmem:[%s2499] sm:$0xff] %v1916
        %2501 = vst [vmem:[%s2499 + $0x8] sm:$0xff] %v1954
        %2502 = vst [vmem:[%s2499 + $0x10] sm:$0xff] %v1992
        %2503 = vst [vmem:[%s2499 + $0x18] sm:$0xff] %v2030
        %2504 = vst [vmem:[%s2499 + $0x20] sm:$0xff] %v2068
        %2505 = vst [vmem:[%s2499 + $0x28] sm:$0xff] %v2106
        %2506 = vst [vmem:[%s2499 + $0x30] sm:$0xff] %v2144
        %2507 = vst [vmem:[%s2499 + $0x38] sm:$0xff] %v2182
        %2508 = vst [vmem:[%s2499 + $0x40] sm:$0xff] %v2220
        %2509 = vst [vmem:[%s2499 + $0x48] sm:$0xff] %v2258
        %2510 = vst [vmem:[%s2499 + $0x50] sm:$0xff] %v2296
        %2511 = vst [vmem:[%s2499 + $0x58] sm:$0xff] %v2334
        %2512 = vst [vmem:[%s2499 + $0x60] sm:$0xff] %v2372
        %2513 = vst [vmem:[%s2499 + $0x68] sm:$0xff] %v2410
        %2514 = vst [vmem:[%s2499 + $0x70] sm:$0xff] %v2448
        %2515 = vst [vmem:[%s2499 + $0x78] sm:$0xff] %v2486
        %2516 = vst [vmem:[%s2499 + $0x80] sm:$0xff] %v1918
        %2517 = vst [vmem:[%s2499 + $0x88] sm:$0xff] %v1956
        %2518 = vst [vmem:[%s2499 + $0x90] sm:$0xff] %v1994
        %2519 = vst [vmem:[%s2499 + $0x98] sm:$0xff] %v2032
        %2520 = vst [vmem:[%s2499 + $0xa0] sm:$0xff] %v2070
        %2521 = vst [vmem:[%s2499 + $0xa8] sm:$0xff] %v2108
        %2522 = vst [vmem:[%s2499 + $0xb0] sm:$0xff] %v2146
        %2523 = vst [vmem:[%s2499 + $0xb8] sm:$0xff] %v2184
        %2524 = vst [vmem:[%s2499 + $0xc0] sm:$0xff] %v2222
        %2525 = vst [vmem:[%s2499 + $0xc8] sm:$0xff] %v2260
        %2526 = vst [vmem:[%s2499 + $0xd0] sm:$0xff] %v2298
        %2527 = vst [vmem:[%s2499 + $0xd8] sm:$0xff] %v2336
        %2528 = vst [vmem:[%s2499 + $0xe0] sm:$0xff] %v2374
        %2529 = vst [vmem:[%s2499 + $0xe8] sm:$0xff] %v2412
        %2530 = vst [vmem:[%s2499 + $0xf0] sm:$0xff] %v2450
        %2531 = vst [vmem:[%s2499 + $0xf8] sm:$0xff] %v2488
        %2532 = vst [vmem:[%s2499 + $0x100] sm:$0xff] %v1921
        %2533 = vst [vmem:[%s2499 + $0x108] sm:$0xff] %v1959
        %2534 = vst [vmem:[%s2499 + $0x110] sm:$0xff] %v1997
        %2535 = vst [vmem:[%s2499 + $0x118] sm:$0xff] %v2035
        %2536 = vst [vmem:[%s2499 + $0x120] sm:$0xff] %v2073
        %2537 = vst [vmem:[%s2499 + $0x128] sm:$0xff] %v2111
        %2538 = vst [vmem:[%s2499 + $0x130] sm:$0xff] %v2149
        %2539 = vst [vmem:[%s2499 + $0x138] sm:$0xff] %v2187
        %2540 = vst [vmem:[%s2499 + $0x140] sm:$0xff] %v2225
        %2541 = vst [vmem:[%s2499 + $0x148] sm:$0xff] %v2263
        %2542 = vst [vmem:[%s2499 + $0x150] sm:$0xff] %v2301
        %2543 = vst [vmem:[%s2499 + $0x158] sm:$0xff] %v2339
        %2544 = vst [vmem:[%s2499 + $0x160] sm:$0xff] %v2377
        %2545 = vst [vmem:[%s2499 + $0x168] sm:$0xff] %v2415
        %2546 = vst [vmem:[%s2499 + $0x170] sm:$0xff] %v2453
        %2547 = vst [vmem:[%s2499 + $0x178] sm:$0xff] %v2491
        %2548 = vst [vmem:[%s2499 + $0x180] sm:$0xff] %v1923
        %2549 = vst [vmem:[%s2499 + $0x188] sm:$0xff] %v1961
        %2550 = vst [vmem:[%s2499 + $0x190] sm:$0xff] %v1999
        %2551 = vst [vmem:[%s2499 + $0x198] sm:$0xff] %v2037
        %2552 = vst [vmem:[%s2499 + $0x1a0] sm:$0xff] %v2075
        %2553 = vst [vmem:[%s2499 + $0x1a8] sm:$0xff] %v2113
        %2554 = vst [vmem:[%s2499 + $0x1b0] sm:$0xff] %v2151
        %2555 = vst [vmem:[%s2499 + $0x1b8] sm:$0xff] %v2189
        %2556 = vst [vmem:[%s2499 + $0x1c0] sm:$0xff] %v2227
        %2557 = vst [vmem:[%s2499 + $0x1c8] sm:$0xff] %v2265
        %2558 = vst [vmem:[%s2499 + $0x1d0] sm:$0xff] %v2303
        %2559 = vst [vmem:[%s2499 + $0x1d8] sm:$0xff] %v2341
        %2560 = vst [vmem:[%s2499 + $0x1e0] sm:$0xff] %v2379
        %2561 = vst [vmem:[%s2499 + $0x1e8] sm:$0xff] %v2417
        %2562 = vst [vmem:[%s2499 + $0x1f0] sm:$0xff] %v2455
        %2563 = vst [vmem:[%s2499 + $0x1f8] sm:$0xff] %v2493
        %p2564 = scmp.eq.s32.totalorder %s30, 0
        // Predicated region
        $region53: #{tpu_custom_call.1} parent=35 // pred_check
          %p2565 = pneg %p2564
        $region54: #{tpu_custom_call.1} parent=35 // pred_check_branch
          %2567 = sbr.rel (%p2565) target = $region56
        $region55: #{tpu_custom_call.1} parent=35 // pred_region
          %v2568 = vld [vmem:[#allocation2] sm:$0xff]
          %v2569 = vld [vmem:[#allocation2 + $0x80] sm:$0xff]
          %v2570 = vld [vmem:[#allocation2 + $0x100] sm:$0xff]
          %v2571 = vld [vmem:[#allocation2 + $0x180] sm:$0xff]
          %v2572 = vadd.f32 %v2568, %v2569
          %v2573 = vadd.f32 %v2572, %v2570
          %v2574 = vadd.f32 %v2573, %v2571
          %v2575 = vrot.slane %v2574, 4
          %v2576 = vadd.f32 %v2574, %v2575
          %v2577 = vrot.slane %v2576, 2
          %v2578 = vadd.f32 %v2576, %v2577
          %v2579 = vrot.slane %v2578, 1
          %v2580 = vadd.f32 %v2578, %v2579
          %v2581 = vadd.f32 %v2580, 0.0
          %v2582 = vld [vmem:[#allocation2 + $0x8] sm:$0xff]
          %v2583 = vld [vmem:[#allocation2 + $0x88] sm:$0xff]
          %v2584 = vld [vmem:[#allocation2 + $0x108] sm:$0xff]
          %v2585 = vld [vmem:[#allocation2 + $0x188] sm:$0xff]
          %v2586 = vadd.f32 %v2582, %v2583
          %v2587 = vadd.f32 %v2586, %v2584
          %v2588 = vadd.f32 %v2587, %v2585
          %v2589 = vrot.slane %v2588, 4
          %v2590 = vadd.f32 %v2588, %v2589
          %v2591 = vrot.slane %v2590, 2
          %v2592 = vadd.f32 %v2590, %v2591
          %v2593 = vrot.slane %v2592, 1
          %v2594 = vadd.f32 %v2592, %v2593
          %v2595 = vadd.f32 %v2581, %v2594
          %v2596 = vld [vmem:[#allocation2 + $0x10] sm:$0xff]
          %v2597 = vld [vmem:[#allocation2 + $0x90] sm:$0xff]
          %v2598 = vld [vmem:[#allocation2 + $0x110] sm:$0xff]
          %v2599 = vld [vmem:[#allocation2 + $0x190] sm:$0xff]
          %v2600 = vadd.f32 %v2596, %v2597
          %v2601 = vadd.f32 %v2600, %v2598
          %v2602 = vadd.f32 %v2601, %v2599
          %v2603 = vrot.slane %v2602, 4
          %v2604 = vadd.f32 %v2602, %v2603
          %v2605 = vrot.slane %v2604, 2
          %v2606 = vadd.f32 %v2604, %v2605
          %v2607 = vrot.slane %v2606, 1
          %v2608 = vadd.f32 %v2606, %v2607
          %v2609 = vadd.f32 %v2595, %v2608
          %v2610 = vld [vmem:[#allocation2 + $0x18] sm:$0xff]
          %v2611 = vld [vmem:[#allocation2 + $0x98] sm:$0xff]
          %v2612 = vld [vmem:[#allocation2 + $0x118] sm:$0xff]
          %v2613 = vld [vmem:[#allocation2 + $0x198] sm:$0xff]
          %v2614 = vadd.f32 %v2610, %v2611
          %v2615 = vadd.f32 %v2614, %v2612
          %v2616 = vadd.f32 %v2615, %v2613
          %v2617 = vrot.slane %v2616, 4
          %v2618 = vadd.f32 %v2616, %v2617
          %v2619 = vrot.slane %v2618, 2
          %v2620 = vadd.f32 %v2618, %v2619
          %v2621 = vrot.slane %v2620, 1
          %v2622 = vadd.f32 %v2620, %v2621
          %v2623 = vadd.f32 %v2609, %v2622
          %v2624 = vld [vmem:[#allocation2 + $0x20] sm:$0xff]
          %v2625 = vld [vmem:[#allocation2 + $0xa0] sm:$0xff]
          %v2626 = vld [vmem:[#allocation2 + $0x120] sm:$0xff]
          %v2627 = vld [vmem:[#allocation2 + $0x1a0] sm:$0xff]
          %v2628 = vadd.f32 %v2624, %v2625
          %v2629 = vadd.f32 %v2628, %v2626
          %v2630 = vadd.f32 %v2629, %v2627
          %v2631 = vrot.slane %v2630, 4
          %v2632 = vadd.f32 %v2630, %v2631
          %v2633 = vrot.slane %v2632, 2
          %v2634 = vadd.f32 %v2632, %v2633
          %v2635 = vrot.slane %v2634, 1
          %v2636 = vadd.f32 %v2634, %v2635
          %v2637 = vadd.f32 %v2623, %v2636
          %v2638 = vld [vmem:[#allocation2 + $0x28] sm:$0xff]
          %v2639 = vld [vmem:[#allocation2 + $0xa8] sm:$0xff]
          %v2640 = vld [vmem:[#allocation2 + $0x128] sm:$0xff]
          %v2641 = vld [vmem:[#allocation2 + $0x1a8] sm:$0xff]
          %v2642 = vadd.f32 %v2638, %v2639
          %v2643 = vadd.f32 %v2642, %v2640
          %v2644 = vadd.f32 %v2643, %v2641
          %v2645 = vrot.slane %v2644, 4
          %v2646 = vadd.f32 %v2644, %v2645
          %v2647 = vrot.slane %v2646, 2
          %v2648 = vadd.f32 %v2646, %v2647
          %v2649 = vrot.slane %v2648, 1
          %v2650 = vadd.f32 %v2648, %v2649
          %v2651 = vadd.f32 %v2637, %v2650
          %v2652 = vld [vmem:[#allocation2 + $0x30] sm:$0xff]
          %v2653 = vld [vmem:[#allocation2 + $0xb0] sm:$0xff]
          %v2654 = vld [vmem:[#allocation2 + $0x130] sm:$0xff]
          %v2655 = vld [vmem:[#allocation2 + $0x1b0] sm:$0xff]
          %v2656 = vadd.f32 %v2652, %v2653
          %v2657 = vadd.f32 %v2656, %v2654
          %v2658 = vadd.f32 %v2657, %v2655
          %v2659 = vrot.slane %v2658, 4
          %v2660 = vadd.f32 %v2658, %v2659
          %v2661 = vrot.slane %v2660, 2
          %v2662 = vadd.f32 %v2660, %v2661
          %v2663 = vrot.slane %v2662, 1
          %v2664 = vadd.f32 %v2662, %v2663
          %v2665 = vadd.f32 %v2651, %v2664
          %v2666 = vld [vmem:[#allocation2 + $0x38] sm:$0xff]
          %v2667 = vld [vmem:[#allocation2 + $0xb8] sm:$0xff]
          %v2668 = vld [vmem:[#allocation2 + $0x138] sm:$0xff]
          %v2669 = vld [vmem:[#allocation2 + $0x1b8] sm:$0xff]
          %v2670 = vadd.f32 %v2666, %v2667
          %v2671 = vadd.f32 %v2670, %v2668
          %v2672 = vadd.f32 %v2671, %v2669
          %v2673 = vrot.slane %v2672, 4
          %v2674 = vadd.f32 %v2672, %v2673
          %v2675 = vrot.slane %v2674, 2
          %v2676 = vadd.f32 %v2674, %v2675
          %v2677 = vrot.slane %v2676, 1
          %v2678 = vadd.f32 %v2676, %v2677
          %v2679 = vadd.f32 %v2665, %v2678
          %v2680 = vld [vmem:[#allocation2 + $0x40] sm:$0xff]
          %v2681 = vld [vmem:[#allocation2 + $0xc0] sm:$0xff]
          %v2682 = vld [vmem:[#allocation2 + $0x140] sm:$0xff]
          %v2683 = vld [vmem:[#allocation2 + $0x1c0] sm:$0xff]
          %v2684 = vadd.f32 %v2680, %v2681
          %v2685 = vadd.f32 %v2684, %v2682
          %v2686 = vadd.f32 %v2685, %v2683
          %v2687 = vrot.slane %v2686, 4
          %v2688 = vadd.f32 %v2686, %v2687
          %v2689 = vrot.slane %v2688, 2
          %v2690 = vadd.f32 %v2688, %v2689
          %v2691 = vrot.slane %v2690, 1
          %v2692 = vadd.f32 %v2690, %v2691
          %v2693 = vadd.f32 %v2679, %v2692
          %v2694 = vld [vmem:[#allocation2 + $0x48] sm:$0xff]
          %v2695 = vld [vmem:[#allocation2 + $0xc8] sm:$0xff]
          %v2696 = vld [vmem:[#allocation2 + $0x148] sm:$0xff]
          %v2697 = vld [vmem:[#allocation2 + $0x1c8] sm:$0xff]
          %v2698 = vadd.f32 %v2694, %v2695
          %v2699 = vadd.f32 %v2698, %v2696
          %v2700 = vadd.f32 %v2699, %v2697
          %v2701 = vrot.slane %v2700, 4
          %v2702 = vadd.f32 %v2700, %v2701
          %v2703 = vrot.slane %v2702, 2
          %v2704 = vadd.f32 %v2702, %v2703
          %v2705 = vrot.slane %v2704, 1
          %v2706 = vadd.f32 %v2704, %v2705
          %v2707 = vadd.f32 %v2693, %v2706
          %v2708 = vld [vmem:[#allocation2 + $0x50] sm:$0xff]
          %v2709 = vld [vmem:[#allocation2 + $0xd0] sm:$0xff]
          %v2710 = vld [vmem:[#allocation2 + $0x150] sm:$0xff]
          %v2711 = vld [vmem:[#allocation2 + $0x1d0] sm:$0xff]
          %v2712 = vadd.f32 %v2708, %v2709
          %v2713 = vadd.f32 %v2712, %v2710
          %v2714 = vadd.f32 %v2713, %v2711
          %v2715 = vrot.slane %v2714, 4
          %v2716 = vadd.f32 %v2714, %v2715
          %v2717 = vrot.slane %v2716, 2
          %v2718 = vadd.f32 %v2716, %v2717
          %v2719 = vrot.slane %v2718, 1
          %v2720 = vadd.f32 %v2718, %v2719
          %v2721 = vadd.f32 %v2707, %v2720
          %v2722 = vld [vmem:[#allocation2 + $0x58] sm:$0xff]
          %v2723 = vld [vmem:[#allocation2 + $0xd8] sm:$0xff]
          %v2724 = vld [vmem:[#allocation2 + $0x158] sm:$0xff]
          %v2725 = vld [vmem:[#allocation2 + $0x1d8] sm:$0xff]
          %v2726 = vadd.f32 %v2722, %v2723
          %v2727 = vadd.f32 %v2726, %v2724
          %v2728 = vadd.f32 %v2727, %v2725
          %v2729 = vrot.slane %v2728, 4
          %v2730 = vadd.f32 %v2728, %v2729
          %v2731 = vrot.slane %v2730, 2
          %v2732 = vadd.f32 %v2730, %v2731
          %v2733 = vrot.slane %v2732, 1
          %v2734 = vadd.f32 %v2732, %v2733
          %v2735 = vadd.f32 %v2721, %v2734
          %v2736 = vld [vmem:[#allocation2 + $0x60] sm:$0xff]
          %v2737 = vld [vmem:[#allocation2 + $0xe0] sm:$0xff]
          %v2738 = vld [vmem:[#allocation2 + $0x160] sm:$0xff]
          %v2739 = vld [vmem:[#allocation2 + $0x1e0] sm:$0xff]
          %v2740 = vadd.f32 %v2736, %v2737
          %v2741 = vadd.f32 %v2740, %v2738
          %v2742 = vadd.f32 %v2741, %v2739
          %v2743 = vrot.slane %v2742, 4
          %v2744 = vadd.f32 %v2742, %v2743
          %v2745 = vrot.slane %v2744, 2
          %v2746 = vadd.f32 %v2744, %v2745
          %v2747 = vrot.slane %v2746, 1
          %v2748 = vadd.f32 %v2746, %v2747
          %v2749 = vadd.f32 %v2735, %v2748
          %v2750 = vld [vmem:[#allocation2 + $0x68] sm:$0xff]
          %v2751 = vld [vmem:[#allocation2 + $0xe8] sm:$0xff]
          %v2752 = vld [vmem:[#allocation2 + $0x168] sm:$0xff]
          %v2753 = vld [vmem:[#allocation2 + $0x1e8] sm:$0xff]
          %v2754 = vadd.f32 %v2750, %v2751
          %v2755 = vadd.f32 %v2754, %v2752
          %v2756 = vadd.f32 %v2755, %v2753
          %v2757 = vrot.slane %v2756, 4
          %v2758 = vadd.f32 %v2756, %v2757
          %v2759 = vrot.slane %v2758, 2
          %v2760 = vadd.f32 %v2758, %v2759
          %v2761 = vrot.slane %v2760, 1
          %v2762 = vadd.f32 %v2760, %v2761
          %v2763 = vadd.f32 %v2749, %v2762
          %v2764 = vld [vmem:[#allocation2 + $0x70] sm:$0xff]
          %v2765 = vld [vmem:[#allocation2 + $0xf0] sm:$0xff]
          %v2766 = vld [vmem:[#allocation2 + $0x170] sm:$0xff]
          %v2767 = vld [vmem:[#allocation2 + $0x1f0] sm:$0xff]
          %v2768 = vadd.f32 %v2764, %v2765
          %v2769 = vadd.f32 %v2768, %v2766
          %v2770 = vadd.f32 %v2769, %v2767
          %v2771 = vrot.slane %v2770, 4
          %v2772 = vadd.f32 %v2770, %v2771
          %v2773 = vrot.slane %v2772, 2
          %v2774 = vadd.f32 %v2772, %v2773
          %v2775 = vrot.slane %v2774, 1
          %v2776 = vadd.f32 %v2774, %v2775
          %v2777 = vadd.f32 %v2763, %v2776
          %v2778 = vld [vmem:[#allocation2 + $0x78] sm:$0xff]
          %v2779 = vld [vmem:[#allocation2 + $0xf8] sm:$0xff]
          %v2780 = vld [vmem:[#allocation2 + $0x178] sm:$0xff]
          %v2781 = vld [vmem:[#allocation2 + $0x1f8] sm:$0xff]
          %v2782 = vadd.f32 %v2778, %v2779
          %v2783 = vadd.f32 %v2782, %v2780
          %v2784 = vadd.f32 %v2783, %v2781
          %v2785 = vrot.slane %v2784, 4
          %v2786 = vadd.f32 %v2784, %v2785
          %v2787 = vrot.slane %v2786, 2
          %v2788 = vadd.f32 %v2786, %v2787
          %v2789 = vrot.slane %v2788, 1
          %v2790 = vadd.f32 %v2788, %v2789
          %v2791 = vadd.f32 %v2777, %v2790
          %v2792 = vmul.f32 %v2791, 0.001953125
          %v2793 = vsub.f32 %v2568, %v2792
          %v2794 = vsub.f32 %v2569, %v2792
          %v2795 = vsub.f32 %v2570, %v2792
          %v2796 = vsub.f32 %v2571, %v2792
          %v2797 = vmul.f32 %v2793, %v2793
          %v2798 = vmul.f32 %v2794, %v2794
          %v2799 = vmul.f32 %v2795, %v2795
          %v2800 = vmul.f32 %v2796, %v2796
          %v2801 = vadd.f32 %v2797, %v2798
          %v2802 = vadd.f32 %v2801, %v2799
          %v2803 = vadd.f32 %v2802, %v2800
          %v2804 = vrot.slane %v2803, 4
          %v2805 = vadd.f32 %v2803, %v2804
          %v2806 = vrot.slane %v2805, 2
          %v2807 = vadd.f32 %v2805, %v2806
          %v2808 = vrot.slane %v2807, 1
          %v2809 = vadd.f32 %v2807, %v2808
          %v2810 = vadd.f32 %v2809, 0.0
          %v2811 = vsub.f32 %v2582, %v2792
          %v2812 = vsub.f32 %v2583, %v2792
          %v2813 = vsub.f32 %v2584, %v2792
          %v2814 = vsub.f32 %v2585, %v2792
          %v2815 = vmul.f32 %v2811, %v2811
          %v2816 = vmul.f32 %v2812, %v2812
          %v2817 = vmul.f32 %v2813, %v2813
          %v2818 = vmul.f32 %v2814, %v2814
          %v2819 = vadd.f32 %v2815, %v2816
          %v2820 = vadd.f32 %v2819, %v2817
          %v2821 = vadd.f32 %v2820, %v2818
          %v2822 = vrot.slane %v2821, 4
          %v2823 = vadd.f32 %v2821, %v2822
          %v2824 = vrot.slane %v2823, 2
          %v2825 = vadd.f32 %v2823, %v2824
          %v2826 = vrot.slane %v2825, 1
          %v2827 = vadd.f32 %v2825, %v2826
          %v2828 = vadd.f32 %v2810, %v2827
          %v2829 = vsub.f32 %v2596, %v2792
          %v2830 = vsub.f32 %v2597, %v2792
          %v2831 = vsub.f32 %v2598, %v2792
          %v2832 = vsub.f32 %v2599, %v2792
          %v2833 = vmul.f32 %v2829, %v2829
          %v2834 = vmul.f32 %v2830, %v2830
          %v2835 = vmul.f32 %v2831, %v2831
          %v2836 = vmul.f32 %v2832, %v2832
          %v2837 = vadd.f32 %v2833, %v2834
          %v2838 = vadd.f32 %v2837, %v2835
          %v2839 = vadd.f32 %v2838, %v2836
          %v2840 = vrot.slane %v2839, 4
          %v2841 = vadd.f32 %v2839, %v2840
          %v2842 = vrot.slane %v2841, 2
          %v2843 = vadd.f32 %v2841, %v2842
          %v2844 = vrot.slane %v2843, 1
          %v2845 = vadd.f32 %v2843, %v2844
          %v2846 = vadd.f32 %v2828, %v2845
          %v2847 = vsub.f32 %v2610, %v2792
          %v2848 = vsub.f32 %v2611, %v2792
          %v2849 = vsub.f32 %v2612, %v2792
          %v2850 = vsub.f32 %v2613, %v2792
          %v2851 = vmul.f32 %v2847, %v2847
          %v2852 = vmul.f32 %v2848, %v2848
          %v2853 = vmul.f32 %v2849, %v2849
          %v2854 = vmul.f32 %v2850, %v2850
          %v2855 = vadd.f32 %v2851, %v2852
          %v2856 = vadd.f32 %v2855, %v2853
          %v2857 = vadd.f32 %v2856, %v2854
          %v2858 = vrot.slane %v2857, 4
          %v2859 = vadd.f32 %v2857, %v2858
          %v2860 = vrot.slane %v2859, 2
          %v2861 = vadd.f32 %v2859, %v2860
          %v2862 = vrot.slane %v2861, 1
          %v2863 = vadd.f32 %v2861, %v2862
          %v2864 = vadd.f32 %v2846, %v2863
          %v2865 = vsub.f32 %v2624, %v2792
          %v2866 = vsub.f32 %v2625, %v2792
          %v2867 = vsub.f32 %v2626, %v2792
          %v2868 = vsub.f32 %v2627, %v2792
          %v2869 = vmul.f32 %v2865, %v2865
          %v2870 = vmul.f32 %v2866, %v2866
          %v2871 = vmul.f32 %v2867, %v2867
          %v2872 = vmul.f32 %v2868, %v2868
          %v2873 = vadd.f32 %v2869, %v2870
          %v2874 = vadd.f32 %v2873, %v2871
          %v2875 = vadd.f32 %v2874, %v2872
          %v2876 = vrot.slane %v2875, 4
          %v2877 = vadd.f32 %v2875, %v2876
          %v2878 = vrot.slane %v2877, 2
          %v2879 = vadd.f32 %v2877, %v2878
          %v2880 = vrot.slane %v2879, 1
          %v2881 = vadd.f32 %v2879, %v2880
          %v2882 = vadd.f32 %v2864, %v2881
          %v2883 = vsub.f32 %v2638, %v2792
          %v2884 = vsub.f32 %v2639, %v2792
          %v2885 = vsub.f32 %v2640, %v2792
          %v2886 = vsub.f32 %v2641, %v2792
          %v2887 = vmul.f32 %v2883, %v2883
          %v2888 = vmul.f32 %v2884, %v2884
          %v2889 = vmul.f32 %v2885, %v2885
          %v2890 = vmul.f32 %v2886, %v2886
          %v2891 = vadd.f32 %v2887, %v2888
          %v2892 = vadd.f32 %v2891, %v2889
          %v2893 = vadd.f32 %v2892, %v2890
          %v2894 = vrot.slane %v2893, 4
          %v2895 = vadd.f32 %v2893, %v2894
          %v2896 = vrot.slane %v2895, 2
          %v2897 = vadd.f32 %v2895, %v2896
          %v2898 = vrot.slane %v2897, 1
          %v2899 = vadd.f32 %v2897, %v2898
          %v2900 = vadd.f32 %v2882, %v2899
          %v2901 = vsub.f32 %v2652, %v2792
          %v2902 = vsub.f32 %v2653, %v2792
          %v2903 = vsub.f32 %v2654, %v2792
          %v2904 = vsub.f32 %v2655, %v2792
          %v2905 = vmul.f32 %v2901, %v2901
          %v2906 = vmul.f32 %v2902, %v2902
          %v2907 = vmul.f32 %v2903, %v2903
          %v2908 = vmul.f32 %v2904, %v2904
          %v2909 = vadd.f32 %v2905, %v2906
          %v2910 = vadd.f32 %v2909, %v2907
          %v2911 = vadd.f32 %v2910, %v2908
          %v2912 = vrot.slane %v2911, 4
          %v2913 = vadd.f32 %v2911, %v2912
          %v2914 = vrot.slane %v2913, 2
          %v2915 = vadd.f32 %v2913, %v2914
          %v2916 = vrot.slane %v2915, 1
          %v2917 = vadd.f32 %v2915, %v2916
          %v2918 = vadd.f32 %v2900, %v2917
          %v2919 = vsub.f32 %v2666, %v2792
          %v2920 = vsub.f32 %v2667, %v2792
          %v2921 = vsub.f32 %v2668, %v2792
          %v2922 = vsub.f32 %v2669, %v2792
          %v2923 = vmul.f32 %v2919, %v2919
          %v2924 = vmul.f32 %v2920, %v2920
          %v2925 = vmul.f32 %v2921, %v2921
          %v2926 = vmul.f32 %v2922, %v2922
          %v2927 = vadd.f32 %v2923, %v2924
          %v2928 = vadd.f32 %v2927, %v2925
          %v2929 = vadd.f32 %v2928, %v2926
          %v2930 = vrot.slane %v2929, 4
          %v2931 = vadd.f32 %v2929, %v2930
          %v2932 = vrot.slane %v2931, 2
          %v2933 = vadd.f32 %v2931, %v2932
          %v2934 = vrot.slane %v2933, 1
          %v2935 = vadd.f32 %v2933, %v2934
          %v2936 = vadd.f32 %v2918, %v2935
          %v2937 = vsub.f32 %v2680, %v2792
          %v2938 = vsub.f32 %v2681, %v2792
          %v2939 = vsub.f32 %v2682, %v2792
          %v2940 = vsub.f32 %v2683, %v2792
          %v2941 = vmul.f32 %v2937, %v2937
          %v2942 = vmul.f32 %v2938, %v2938
          %v2943 = vmul.f32 %v2939, %v2939
          %v2944 = vmul.f32 %v2940, %v2940
          %v2945 = vadd.f32 %v2941, %v2942
          %v2946 = vadd.f32 %v2945, %v2943
          %v2947 = vadd.f32 %v2946, %v2944
          %v2948 = vrot.slane %v2947, 4
          %v2949 = vadd.f32 %v2947, %v2948
          %v2950 = vrot.slane %v2949, 2
          %v2951 = vadd.f32 %v2949, %v2950
          %v2952 = vrot.slane %v2951, 1
          %v2953 = vadd.f32 %v2951, %v2952
          %v2954 = vadd.f32 %v2936, %v2953
          %v2955 = vsub.f32 %v2694, %v2792
          %v2956 = vsub.f32 %v2695, %v2792
          %v2957 = vsub.f32 %v2696, %v2792
          %v2958 = vsub.f32 %v2697, %v2792
          %v2959 = vmul.f32 %v2955, %v2955
          %v2960 = vmul.f32 %v2956, %v2956
          %v2961 = vmul.f32 %v2957, %v2957
          %v2962 = vmul.f32 %v2958, %v2958
          %v2963 = vadd.f32 %v2959, %v2960
          %v2964 = vadd.f32 %v2963, %v2961
          %v2965 = vadd.f32 %v2964, %v2962
          %v2966 = vrot.slane %v2965, 4
          %v2967 = vadd.f32 %v2965, %v2966
          %v2968 = vrot.slane %v2967, 2
          %v2969 = vadd.f32 %v2967, %v2968
          %v2970 = vrot.slane %v2969, 1
          %v2971 = vadd.f32 %v2969, %v2970
          %v2972 = vadd.f32 %v2954, %v2971
          %v2973 = vsub.f32 %v2708, %v2792
          %v2974 = vsub.f32 %v2709, %v2792
          %v2975 = vsub.f32 %v2710, %v2792
          %v2976 = vsub.f32 %v2711, %v2792
          %v2977 = vmul.f32 %v2973, %v2973
          %v2978 = vmul.f32 %v2974, %v2974
          %v2979 = vmul.f32 %v2975, %v2975
          %v2980 = vmul.f32 %v2976, %v2976
          %v2981 = vadd.f32 %v2977, %v2978
          %v2982 = vadd.f32 %v2981, %v2979
          %v2983 = vadd.f32 %v2982, %v2980
          %v2984 = vrot.slane %v2983, 4
          %v2985 = vadd.f32 %v2983, %v2984
          %v2986 = vrot.slane %v2985, 2
          %v2987 = vadd.f32 %v2985, %v2986
          %v2988 = vrot.slane %v2987, 1
          %v2989 = vadd.f32 %v2987, %v2988
          %v2990 = vadd.f32 %v2972, %v2989
          %v2991 = vsub.f32 %v2722, %v2792
          %v2992 = vsub.f32 %v2723, %v2792
          %v2993 = vsub.f32 %v2724, %v2792
          %v2994 = vsub.f32 %v2725, %v2792
          %v2995 = vmul.f32 %v2991, %v2991
          %v2996 = vmul.f32 %v2992, %v2992
          %v2997 = vmul.f32 %v2993, %v2993
          %v2998 = vmul.f32 %v2994, %v2994
          %v2999 = vadd.f32 %v2995, %v2996
          %v3000 = vadd.f32 %v2999, %v2997
          %v3001 = vadd.f32 %v3000, %v2998
          %v3002 = vrot.slane %v3001, 4
          %v3003 = vadd.f32 %v3001, %v3002
          %v3004 = vrot.slane %v3003, 2
          %v3005 = vadd.f32 %v3003, %v3004
          %v3006 = vrot.slane %v3005, 1
          %v3007 = vadd.f32 %v3005, %v3006
          %v3008 = vadd.f32 %v2990, %v3007
          %v3009 = vsub.f32 %v2736, %v2792
          %v3010 = vsub.f32 %v2737, %v2792
          %v3011 = vsub.f32 %v2738, %v2792
          %v3012 = vsub.f32 %v2739, %v2792
          %v3013 = vmul.f32 %v3009, %v3009
          %v3014 = vmul.f32 %v3010, %v3010
          %v3015 = vmul.f32 %v3011, %v3011
          %v3016 = vmul.f32 %v3012, %v3012
          %v3017 = vadd.f32 %v3013, %v3014
          %v3018 = vadd.f32 %v3017, %v3015
          %v3019 = vadd.f32 %v3018, %v3016
          %v3020 = vrot.slane %v3019, 4
          %v3021 = vadd.f32 %v3019, %v3020
          %v3022 = vrot.slane %v3021, 2
          %v3023 = vadd.f32 %v3021, %v3022
          %v3024 = vrot.slane %v3023, 1
          %v3025 = vadd.f32 %v3023, %v3024
          %v3026 = vadd.f32 %v3008, %v3025
          %v3027 = vsub.f32 %v2750, %v2792
          %v3028 = vsub.f32 %v2751, %v2792
          %v3029 = vsub.f32 %v2752, %v2792
          %v3030 = vsub.f32 %v2753, %v2792
          %v3031 = vmul.f32 %v3027, %v3027
          %v3032 = vmul.f32 %v3028, %v3028
          %v3033 = vmul.f32 %v3029, %v3029
          %v3034 = vmul.f32 %v3030, %v3030
          %v3035 = vadd.f32 %v3031, %v3032
          %v3036 = vadd.f32 %v3035, %v3033
          %v3037 = vadd.f32 %v3036, %v3034
          %v3038 = vrot.slane %v3037, 4
          %v3039 = vadd.f32 %v3037, %v3038
          %v3040 = vrot.slane %v3039, 2
          %v3041 = vadd.f32 %v3039, %v3040
          %v3042 = vrot.slane %v3041, 1
          %v3043 = vadd.f32 %v3041, %v3042
          %v3044 = vadd.f32 %v3026, %v3043
          %v3045 = vsub.f32 %v2764, %v2792
          %v3046 = vsub.f32 %v2765, %v2792
          %v3047 = vsub.f32 %v2766, %v2792
          %v3048 = vsub.f32 %v2767, %v2792
          %v3049 = vmul.f32 %v3045, %v3045
          %v3050 = vmul.f32 %v3046, %v3046
          %v3051 = vmul.f32 %v3047, %v3047
          %v3052 = vmul.f32 %v3048, %v3048
          %v3053 = vadd.f32 %v3049, %v3050
          %v3054 = vadd.f32 %v3053, %v3051
          %v3055 = vadd.f32 %v3054, %v3052
          %v3056 = vrot.slane %v3055, 4
          %v3057 = vadd.f32 %v3055, %v3056
          %v3058 = vrot.slane %v3057, 2
          %v3059 = vadd.f32 %v3057, %v3058
          %v3060 = vrot.slane %v3059, 1
          %v3061 = vadd.f32 %v3059, %v3060
          %v3062 = vadd.f32 %v3044, %v3061
          %v3063 = vsub.f32 %v2778, %v2792
          %v3064 = vsub.f32 %v2779, %v2792
          %v3065 = vsub.f32 %v2780, %v2792
          %v3066 = vsub.f32 %v2781, %v2792
          %v3067 = vmul.f32 %v3063, %v3063
          %v3068 = vmul.f32 %v3064, %v3064
          %v3069 = vmul.f32 %v3065, %v3065
          %v3070 = vmul.f32 %v3066, %v3066
          %v3071 = vadd.f32 %v3067, %v3068
          %v3072 = vadd.f32 %v3071, %v3069
          %v3073 = vadd.f32 %v3072, %v3070
          %v3074 = vrot.slane %v3073, 4
          %v3075 = vadd.f32 %v3073, %v3074
          %v3076 = vrot.slane %v3075, 2
          %v3077 = vadd.f32 %v3075, %v3076
          %v3078 = vrot.slane %v3077, 1
          %v3079 = vadd.f32 %v3077, %v3078
          %v3080 = vadd.f32 %v3062, %v3079
          %v3081 = vmul.f32 %v2792, %v2792
          %v3082 = vmul.f32 %v3081, 0.0
          %v3083 = vsub.f32 %v3080, %v3082
          %v3084 = vmul.f32 %v3083, 0.001953125
          %v3085 = vmax.f32 %v3084, 0.0
          %v3086 = vld [vmem:[%s280] sm:$0x1]
          %v3087 = vadd.f32 %v3085, 1e-05
          %v3088 = vrsqrt.pop %v3087
          %v3089 = vmul.f32 %v3088, %v3087
          %v3090 = vmul.f32 %v3089, %v3088
          %v3091 = vmul.f32 0.5, %v3090
          %v3092 = vsub.f32 1.5, %v3091
          %v3093 = vmul.f32 %v3088, %v3092
          %vm3094 = vweird.f32 %v3087
          %vm3095 = vweird.f32 %v3088
          %vm3096 = vmor %vm3094, %vm3095
          %v3097 = vsel %vm3096, %v3088, %v3093
          %v3098 = vmul.f32 %v3086, %v3097
          %v3099 = vld [vmem:[%s289] sm:$0x1]
          %v3100 = vmul.f32 %v2792, %v3098
          %v3101 = vsub.f32 %v3099, %v3100
          %v3103 = vperm.slane %v3098, 0
          %v3105 = vmul.f32 %v2568, %v3103
          %v3106 = vmul.f32 %v2569, %v3103
          %v3107 = vmul.f32 %v2570, %v3103
          %v3108 = vmul.f32 %v2571, %v3103
          %v3110 = vperm.slane %v3101, 0
          %v3112 = vadd.f32 %v3105, %v3110
          %v3113 = vadd.f32 %v3106, %v3110
          %v3114 = vadd.f32 %v3107, %v3110
          %v3115 = vadd.f32 %v3108, %v3110
          %v3116 = vmax.f32 %v3112, 0.0
          %v3117 = vmax.f32 %v3113, 0.0
          %v3118 = vmax.f32 %v3114, 0.0
          %v3119 = vmax.f32 %v3115, 0.0
          %3120 = vst [vmem:[%s322] sm:$0xff] %v3116
          %3121 = vst [vmem:[%s322 + $0x80] sm:$0xff] %v3117
          %3122 = vst [vmem:[%s322 + $0x100] sm:$0xff] %v3118
          %3123 = vst [vmem:[%s322 + $0x180] sm:$0xff] %v3119
          %v3124 = vld [vmem:[#allocation2 + $0x8] sm:$0xff]
          %v3125 = vld [vmem:[#allocation2 + $0x88] sm:$0xff]
          %v3126 = vld [vmem:[#allocation2 + $0x108] sm:$0xff]
          %v3127 = vld [vmem:[#allocation2 + $0x188] sm:$0xff]
          %v3128 = vmul.f32 %v3124, %v3103
          %v3129 = vmul.f32 %v3125, %v3103
          %v3130 = vmul.f32 %v3126, %v3103
          %v3131 = vmul.f32 %v3127, %v3103
          %v3132 = vadd.f32 %v3128, %v3110
          %v3133 = vadd.f32 %v3129, %v3110
          %v3134 = vadd.f32 %v3130, %v3110
          %v3135 = vadd.f32 %v3131, %v3110
          %v3136 = vmax.f32 %v3132, 0.0
          %v3137 = vmax.f32 %v3133, 0.0
          %v3138 = vmax.f32 %v3134, 0.0
          %v3139 = vmax.f32 %v3135, 0.0
          %3140 = vst [vmem:[%s322 + $0x8] sm:$0xff] %v3136
          %3141 = vst [vmem:[%s322 + $0x88] sm:$0xff] %v3137
          %3142 = vst [vmem:[%s322 + $0x108] sm:$0xff] %v3138
          %3143 = vst [vmem:[%s322 + $0x188] sm:$0xff] %v3139
          %v3144 = vld [vmem:[#allocation2 + $0x10] sm:$0xff]
          %v3145 = vld [vmem:[#allocation2 + $0x90] sm:$0xff]
          %v3146 = vld [vmem:[#allocation2 + $0x110] sm:$0xff]
          %v3147 = vld [vmem:[#allocation2 + $0x190] sm:$0xff]
          %v3148 = vmul.f32 %v3144, %v3103
          %v3149 = vmul.f32 %v3145, %v3103
          %v3150 = vmul.f32 %v3146, %v3103
          %v3151 = vmul.f32 %v3147, %v3103
          %v3152 = vadd.f32 %v3148, %v3110
          %v3153 = vadd.f32 %v3149, %v3110
          %v3154 = vadd.f32 %v3150, %v3110
          %v3155 = vadd.f32 %v3151, %v3110
          %v3156 = vmax.f32 %v3152, 0.0
          %v3157 = vmax.f32 %v3153, 0.0
          %v3158 = vmax.f32 %v3154, 0.0
          %v3159 = vmax.f32 %v3155, 0.0
          %3160 = vst [vmem:[%s322 + $0x10] sm:$0xff] %v3156
          %3161 = vst [vmem:[%s322 + $0x90] sm:$0xff] %v3157
          %3162 = vst [vmem:[%s322 + $0x110] sm:$0xff] %v3158
          %3163 = vst [vmem:[%s322 + $0x190] sm:$0xff] %v3159
          %v3164 = vld [vmem:[#allocation2 + $0x18] sm:$0xff]
          %v3165 = vld [vmem:[#allocation2 + $0x98] sm:$0xff]
          %v3166 = vld [vmem:[#allocation2 + $0x118] sm:$0xff]
          %v3167 = vld [vmem:[#allocation2 + $0x198] sm:$0xff]
          %v3168 = vmul.f32 %v3164, %v3103
          %v3169 = vmul.f32 %v3165, %v3103
          %v3170 = vmul.f32 %v3166, %v3103
          %v3171 = vmul.f32 %v3167, %v3103
          %v3172 = vadd.f32 %v3168, %v3110
          %v3173 = vadd.f32 %v3169, %v3110
          %v3174 = vadd.f32 %v3170, %v3110
          %v3175 = vadd.f32 %v3171, %v3110
          %v3176 = vmax.f32 %v3172, 0.0
          %v3177 = vmax.f32 %v3173, 0.0
          %v3178 = vmax.f32 %v3174, 0.0
          %v3179 = vmax.f32 %v3175, 0.0
          %3180 = vst [vmem:[%s322 + $0x18] sm:$0xff] %v3176
          %3181 = vst [vmem:[%s322 + $0x98] sm:$0xff] %v3177
          %3182 = vst [vmem:[%s322 + $0x118] sm:$0xff] %v3178
          %3183 = vst [vmem:[%s322 + $0x198] sm:$0xff] %v3179
          %v3184 = vld [vmem:[#allocation2 + $0x20] sm:$0xff]
          %v3185 = vld [vmem:[#allocation2 + $0xa0] sm:$0xff]
          %v3186 = vld [vmem:[#allocation2 + $0x120] sm:$0xff]
          %v3187 = vld [vmem:[#allocation2 + $0x1a0] sm:$0xff]
          %v3188 = vmul.f32 %v3184, %v3103
          %v3189 = vmul.f32 %v3185, %v3103
          %v3190 = vmul.f32 %v3186, %v3103
          %v3191 = vmul.f32 %v3187, %v3103
          %v3192 = vadd.f32 %v3188, %v3110
          %v3193 = vadd.f32 %v3189, %v3110
          %v3194 = vadd.f32 %v3190, %v3110
          %v3195 = vadd.f32 %v3191, %v3110
          %v3196 = vmax.f32 %v3192, 0.0
          %v3197 = vmax.f32 %v3193, 0.0
          %v3198 = vmax.f32 %v3194, 0.0
          %v3199 = vmax.f32 %v3195, 0.0
          %3200 = vst [vmem:[%s322 + $0x20] sm:$0xff] %v3196
          %3201 = vst [vmem:[%s322 + $0xa0] sm:$0xff] %v3197
          %3202 = vst [vmem:[%s322 + $0x120] sm:$0xff] %v3198
          %3203 = vst [vmem:[%s322 + $0x1a0] sm:$0xff] %v3199
          %v3204 = vld [vmem:[#allocation2 + $0x28] sm:$0xff]
          %v3205 = vld [vmem:[#allocation2 + $0xa8] sm:$0xff]
          %v3206 = vld [vmem:[#allocation2 + $0x128] sm:$0xff]
          %v3207 = vld [vmem:[#allocation2 + $0x1a8] sm:$0xff]
          %v3208 = vmul.f32 %v3204, %v3103
          %v3209 = vmul.f32 %v3205, %v3103
          %v3210 = vmul.f32 %v3206, %v3103
          %v3211 = vmul.f32 %v3207, %v3103
          %v3212 = vadd.f32 %v3208, %v3110
          %v3213 = vadd.f32 %v3209, %v3110
          %v3214 = vadd.f32 %v3210, %v3110
          %v3215 = vadd.f32 %v3211, %v3110
          %v3216 = vmax.f32 %v3212, 0.0
          %v3217 = vmax.f32 %v3213, 0.0
          %v3218 = vmax.f32 %v3214, 0.0
          %v3219 = vmax.f32 %v3215, 0.0
          %3220 = vst [vmem:[%s322 + $0x28] sm:$0xff] %v3216
          %3221 = vst [vmem:[%s322 + $0xa8] sm:$0xff] %v3217
          %3222 = vst [vmem:[%s322 + $0x128] sm:$0xff] %v3218
          %3223 = vst [vmem:[%s322 + $0x1a8] sm:$0xff] %v3219
          %v3224 = vld [vmem:[#allocation2 + $0x30] sm:$0xff]
          %v3225 = vld [vmem:[#allocation2 + $0xb0] sm:$0xff]
          %v3226 = vld [vmem:[#allocation2 + $0x130] sm:$0xff]
          %v3227 = vld [vmem:[#allocation2 + $0x1b0] sm:$0xff]
          %v3228 = vmul.f32 %v3224, %v3103
          %v3229 = vmul.f32 %v3225, %v3103
          %v3230 = vmul.f32 %v3226, %v3103
          %v3231 = vmul.f32 %v3227, %v3103
          %v3232 = vadd.f32 %v3228, %v3110
          %v3233 = vadd.f32 %v3229, %v3110
          %v3234 = vadd.f32 %v3230, %v3110
          %v3235 = vadd.f32 %v3231, %v3110
          %v3236 = vmax.f32 %v3232, 0.0
          %v3237 = vmax.f32 %v3233, 0.0
          %v3238 = vmax.f32 %v3234, 0.0
          %v3239 = vmax.f32 %v3235, 0.0
          %3240 = vst [vmem:[%s322 + $0x30] sm:$0xff] %v3236
          %3241 = vst [vmem:[%s322 + $0xb0] sm:$0xff] %v3237
          %3242 = vst [vmem:[%s322 + $0x130] sm:$0xff] %v3238
          %3243 = vst [vmem:[%s322 + $0x1b0] sm:$0xff] %v3239
          %v3244 = vld [vmem:[#allocation2 + $0x38] sm:$0xff]
          %v3245 = vld [vmem:[#allocation2 + $0xb8] sm:$0xff]
          %v3246 = vld [vmem:[#allocation2 + $0x138] sm:$0xff]
          %v3247 = vld [vmem:[#allocation2 + $0x1b8] sm:$0xff]
          %v3248 = vmul.f32 %v3244, %v3103
          %v3249 = vmul.f32 %v3245, %v3103
          %v3250 = vmul.f32 %v3246, %v3103
          %v3251 = vmul.f32 %v3247, %v3103
          %v3252 = vadd.f32 %v3248, %v3110
          %v3253 = vadd.f32 %v3249, %v3110
          %v3254 = vadd.f32 %v3250, %v3110
          %v3255 = vadd.f32 %v3251, %v3110
          %v3256 = vmax.f32 %v3252, 0.0
          %v3257 = vmax.f32 %v3253, 0.0
          %v3258 = vmax.f32 %v3254, 0.0
          %v3259 = vmax.f32 %v3255, 0.0
          %3260 = vst [vmem:[%s322 + $0x38] sm:$0xff] %v3256
          %3261 = vst [vmem:[%s322 + $0xb8] sm:$0xff] %v3257
          %3262 = vst [vmem:[%s322 + $0x138] sm:$0xff] %v3258
          %3263 = vst [vmem:[%s322 + $0x1b8] sm:$0xff] %v3259
          %v3264 = vld [vmem:[#allocation2 + $0x40] sm:$0xff]
          %v3265 = vld [vmem:[#allocation2 + $0xc0] sm:$0xff]
          %v3266 = vld [vmem:[#allocation2 + $0x140] sm:$0xff]
          %v3267 = vld [vmem:[#allocation2 + $0x1c0] sm:$0xff]
          %v3268 = vmul.f32 %v3264, %v3103
          %v3269 = vmul.f32 %v3265, %v3103
          %v3270 = vmul.f32 %v3266, %v3103
          %v3271 = vmul.f32 %v3267, %v3103
          %v3272 = vadd.f32 %v3268, %v3110
          %v3273 = vadd.f32 %v3269, %v3110
          %v3274 = vadd.f32 %v3270, %v3110
          %v3275 = vadd.f32 %v3271, %v3110
          %v3276 = vmax.f32 %v3272, 0.0
          %v3277 = vmax.f32 %v3273, 0.0
          %v3278 = vmax.f32 %v3274, 0.0
          %v3279 = vmax.f32 %v3275, 0.0
          %3280 = vst [vmem:[%s322 + $0x40] sm:$0xff] %v3276
          %3281 = vst [vmem:[%s322 + $0xc0] sm:$0xff] %v3277
          %3282 = vst [vmem:[%s322 + $0x140] sm:$0xff] %v3278
          %3283 = vst [vmem:[%s322 + $0x1c0] sm:$0xff] %v3279
          %v3284 = vld [vmem:[#allocation2 + $0x48] sm:$0xff]
          %v3285 = vld [vmem:[#allocation2 + $0xc8] sm:$0xff]
          %v3286 = vld [vmem:[#allocation2 + $0x148] sm:$0xff]
          %v3287 = vld [vmem:[#allocation2 + $0x1c8] sm:$0xff]
          %v3288 = vmul.f32 %v3284, %v3103
          %v3289 = vmul.f32 %v3285, %v3103
          %v3290 = vmul.f32 %v3286, %v3103
          %v3291 = vmul.f32 %v3287, %v3103
          %v3292 = vadd.f32 %v3288, %v3110
          %v3293 = vadd.f32 %v3289, %v3110
          %v3294 = vadd.f32 %v3290, %v3110
          %v3295 = vadd.f32 %v3291, %v3110
          %v3296 = vmax.f32 %v3292, 0.0
          %v3297 = vmax.f32 %v3293, 0.0
          %v3298 = vmax.f32 %v3294, 0.0
          %v3299 = vmax.f32 %v3295, 0.0
          %3300 = vst [vmem:[%s322 + $0x48] sm:$0xff] %v3296
          %3301 = vst [vmem:[%s322 + $0xc8] sm:$0xff] %v3297
          %3302 = vst [vmem:[%s322 + $0x148] sm:$0xff] %v3298
          %3303 = vst [vmem:[%s322 + $0x1c8] sm:$0xff] %v3299
          %v3304 = vld [vmem:[#allocation2 + $0x50] sm:$0xff]
          %v3305 = vld [vmem:[#allocation2 + $0xd0] sm:$0xff]
          %v3306 = vld [vmem:[#allocation2 + $0x150] sm:$0xff]
          %v3307 = vld [vmem:[#allocation2 + $0x1d0] sm:$0xff]
          %v3308 = vmul.f32 %v3304, %v3103
          %v3309 = vmul.f32 %v3305, %v3103
          %v3310 = vmul.f32 %v3306, %v3103
          %v3311 = vmul.f32 %v3307, %v3103
          %v3312 = vadd.f32 %v3308, %v3110
          %v3313 = vadd.f32 %v3309, %v3110
          %v3314 = vadd.f32 %v3310, %v3110
          %v3315 = vadd.f32 %v3311, %v3110
          %v3316 = vmax.f32 %v3312, 0.0
          %v3317 = vmax.f32 %v3313, 0.0
          %v3318 = vmax.f32 %v3314, 0.0
          %v3319 = vmax.f32 %v3315, 0.0
          %3320 = vst [vmem:[%s322 + $0x50] sm:$0xff] %v3316
          %3321 = vst [vmem:[%s322 + $0xd0] sm:$0xff] %v3317
          %3322 = vst [vmem:[%s322 + $0x150] sm:$0xff] %v3318
          %3323 = vst [vmem:[%s322 + $0x1d0] sm:$0xff] %v3319
          %v3324 = vld [vmem:[#allocation2 + $0x58] sm:$0xff]
          %v3325 = vld [vmem:[#allocation2 + $0xd8] sm:$0xff]
          %v3326 = vld [vmem:[#allocation2 + $0x158] sm:$0xff]
          %v3327 = vld [vmem:[#allocation2 + $0x1d8] sm:$0xff]
          %v3328 = vmul.f32 %v3324, %v3103
          %v3329 = vmul.f32 %v3325, %v3103
          %v3330 = vmul.f32 %v3326, %v3103
          %v3331 = vmul.f32 %v3327, %v3103
          %v3332 = vadd.f32 %v3328, %v3110
          %v3333 = vadd.f32 %v3329, %v3110
          %v3334 = vadd.f32 %v3330, %v3110
          %v3335 = vadd.f32 %v3331, %v3110
          %v3336 = vmax.f32 %v3332, 0.0
          %v3337 = vmax.f32 %v3333, 0.0
          %v3338 = vmax.f32 %v3334, 0.0
          %v3339 = vmax.f32 %v3335, 0.0
          %3340 = vst [vmem:[%s322 + $0x58] sm:$0xff] %v3336
          %3341 = vst [vmem:[%s322 + $0xd8] sm:$0xff] %v3337
          %3342 = vst [vmem:[%s322 + $0x158] sm:$0xff] %v3338
          %3343 = vst [vmem:[%s322 + $0x1d8] sm:$0xff] %v3339
          %v3344 = vld [vmem:[#allocation2 + $0x60] sm:$0xff]
          %v3345 = vld [vmem:[#allocation2 + $0xe0] sm:$0xff]
          %v3346 = vld [vmem:[#allocation2 + $0x160] sm:$0xff]
          %v3347 = vld [vmem:[#allocation2 + $0x1e0] sm:$0xff]
          %v3348 = vmul.f32 %v3344, %v3103
          %v3349 = vmul.f32 %v3345, %v3103
          %v3350 = vmul.f32 %v3346, %v3103
          %v3351 = vmul.f32 %v3347, %v3103
          %v3352 = vadd.f32 %v3348, %v3110
          %v3353 = vadd.f32 %v3349, %v3110
          %v3354 = vadd.f32 %v3350, %v3110
          %v3355 = vadd.f32 %v3351, %v3110
          %v3356 = vmax.f32 %v3352, 0.0
          %v3357 = vmax.f32 %v3353, 0.0
          %v3358 = vmax.f32 %v3354, 0.0
          %v3359 = vmax.f32 %v3355, 0.0
          %3360 = vst [vmem:[%s322 + $0x60] sm:$0xff] %v3356
          %3361 = vst [vmem:[%s322 + $0xe0] sm:$0xff] %v3357
          %3362 = vst [vmem:[%s322 + $0x160] sm:$0xff] %v3358
          %3363 = vst [vmem:[%s322 + $0x1e0] sm:$0xff] %v3359
          %v3364 = vld [vmem:[#allocation2 + $0x68] sm:$0xff]
          %v3365 = vld [vmem:[#allocation2 + $0xe8] sm:$0xff]
          %v3366 = vld [vmem:[#allocation2 + $0x168] sm:$0xff]
          %v3367 = vld [vmem:[#allocation2 + $0x1e8] sm:$0xff]
          %v3368 = vmul.f32 %v3364, %v3103
          %v3369 = vmul.f32 %v3365, %v3103
          %v3370 = vmul.f32 %v3366, %v3103
          %v3371 = vmul.f32 %v3367, %v3103
          %v3372 = vadd.f32 %v3368, %v3110
          %v3373 = vadd.f32 %v3369, %v3110
          %v3374 = vadd.f32 %v3370, %v3110
          %v3375 = vadd.f32 %v3371, %v3110
          %v3376 = vmax.f32 %v3372, 0.0
          %v3377 = vmax.f32 %v3373, 0.0
          %v3378 = vmax.f32 %v3374, 0.0
          %v3379 = vmax.f32 %v3375, 0.0
          %3380 = vst [vmem:[%s322 + $0x68] sm:$0xff] %v3376
          %3381 = vst [vmem:[%s322 + $0xe8] sm:$0xff] %v3377
          %3382 = vst [vmem:[%s322 + $0x168] sm:$0xff] %v3378
          %3383 = vst [vmem:[%s322 + $0x1e8] sm:$0xff] %v3379
          %v3384 = vld [vmem:[#allocation2 + $0x70] sm:$0xff]
          %v3385 = vld [vmem:[#allocation2 + $0xf0] sm:$0xff]
          %v3386 = vld [vmem:[#allocation2 + $0x170] sm:$0xff]
          %v3387 = vld [vmem:[#allocation2 + $0x1f0] sm:$0xff]
          %v3388 = vmul.f32 %v3384, %v3103
          %v3389 = vmul.f32 %v3385, %v3103
          %v3390 = vmul.f32 %v3386, %v3103
          %v3391 = vmul.f32 %v3387, %v3103
          %v3392 = vadd.f32 %v3388, %v3110
          %v3393 = vadd.f32 %v3389, %v3110
          %v3394 = vadd.f32 %v3390, %v3110
          %v3395 = vadd.f32 %v3391, %v3110
          %v3396 = vmax.f32 %v3392, 0.0
          %v3397 = vmax.f32 %v3393, 0.0
          %v3398 = vmax.f32 %v3394, 0.0
          %v3399 = vmax.f32 %v3395, 0.0
          %3400 = vst [vmem:[%s322 + $0x70] sm:$0xff] %v3396
          %3401 = vst [vmem:[%s322 + $0xf0] sm:$0xff] %v3397
          %3402 = vst [vmem:[%s322 + $0x170] sm:$0xff] %v3398
          %3403 = vst [vmem:[%s322 + $0x1f0] sm:$0xff] %v3399
          %v3404 = vld [vmem:[#allocation2 + $0x78] sm:$0xff]
          %v3405 = vld [vmem:[#allocation2 + $0xf8] sm:$0xff]
          %v3406 = vld [vmem:[#allocation2 + $0x178] sm:$0xff]
          %v3407 = vld [vmem:[#allocation2 + $0x1f8] sm:$0xff]
          %v3408 = vmul.f32 %v3404, %v3103
          %v3409 = vmul.f32 %v3405, %v3103
          %v3410 = vmul.f32 %v3406, %v3103
          %v3411 = vmul.f32 %v3407, %v3103
          %v3412 = vadd.f32 %v3408, %v3110
          %v3413 = vadd.f32 %v3409, %v3110
          %v3414 = vadd.f32 %v3410, %v3110
          %v3415 = vadd.f32 %v3411, %v3110
          %v3416 = vmax.f32 %v3412, 0.0
          %v3417 = vmax.f32 %v3413, 0.0
          %v3418 = vmax.f32 %v3414, 0.0
          %v3419 = vmax.f32 %v3415, 0.0
          %3420 = vst [vmem:[%s322 + $0x78] sm:$0xff] %v3416
          %3421 = vst [vmem:[%s322 + $0xf8] sm:$0xff] %v3417
          %3422 = vst [vmem:[%s322 + $0x178] sm:$0xff] %v3418
          %3423 = vst [vmem:[%s322 + $0x1f8] sm:$0xff] %v3419
        $region56: #{tpu_custom_call.1} parent=35 // pred_fallthru
          _
        %s3424 = sand.u32 %s149, 1
        %s3425 = scalar_lea.sflag [#allocation5], %s3424
        %s3426 = sand.u32 %s149, 1
        %s3427 = smul.addr %s3426, 512
        %s3428 = scalar_lea.vmem [#allocation11], %s3427
        // Predicated region
        $region57: #{tpu_custom_call.1} parent=35 // pred_check
          %p3429 = pneg %p159
        $region58: #{tpu_custom_call.1} parent=35 // pred_check_branch
          %3431 = sbr.rel (%p3429) target = $region60
        $region59: #{tpu_custom_call.1} parent=35 // pred_region
          %s3432 = smul.u32 16, %s29
          %3434 = vsyncadd %s3425, 0
          %s3435 = smul.addr %s3432, 8
          %s3436 = scalar_lea.hbm %s4, %s3435
          %s3437 = sshll.u32 %s3428, 4
          %s3438 = int_to_ptr.vmem [resolvable:$true] %s3437
          %s3439 = sshll.u32 %s3436, 4
          %s3440 = int_to_ptr.hbm [resolvable:$true] %s3439
          %3445 = dma.vmem_to_hbm [thread:$0]  %s3438, 8192, %s3440, %s3425, 2048, 4096, 128
        $region60: #{tpu_custom_call.1} parent=35 // pred_fallthru
          _
      $region36: #{tpu_custom_call.1} parent=5 // pred_fallthru
        _
      %p3446 = scmp.le.s32.totalorder 2, %s20
      // Predicated region
      $region61: #{tpu_custom_call.1} parent=5 // pred_check
        %p3447 = pneg %p3446
      $region62: #{tpu_custom_call.1} parent=5 // pred_check_branch
        %3449 = sbr.rel (%p3447) target = $region64
      $region63: #{tpu_custom_call.1} parent=5 // pred_region
        %s3450 = ssub.s32 %s20, 2
        // Predicated region
        $region65: #{tpu_custom_call.1} parent=63 // pred_check
          %p3451 = pneg %p165
        $region66: #{tpu_custom_call.1} parent=63 // pred_check_branch
          %3453 = sbr.rel (%p3451) target = $region68
        $region67: #{tpu_custom_call.1} parent=63 // pred_region
          %s3454 = sand.u32 %s150, 1
          %s3455 = scalar_lea.sflag [#allocation5], %s3454
          %s3456 = sand.u32 %s150, 1
          %s3457 = smul.addr %s3456, 512
          %s3458 = scalar_lea.vmem [#allocation11], %s3457
          %3460 = dma.done %s3455, 8192
        $region68: #{tpu_custom_call.1} parent=63 // pred_fallthru
          _
      $region64: #{tpu_custom_call.1} parent=5 // pred_fallthru
        _
    $region6: #{tpu_custom_call.1} parent=1 // loop_footer
      %s24 = sadd.s32 1, %s20
    $region7: #{tpu_custom_call.1} parent=1 // loop_footer_branch
      %19 = sbr.rel target = $region3
    $region8: #{tpu_custom_call.1} parent=1 // loop_exit
      _
    %3461 = vsyncpa [#allocation4], 1
    %s3462 = scalar_lea.sflag [#allocation4], 1
    %3463 = vsyncpa %s3462, 1
    %3464 = vsyncpa [#allocation7], 1
    %s3465 = scalar_lea.sflag [#allocation7], 1
    %3466 = vsyncpa %s3465, 1
    %3467 = vsyncpa [#allocation10], 1
    %s3468 = scalar_lea.sflag [#allocation10], 1
    %3469 = vsyncpa %s3468, 1
    %3470 = vsyncpa [#allocation5], 1
    %s3471 = scalar_lea.sflag [#allocation5], 1
    %3472 = vsyncpa %s3471, 1

</llo_original>
